<compile_context>
chip_gen: v7x
topology: tpu7x:2x2x1
jax: 0.10.0
libtpu: 0.0.40
codegen_flags: <defaults>
</compile_context>

<pallas_src>
import jax
import jax.numpy as jnp
from jax.experimental import pallas as pl
from jax.experimental.pallas import tpu as pltpu


_SQRT_HALF = 0.7071067811865476


def _erf(x):
    # Abramowitz & Stegun 7.1.26 rational approximation, |err| < 1.5e-7.
    # (Used so we never rely on an erf primitive lowering inside Mosaic;
    #  matches torch.nn.GELU()'s exact erf form to ~1e-7.)
    p = 0.3275911
    a1, a2, a3, a4, a5 = (0.254829592, -0.284496736, 1.421413741,
                          -1.453152027, 1.061405429)
    ax = jnp.abs(x)
    t = 1.0 / (1.0 + p * ax)
    poly = ((((a5 * t + a4) * t + a3) * t + a2) * t + a1) * t
    y = 1.0 - poly * jnp.exp(-ax * ax)
    return jnp.where(x < 0.0, -y, y)


def _gelu_exact(x):
    return 0.5 * x * (1.0 + _erf(x * _SQRT_HALF))


def _layer_norm(t, w, b, eps=1e-6):
    mu = jnp.mean(t, axis=-1, keepdims=True)
    var = jnp.mean(jnp.square(t - mu), axis=-1, keepdims=True)
    return (t - mu) * jax.lax.rsqrt(var + eps) * w + b


def _sepconv_kernel(xp_ref, dww_ref, dwb_ref, ln1w_ref, ln1b_ref,
                    pw1w_ref, pw1b_ref, ln2w_ref, ln2b_ref,
                    pw2w_ref, pw2b_ref, o_ref):
    _, H, W, C = o_ref.shape

    xp = xp_ref[0].astype(jnp.float32)        # (H+2, W+2, C) halo-padded image
    dww = dww_ref[...].astype(jnp.float32)    # (9, C): tap (ky,kx) -> row ky*3+kx

    # ---- depthwise 3x3 'same' conv (groups=C): 9 shifted taps, unrolled ----
    acc = jnp.zeros((H, W, C), jnp.float32)
    for ky in range(3):
        for kx in range(3):
            k = ky * 3 + kx
            acc = acc + xp[ky:ky + H, kx:kx + W, :] * dww[k:k + 1, :]
    acc = acc + dwb_ref[...].astype(jnp.float32)        # (1, C) broadcasts

    # ---- token MLP part on (H*W, C) ----
    t = acc.reshape(H * W, C)
    t = _layer_norm(t, ln1w_ref[...].astype(jnp.float32),
                    ln1b_ref[...].astype(jnp.float32))

    h = jnp.dot(t, pw1w_ref[...].astype(jnp.float32),
                preferred_element_type=jnp.float32)
    h = h + pw1b_ref[...].astype(jnp.float32)
    h = _gelu_exact(h)
    h = _layer_norm(h, ln2w_ref[...].astype(jnp.float32),
                    ln2b_ref[...].astype(jnp.float32))

    y = jnp.dot(h, pw2w_ref[...].astype(jnp.float32),
                preferred_element_type=jnp.float32)
    y = y + pw2b_ref[...].astype(jnp.float32)

    # drop_path is nn.Identity() at drop=0.0.
    o_ref[...] = y.reshape(1, H, W, C).astype(o_ref.dtype)


def sep_conv(x, dw_w, dw_b, ln1_w, ln1_b, pw1_w, pw1_b, ln2_w, ln2_b,
             pw2_w, pw2_b):
    """Fused SepConv forward.

    Layouts (pre-transposed from PyTorch):
      x:     (B, H, W, C)  channels-last
      dw_w:  (9, C)        dw_w[ky*3+kx, c] == dwconv.weight[c, 0, ky, kx]
      dw_b:  (1, C)
      ln1_w/ln1_b: (1, C); ln2_w/ln2_b: (1, 4C)
      pw1_w: (C, 4C) == pwconv1.weight.T ; pw1_b: (1, 4C)
      pw2_w: (4C, C) == pwconv2.weight.T ; pw2_b: (1, C)
    """
    B, H, W, C = x.shape
    C4 = 4 * C
    assert dw_w.shape == (9, C) and pw1_w.shape == (C, C4) and pw2_w.shape == (C4, C)

    # Halo padding required by the 3x3 'same' conv (this is conv padding, not
    # tiling padding — a single cheap pass over the small input).
    xp = jnp.pad(x, ((0, 0), (1, 1), (1, 1), (0, 0)))

    params = (dw_w, dw_b, ln1_w, ln1_b, pw1_w, pw1_b, ln2_w, ln2_b, pw2_w, pw2_b)

    def full_spec(a):
        nd = a.ndim
        return pl.BlockSpec(a.shape, lambda b, _nd=nd: (0,) * _nd)

    n_tok = B * H * W
    itemsize = jnp.dtype(x.dtype).itemsize
    cost = pl.CostEstimate(
        flops=int(n_tok * (2 * 9 * C + 4 * C * C4 + 14 * (C + C4))),
        transcendentals=int(n_tok * (C4 + 2)),
        bytes_accessed=int((xp.size + x.size) * itemsize
                           + sum(p.size for p in params) * itemsize),
    )

    out = pl.pallas_call(
        _sepconv_kernel,
        out_shape=jax.ShapeDtypeStruct((B, H, W, C), x.dtype),
        grid_spec=pltpu.PrefetchScalarGridSpec(
            num_scalar_prefetch=0,
            grid=(B,),   # one image per step; B>=2 keeps both v7x cores busy
            in_specs=[pl.BlockSpec((1, H + 2, W + 2, C), lambda b: (b, 0, 0, 0))]
                     + [full_spec(p) for p in params],
            out_specs=pl.BlockSpec((1, H, W, C), lambda b: (b, 0, 0, 0)),
        ),
        compiler_params=pltpu.CompilerParams(
            dimension_semantics=("parallel",),
        ),
        cost_estimate=cost,
    )(xp, *params)
    # TODO(synk): for large H*W*C that would not fit a per-step VMEM budget
    # (16/32/24 MiB on v5e/v6e/v7x), tile the H axis with a 1-row halo
    # (pl.Element blocks or manual DMA) instead of whole-image blocks.
    return out


def sep_conv_ref(x, dw_w, dw_b, ln1_w, ln1_b, pw1_w, pw1_b, ln2_w, ln2_b,
                 pw2_w, pw2_b):
    """Pure-JAX reference with the same semantics as the PyTorch module."""
    B, H, W, C = x.shape
    xp = jnp.pad(x, ((0, 0), (1, 1), (1, 1), (0, 0)))
    y = jnp.zeros_like(x)
    for ky in range(3):
        for kx in range(3):
            y = y + xp[:, ky:ky + H, kx:kx + W, :] * dw_w[ky * 3 + kx]
    y = y + dw_b[0]

    def ln(t, w, b):
        mu = jnp.mean(t, -1, keepdims=True)
        var = jnp.mean(jnp.square(t - mu), -1, keepdims=True)
        return (t - mu) * jax.lax.rsqrt(var + 1e-6) * w + b

    t = ln(y, ln1_w[0], ln1_b[0])
    h = jnp.einsum("bhwc,cd->bhwd", t, pw1_w,
                   precision=jax.lax.Precision.HIGHEST) + pw1_b[0]
    h = jax.nn.gelu(h, approximate=False)
    h = ln(h, ln2_w[0], ln2_b[0])
    o = jnp.einsum("bhwd,dc->bhwc", h, pw2_w,
                   precision=jax.lax.Precision.HIGHEST) + pw2_b[0]
    return o


if __name__ == "__main__":
    key = jax.random.PRNGKey(0)
    B, H, W, C = 2, 16, 16, 32
    C4 = 4 * C
    ks = jax.random.split(key, 11)

    x = jax.random.normal(ks[0], (B, H, W, C), dtype=jnp.float32)

    dw_w = jax.random.normal(ks[1], (9, C), jnp.float32) * (1.0 / 3.0)
    dw_b = 0.1 * jax.random.normal(ks[2], (1, C), jnp.float32)
    ln1_w = 1.0 + 0.1 * jax.random.normal(ks[3], (1, C), jnp.float32)
    ln1_b = 0.1 * jax.random.normal(ks[4], (1, C), jnp.float32)
    pw1_w = jax.random.normal(ks[5], (C, C4), jnp.float32) * (1.0 / jnp.sqrt(C))
    pw1_b = 0.1 * jax.random.normal(ks[6], (1, C4), jnp.float32)
    ln2_w = 1.0 + 0.1 * jax.random.normal(ks[7], (1, C4), jnp.float32)
    ln2_b = 0.1 * jax.random.normal(ks[8], (1, C4), jnp.float32)
    pw2_w = jax.random.normal(ks[9], (C4, C), jnp.float32) * (1.0 / jnp.sqrt(C4))
    pw2_b = 0.1 * jax.random.normal(ks[10], (1, C), jnp.float32)

    args = (x, dw_w, dw_b, ln1_w, ln1_b, pw1_w, pw1_b, ln2_w, ln2_b, pw2_w, pw2_b)

    out = jax.block_until_ready(sep_conv(*args))
    ref = jax.block_until_ready(sep_conv_ref(*args))

    assert out.shape == x.shape and out.dtype == x.dtype
    max_err = float(jnp.max(jnp.abs(out - ref)))
    assert max_err < 2e-2, f"max abs err {max_err}"   # expected ~1e-5 in practice
    print("KERNEL_OK")
</pallas_src>

<mosaic_0001>
module attributes {stable_mosaic.version = 11 : i64} {
  func.func @_sepconv_kernel(%arg0: i32, %arg1: memref<1x18x18x32xf32, #tpu.memory_space<vmem>>, %arg2: memref<9x32xf32, #tpu.memory_space<vmem>>, %arg3: memref<1x32xf32, #tpu.memory_space<vmem>>, %arg4: memref<1x32xf32, #tpu.memory_space<vmem>>, %arg5: memref<1x32xf32, #tpu.memory_space<vmem>>, %arg6: memref<32x128xf32, #tpu.memory_space<vmem>>, %arg7: memref<1x128xf32, #tpu.memory_space<vmem>>, %arg8: memref<1x128xf32, #tpu.memory_space<vmem>>, %arg9: memref<1x128xf32, #tpu.memory_space<vmem>>, %arg10: memref<128x32xf32, #tpu.memory_space<vmem>>, %arg11: memref<1x32xf32, #tpu.memory_space<vmem>>, %arg12: memref<1x16x16x32xf32, #tpu.memory_space<vmem>>) attributes {dimension_semantics = [#tpu.dimension_semantics<parallel>], iteration_bounds = array<i64: 2>, scalar_prefetch = 0 : i64, scratch_operands = 0 : i64, tpu.core_type = #tpu.core_type<tc>, window_params = [{transform_indices = @transform_0, window_bounds = array<i64: 1, 18, 18, 32>}, {pipeline_mode = #tpu.pipeline_mode<synchronous>, transform_indices = @transform_1, window_bounds = array<i64: 9, 32>}, {pipeline_mode = #tpu.pipeline_mode<synchronous>, transform_indices = @transform_2, window_bounds = array<i64: 1, 32>}, {pipeline_mode = #tpu.pipeline_mode<synchronous>, transform_indices = @transform_3, window_bounds = array<i64: 1, 32>}, {pipeline_mode = #tpu.pipeline_mode<synchronous>, transform_indices = @transform_4, window_bounds = array<i64: 1, 32>}, {pipeline_mode = #tpu.pipeline_mode<synchronous>, transform_indices = @transform_5, window_bounds = array<i64: 32, 128>}, {pipeline_mode = #tpu.pipeline_mode<synchronous>, transform_indices = @transform_6, window_bounds = array<i64: 1, 128>}, {pipeline_mode = #tpu.pipeline_mode<synchronous>, transform_indices = @transform_7, window_bounds = array<i64: 1, 128>}, {pipeline_mode = #tpu.pipeline_mode<synchronous>, transform_indices = @transform_8, window_bounds = array<i64: 1, 128>}, {pipeline_mode = #tpu.pipeline_mode<synchronous>, transform_indices = @transform_9, window_bounds = array<i64: 128, 32>}, {pipeline_mode = #tpu.pipeline_mode<synchronous>, transform_indices = @transform_10, window_bounds = array<i64: 1, 32>}, {transform_indices = @transform_11, window_bounds = array<i64: 1, 16, 16, 32>}]} {
    %c0 = arith.constant 0 : index
    %c0_0 = arith.constant 0 : index
    %c0_1 = arith.constant 0 : index
    %c0_2 = arith.constant 0 : index
    %0 = vector.load %arg1[%c0, %c0_0, %c0_1, %c0_2] : memref<1x18x18x32xf32, #tpu.memory_space<vmem>>, vector<1x18x18x32xf32>
    %1 = vector.shape_cast %0 : vector<1x18x18x32xf32> to vector<18x18x32xf32>
    %c0_3 = arith.constant 0 : index
    %c0_4 = arith.constant 0 : index
    %2 = vector.load %arg2[%c0_3, %c0_4] : memref<9x32xf32, #tpu.memory_space<vmem>>, vector<9x32xf32>
    %cst = arith.constant 0.000000e+00 : f32
    %3 = vector.broadcast %cst : f32 to vector<16x16x32xf32>
    %4 = vector.extract_strided_slice %1 {offsets = [0, 0, 0], sizes = [16, 16, 32], strides = [1, 1, 1]} : vector<18x18x32xf32> to vector<16x16x32xf32>
    %5 = vector.extract_strided_slice %2 {offsets = [0, 0], sizes = [1, 32], strides = [1, 1]} : vector<9x32xf32> to vector<1x32xf32>
    %6 = vector.shape_cast %5 : vector<1x32xf32> to vector<1x1x32xf32>
    %7 = vector.broadcast %6 : vector<1x1x32xf32> to vector<16x16x32xf32>
    %8 = arith.mulf %4, %7 : vector<16x16x32xf32>
    %9 = arith.addf %3, %8 : vector<16x16x32xf32>
    %10 = vector.extract_strided_slice %1 {offsets = [0, 1, 0], sizes = [16, 16, 32], strides = [1, 1, 1]} : vector<18x18x32xf32> to vector<16x16x32xf32>
    %11 = vector.extract_strided_slice %2 {offsets = [1, 0], sizes = [1, 32], strides = [1, 1]} : vector<9x32xf32> to vector<1x32xf32>
    %12 = vector.shape_cast %11 : vector<1x32xf32> to vector<1x1x32xf32>
    %13 = vector.broadcast %12 : vector<1x1x32xf32> to vector<16x16x32xf32>
    %14 = arith.mulf %10, %13 : vector<16x16x32xf32>
    %15 = arith.addf %9, %14 : vector<16x16x32xf32>
    %16 = vector.extract_strided_slice %1 {offsets = [0, 2, 0], sizes = [16, 16, 32], strides = [1, 1, 1]} : vector<18x18x32xf32> to vector<16x16x32xf32>
    %17 = vector.extract_strided_slice %2 {offsets = [2, 0], sizes = [1, 32], strides = [1, 1]} : vector<9x32xf32> to vector<1x32xf32>
    %18 = vector.shape_cast %17 : vector<1x32xf32> to vector<1x1x32xf32>
    %19 = vector.broadcast %18 : vector<1x1x32xf32> to vector<16x16x32xf32>
    %20 = arith.mulf %16, %19 : vector<16x16x32xf32>
    %21 = arith.addf %15, %20 : vector<16x16x32xf32>
    %22 = vector.extract_strided_slice %1 {offsets = [1, 0, 0], sizes = [16, 16, 32], strides = [1, 1, 1]} : vector<18x18x32xf32> to vector<16x16x32xf32>
    %23 = vector.extract_strided_slice %2 {offsets = [3, 0], sizes = [1, 32], strides = [1, 1]} : vector<9x32xf32> to vector<1x32xf32>
    %24 = vector.shape_cast %23 : vector<1x32xf32> to vector<1x1x32xf32>
    %25 = vector.broadcast %24 : vector<1x1x32xf32> to vector<16x16x32xf32>
    %26 = arith.mulf %22, %25 : vector<16x16x32xf32>
    %27 = arith.addf %21, %26 : vector<16x16x32xf32>
    %28 = vector.extract_strided_slice %1 {offsets = [1, 1, 0], sizes = [16, 16, 32], strides = [1, 1, 1]} : vector<18x18x32xf32> to vector<16x16x32xf32>
    %29 = vector.extract_strided_slice %2 {offsets = [4, 0], sizes = [1, 32], strides = [1, 1]} : vector<9x32xf32> to vector<1x32xf32>
    %30 = vector.shape_cast %29 : vector<1x32xf32> to vector<1x1x32xf32>
    %31 = vector.broadcast %30 : vector<1x1x32xf32> to vector<16x16x32xf32>
    %32 = arith.mulf %28, %31 : vector<16x16x32xf32>
    %33 = arith.addf %27, %32 : vector<16x16x32xf32>
    %34 = vector.extract_strided_slice %1 {offsets = [1, 2, 0], sizes = [16, 16, 32], strides = [1, 1, 1]} : vector<18x18x32xf32> to vector<16x16x32xf32>
    %35 = vector.extract_strided_slice %2 {offsets = [5, 0], sizes = [1, 32], strides = [1, 1]} : vector<9x32xf32> to vector<1x32xf32>
    %36 = vector.shape_cast %35 : vector<1x32xf32> to vector<1x1x32xf32>
    %37 = vector.broadcast %36 : vector<1x1x32xf32> to vector<16x16x32xf32>
    %38 = arith.mulf %34, %37 : vector<16x16x32xf32>
    %39 = arith.addf %33, %38 : vector<16x16x32xf32>
    %40 = vector.extract_strided_slice %1 {offsets = [2, 0, 0], sizes = [16, 16, 32], strides = [1, 1, 1]} : vector<18x18x32xf32> to vector<16x16x32xf32>
    %41 = vector.extract_strided_slice %2 {offsets = [6, 0], sizes = [1, 32], strides = [1, 1]} : vector<9x32xf32> to vector<1x32xf32>
    %42 = vector.shape_cast %41 : vector<1x32xf32> to vector<1x1x32xf32>
    %43 = vector.broadcast %42 : vector<1x1x32xf32> to vector<16x16x32xf32>
    %44 = arith.mulf %40, %43 : vector<16x16x32xf32>
    %45 = arith.addf %39, %44 : vector<16x16x32xf32>
    %46 = vector.extract_strided_slice %1 {offsets = [2, 1, 0], sizes = [16, 16, 32], strides = [1, 1, 1]} : vector<18x18x32xf32> to vector<16x16x32xf32>
    %47 = vector.extract_strided_slice %2 {offsets = [7, 0], sizes = [1, 32], strides = [1, 1]} : vector<9x32xf32> to vector<1x32xf32>
    %48 = vector.shape_cast %47 : vector<1x32xf32> to vector<1x1x32xf32>
    %49 = vector.broadcast %48 : vector<1x1x32xf32> to vector<16x16x32xf32>
    %50 = arith.mulf %46, %49 : vector<16x16x32xf32>
    %51 = arith.addf %45, %50 : vector<16x16x32xf32>
    %52 = vector.extract_strided_slice %1 {offsets = [2, 2, 0], sizes = [16, 16, 32], strides = [1, 1, 1]} : vector<18x18x32xf32> to vector<16x16x32xf32>
    %53 = vector.extract_strided_slice %2 {offsets = [8, 0], sizes = [1, 32], strides = [1, 1]} : vector<9x32xf32> to vector<1x32xf32>
    %54 = vector.shape_cast %53 : vector<1x32xf32> to vector<1x1x32xf32>
    %55 = vector.broadcast %54 : vector<1x1x32xf32> to vector<16x16x32xf32>
    %56 = arith.mulf %52, %55 : vector<16x16x32xf32>
    %57 = arith.addf %51, %56 : vector<16x16x32xf32>
    %c0_5 = arith.constant 0 : index
    %c0_6 = arith.constant 0 : index
    %58 = vector.load %arg3[%c0_5, %c0_6] : memref<1x32xf32, #tpu.memory_space<vmem>>, vector<1x32xf32>
    %59 = vector.shape_cast %58 : vector<1x32xf32> to vector<1x1x32xf32>
    %60 = vector.broadcast %59 : vector<1x1x32xf32> to vector<16x16x32xf32>
    %61 = arith.addf %57, %60 : vector<16x16x32xf32>
    %62 = vector.shape_cast %61 : vector<16x16x32xf32> to vector<256x32xf32>
    %c0_7 = arith.constant 0 : index
    %c0_8 = arith.constant 0 : index
    %63 = vector.load %arg4[%c0_7, %c0_8] : memref<1x32xf32, #tpu.memory_space<vmem>>, vector<1x32xf32>
    %c0_9 = arith.constant 0 : index
    %c0_10 = arith.constant 0 : index
    %64 = vector.load %arg5[%c0_9, %c0_10] : memref<1x32xf32, #tpu.memory_space<vmem>>, vector<1x32xf32>
    %cst_11 = arith.constant dense<0.000000e+00> : vector<256xf32>
    %65 = vector.multi_reduction <add>, %62, %cst_11 [1] : vector<256x32xf32> to vector<256xf32>
    %66 = vector.shape_cast %65 : vector<256xf32> to vector<256x1xf32>
    %cst_12 = arith.constant 3.200000e+01 : f32
    %67 = vector.broadcast %cst_12 : f32 to vector<256x1xf32>
    %68 = arith.divf %66, %67 : vector<256x1xf32>
    %69 = vector.broadcast %68 : vector<256x1xf32> to vector<256x32xf32>
    %70 = arith.subf %62, %69 : vector<256x32xf32>
    %71 = arith.mulf %70, %70 : vector<256x32xf32>
    %cst_13 = arith.constant dense<0.000000e+00> : vector<256xf32>
    %72 = vector.multi_reduction <add>, %71, %cst_13 [1] : vector<256x32xf32> to vector<256xf32>
    %73 = vector.shape_cast %72 : vector<256xf32> to vector<256x1xf32>
    %cst_14 = arith.constant 3.200000e+01 : f32
    %74 = vector.broadcast %cst_14 : f32 to vector<256x1xf32>
    %75 = arith.divf %73, %74 : vector<256x1xf32>
    %76 = vector.broadcast %68 : vector<256x1xf32> to vector<256x32xf32>
    %77 = arith.subf %62, %76 : vector<256x32xf32>
    %cst_15 = arith.constant 9.99999997E-7 : f32
    %78 = vector.broadcast %cst_15 : f32 to vector<256x1xf32>
    %79 = arith.addf %75, %78 : vector<256x1xf32>
    %80 = math.rsqrt %79 : vector<256x1xf32>
    %81 = vector.broadcast %80 : vector<256x1xf32> to vector<256x32xf32>
    %82 = arith.mulf %77, %81 : vector<256x32xf32>
    %83 = vector.broadcast %63 : vector<1x32xf32> to vector<256x32xf32>
    %84 = arith.mulf %82, %83 : vector<256x32xf32>
    %85 = vector.broadcast %64 : vector<1x32xf32> to vector<256x32xf32>
    %86 = arith.addf %84, %85 : vector<256x32xf32>
    %c0_16 = arith.constant 0 : index
    %c0_17 = arith.constant 0 : index
    %87 = vector.load %arg6[%c0_16, %c0_17] : memref<32x128xf32, #tpu.memory_space<vmem>>, vector<32x128xf32>
    %cst_18 = arith.constant dense<0.000000e+00> : vector<256x128xf32>
    %88 = tpu.matmul %86, %87, %cst_18 {dimension_numbers = #tpu.dot_dimension_numbers<[1], [0], [0], [1], [0, 0, 1, 1], [], []>} : vector<256x32xf32>, vector<32x128xf32>, vector<256x128xf32> -> vector<256x128xf32>
    %c0_19 = arith.constant 0 : index
    %c0_20 = arith.constant 0 : index
    %89 = vector.load %arg7[%c0_19, %c0_20] : memref<1x128xf32, #tpu.memory_space<vmem>>, vector<1x128xf32>
    %90 = vector.broadcast %89 : vector<1x128xf32> to vector<256x128xf32>
    %91 = arith.addf %88, %90 : vector<256x128xf32>
    %cst_21 = arith.constant 5.000000e-01 : f32
    %92 = vector.broadcast %cst_21 : f32 to vector<256x128xf32>
    %93 = arith.mulf %92, %91 : vector<256x128xf32>
    %cst_22 = arith.constant 0.707106769 : f32
    %94 = vector.broadcast %cst_22 : f32 to vector<256x128xf32>
    %95 = arith.mulf %91, %94 : vector<256x128xf32>
    %96 = math.absf %95 : vector<256x128xf32>
    %cst_23 = arith.constant 0.327591091 : f32
    %97 = vector.broadcast %cst_23 : f32 to vector<256x128xf32>
    %98 = arith.mulf %97, %96 : vector<256x128xf32>
    %cst_24 = arith.constant 1.000000e+00 : f32
    %99 = vector.broadcast %cst_24 : f32 to vector<256x128xf32>
    %100 = arith.addf %99, %98 : vector<256x128xf32>
    %cst_25 = arith.constant 1.000000e+00 : f32
    %101 = vector.broadcast %cst_25 : f32 to vector<256x128xf32>
    %102 = arith.divf %101, %100 : vector<256x128xf32>
    %cst_26 = arith.constant 1.06140542 : f32
    %103 = vector.broadcast %cst_26 : f32 to vector<256x128xf32>
    %104 = arith.mulf %103, %102 : vector<256x128xf32>
    %cst_27 = arith.constant -1.45315206 : f32
    %105 = vector.broadcast %cst_27 : f32 to vector<256x128xf32>
    %106 = arith.addf %104, %105 : vector<256x128xf32>
    %107 = arith.mulf %106, %102 : vector<256x128xf32>
    %cst_28 = arith.constant 1.42141378 : f32
    %108 = vector.broadcast %cst_28 : f32 to vector<256x128xf32>
    %109 = arith.addf %107, %108 : vector<256x128xf32>
    %110 = arith.mulf %109, %102 : vector<256x128xf32>
    %cst_29 = arith.constant -0.284496725 : f32
    %111 = vector.broadcast %cst_29 : f32 to vector<256x128xf32>
    %112 = arith.addf %110, %111 : vector<256x128xf32>
    %113 = arith.mulf %112, %102 : vector<256x128xf32>
    %cst_30 = arith.constant 0.254829586 : f32
    %114 = vector.broadcast %cst_30 : f32 to vector<256x128xf32>
    %115 = arith.addf %113, %114 : vector<256x128xf32>
    %116 = arith.mulf %115, %102 : vector<256x128xf32>
    %cst_31 = arith.constant 0.000000e+00 : f32
    %117 = vector.broadcast %cst_31 : f32 to vector<256x128xf32>
    %118 = arith.subf %117, %96 : vector<256x128xf32>
    %119 = arith.mulf %118, %96 : vector<256x128xf32>
    %120 = math.exp %119 : vector<256x128xf32>
    %121 = arith.mulf %116, %120 : vector<256x128xf32>
    %cst_32 = arith.constant 1.000000e+00 : f32
    %122 = vector.broadcast %cst_32 : f32 to vector<256x128xf32>
    %123 = arith.subf %122, %121 : vector<256x128xf32>
    %cst_33 = arith.constant 0.000000e+00 : f32
    %124 = vector.broadcast %cst_33 : f32 to vector<256x128xf32>
    %125 = arith.cmpf olt, %95, %124 : vector<256x128xf32>
    %cst_34 = arith.constant 0.000000e+00 : f32
    %126 = vector.broadcast %cst_34 : f32 to vector<256x128xf32>
    %127 = arith.subf %126, %123 : vector<256x128xf32>
    %128 = arith.select %125, %127, %123 : vector<256x128xi1>, vector<256x128xf32>
    %cst_35 = arith.constant 1.000000e+00 : f32
    %129 = vector.broadcast %cst_35 : f32 to vector<256x128xf32>
    %130 = arith.addf %129, %128 : vector<256x128xf32>
    %131 = arith.mulf %93, %130 : vector<256x128xf32>
    %c0_36 = arith.constant 0 : index
    %c0_37 = arith.constant 0 : index
    %132 = vector.load %arg8[%c0_36, %c0_37] : memref<1x128xf32, #tpu.memory_space<vmem>>, vector<1x128xf32>
    %c0_38 = arith.constant 0 : index
    %c0_39 = arith.constant 0 : index
    %133 = vector.load %arg9[%c0_38, %c0_39] : memref<1x128xf32, #tpu.memory_space<vmem>>, vector<1x128xf32>
    %cst_40 = arith.constant dense<0.000000e+00> : vector<256xf32>
    %134 = vector.multi_reduction <add>, %131, %cst_40 [1] : vector<256x128xf32> to vector<256xf32>
    %135 = vector.shape_cast %134 : vector<256xf32> to vector<256x1xf32>
    %cst_41 = arith.constant 1.280000e+02 : f32
    %136 = vector.broadcast %cst_41 : f32 to vector<256x1xf32>
    %137 = arith.divf %135, %136 : vector<256x1xf32>
    %138 = vector.broadcast %137 : vector<256x1xf32> to vector<256x128xf32>
    %139 = arith.subf %131, %138 : vector<256x128xf32>
    %140 = arith.mulf %139, %139 : vector<256x128xf32>
    %cst_42 = arith.constant dense<0.000000e+00> : vector<256xf32>
    %141 = vector.multi_reduction <add>, %140, %cst_42 [1] : vector<256x128xf32> to vector<256xf32>
    %142 = vector.shape_cast %141 : vector<256xf32> to vector<256x1xf32>
    %cst_43 = arith.constant 1.280000e+02 : f32
    %143 = vector.broadcast %cst_43 : f32 to vector<256x1xf32>
    %144 = arith.divf %142, %143 : vector<256x1xf32>
    %145 = vector.broadcast %137 : vector<256x1xf32> to vector<256x128xf32>
    %146 = arith.subf %131, %145 : vector<256x128xf32>
    %cst_44 = arith.constant 9.99999997E-7 : f32
    %147 = vector.broadcast %cst_44 : f32 to vector<256x1xf32>
    %148 = arith.addf %144, %147 : vector<256x1xf32>
    %149 = math.rsqrt %148 : vector<256x1xf32>
    %150 = vector.broadcast %149 : vector<256x1xf32> to vector<256x128xf32>
    %151 = arith.mulf %146, %150 : vector<256x128xf32>
    %152 = vector.broadcast %132 : vector<1x128xf32> to vector<256x128xf32>
    %153 = arith.mulf %151, %152 : vector<256x128xf32>
    %154 = vector.broadcast %133 : vector<1x128xf32> to vector<256x128xf32>
    %155 = arith.addf %153, %154 : vector<256x128xf32>
    %c0_45 = arith.constant 0 : index
    %c0_46 = arith.constant 0 : index
    %156 = vector.load %arg10[%c0_45, %c0_46] : memref<128x32xf32, #tpu.memory_space<vmem>>, vector<128x32xf32>
    %cst_47 = arith.constant dense<0.000000e+00> : vector<256x32xf32>
    %157 = tpu.matmul %155, %156, %cst_47 {dimension_numbers = #tpu.dot_dimension_numbers<[1], [0], [0], [1], [0, 0, 1, 1], [], []>} : vector<256x128xf32>, vector<128x32xf32>, vector<256x32xf32> -> vector<256x32xf32>
    %c0_48 = arith.constant 0 : index
    %c0_49 = arith.constant 0 : index
    %158 = vector.load %arg11[%c0_48, %c0_49] : memref<1x32xf32, #tpu.memory_space<vmem>>, vector<1x32xf32>
    %159 = vector.broadcast %158 : vector<1x32xf32> to vector<256x32xf32>
    %160 = arith.addf %157, %159 : vector<256x32xf32>
    %161 = vector.shape_cast %160 : vector<256x32xf32> to vector<1x16x16x32xf32>
    %c0_50 = arith.constant 0 : index
    %c0_51 = arith.constant 0 : index
    %c0_52 = arith.constant 0 : index
    %c0_53 = arith.constant 0 : index
    %162 = vector.load %arg12[%c0_50, %c0_51, %c0_52, %c0_53] : memref<1x16x16x32xf32, #tpu.memory_space<vmem>>, vector<1x16x16x32xf32>
    tpu.vector_store %arg12[%c0_50, %c0_51, %c0_52, %c0_53], %161 {strides = array<i32>} : memref<1x16x16x32xf32, #tpu.memory_space<vmem>>, vector<1x16x16x32xf32>,
    return
  }
  func.func @transform_0(%arg0: i32) -> (i32, i32, i32, i32) {
    %c0_i32 = arith.constant 0 : i32
    %c0_i32_0 = arith.constant 0 : i32
    %c0_i32_1 = arith.constant 0 : i32
    %c0_i32_2 = arith.constant 0 : i32
    return %arg0, %c0_i32, %c0_i32_0, %c0_i32_1 : i32, i32, i32, i32
  }
  func.func @transform_1(%arg0: i32) -> (i32, i32) {
    %c0_i32 = arith.constant 0 : i32
    %c0_i32_0 = arith.constant 0 : i32
    %c0_i32_1 = arith.constant 0 : i32
    return %c0_i32, %c0_i32_0 : i32, i32
  }
  func.func @transform_2(%arg0: i32) -> (i32, i32) {
    %c0_i32 = arith.constant 0 : i32
    %c0_i32_0 = arith.constant 0 : i32
    %c0_i32_1 = arith.constant 0 : i32
    return %c0_i32, %c0_i32_0 : i32, i32
  }
  func.func @transform_3(%arg0: i32) -> (i32, i32) {
    %c0_i32 = arith.constant 0 : i32
    %c0_i32_0 = arith.constant 0 : i32
    %c0_i32_1 = arith.constant 0 : i32
    return %c0_i32, %c0_i32_0 : i32, i32
  }
  func.func @transform_4(%arg0: i32) -> (i32, i32) {
    %c0_i32 = arith.constant 0 : i32
    %c0_i32_0 = arith.constant 0 : i32
    %c0_i32_1 = arith.constant 0 : i32
    return %c0_i32, %c0_i32_0 : i32, i32
  }
  func.func @transform_5(%arg0: i32) -> (i32, i32) {
    %c0_i32 = arith.constant 0 : i32
    %c0_i32_0 = arith.constant 0 : i32
    %c0_i32_1 = arith.constant 0 : i32
    return %c0_i32, %c0_i32_0 : i32, i32
  }
  func.func @transform_6(%arg0: i32) -> (i32, i32) {
    %c0_i32 = arith.constant 0 : i32
    %c0_i32_0 = arith.constant 0 : i32
    %c0_i32_1 = arith.constant 0 : i32
    return %c0_i32, %c0_i32_0 : i32, i32
  }
  func.func @transform_7(%arg0: i32) -> (i32, i32) {
    %c0_i32 = arith.constant 0 : i32
    %c0_i32_0 = arith.constant 0 : i32
    %c0_i32_1 = arith.constant 0 : i32
    return %c0_i32, %c0_i32_0 : i32, i32
  }
  func.func @transform_8(%arg0: i32) -> (i32, i32) {
    %c0_i32 = arith.constant 0 : i32
    %c0_i32_0 = arith.constant 0 : i32
    %c0_i32_1 = arith.constant 0 : i32
    return %c0_i32, %c0_i32_0 : i32, i32
  }
  func.func @transform_9(%arg0: i32) -> (i32, i32) {
    %c0_i32 = arith.constant 0 : i32
    %c0_i32_0 = arith.constant 0 : i32
    %c0_i32_1 = arith.constant 0 : i32
    return %c0_i32, %c0_i32_0 : i32, i32
  }
  func.func @transform_10(%arg0: i32) -> (i32, i32) {
    %c0_i32 = arith.constant 0 : i32
    %c0_i32_0 = arith.constant 0 : i32
    %c0_i32_1 = arith.constant 0 : i32
    return %c0_i32, %c0_i32_0 : i32, i32
  }
  func.func @transform_11(%arg0: i32) -> (i32, i32, i32, i32) {
    %c0_i32 = arith.constant 0 : i32
    %c0_i32_0 = arith.constant 0 : i32
    %c0_i32_1 = arith.constant 0 : i32
    %c0_i32_2 = arith.constant 0 : i32
    return %arg0, %c0_i32, %c0_i32_0, %c0_i32_1 : i32, i32, i32, i32
  }
}

</mosaic_0001>

<llo_original>
// kernel: tpu_custom_call.1
$region0: #{tpu_custom_call.1}
  #allocation0 [shape = 'u32[]', space=smem, size = 0x4, offset = 0x4, fixed_abs, tag = 'smem constant byte address 0x4 - core index']
  #allocation1 [shape = 'u32[144,128]{1,0:T(1,128)}', space=vmem, size = 0x12000, scoped, tag = 'internal scratch']
  %s0 = inlined_call_operand.vmem [shape: f32[2,18,18,32], index: 0, kind: input, shape index: {}]
  %s1 = inlined_call_operand.vmem [shape: f32[9,32], index: 1, kind: input, shape index: {}]
  %s2 = inlined_call_operand.vmem [shape: f32[1,32], index: 2, kind: input, shape index: {}]
  %s3 = inlined_call_operand.vmem [shape: f32[1,32], index: 3, kind: input, shape index: {}]
  %s4 = inlined_call_operand.vmem [shape: f32[1,32], index: 4, kind: input, shape index: {}]
  %s5 = inlined_call_operand.vmem [shape: f32[32,128], index: 5, kind: input, shape index: {}]
  %s6 = inlined_call_operand.vmem [shape: f32[1,128], index: 6, kind: input, shape index: {}]
  %s7 = inlined_call_operand.vmem [shape: f32[1,128], index: 7, kind: input, shape index: {}]
  %s8 = inlined_call_operand.vmem [shape: f32[1,128], index: 8, kind: input, shape index: {}]
  %s9 = inlined_call_operand.vmem [shape: f32[128,32], index: 9, kind: input, shape index: {}]
  %s10 = inlined_call_operand.vmem [shape: f32[1,32], index: 10, kind: input, shape index: {}]
  %s11 = inlined_call_operand.hbm [shape: f32[2,16,16,32], index: 11, kind: output, shape index: {}]
  %s12 = sld [smem:[#allocation0]]
  $region77: #{tpu_custom_call.1} parent=0
    _
  %s14 = ssub.s32 1, %s12
  %s15 = scalar_select 0, %s14, %s12
  $region1: #{tpu_custom_call.1} parent=0
    #allocation2 [shape = 'u8[262144]{0}', space=vmem, size = 0x40000, scoped, tag = 'output window, operand 0']
    #allocation3 [shape = 's32[2]{0}', space=sflag, size = 0x8, scoped, tag = 'scoped memory for tpu_custom_call.1']
    %16 = vsyncpa [#allocation3], 0
    %s17 = scalar_lea.sflag [#allocation3], 1
    %18 = vsyncpa %s17, 0
    loop: start=0, step=1, limit=4
    $region2: #{tpu_custom_call.1} parent=1 // loop_pre_header
      _
    $region3: #{tpu_custom_call.1} parent=1 // loop_header
      %s20 = sphi 0, %s24
      %p21 = scmp.ge.s32.totalorder %s20, 4
      %s30 = sphi 0, %s32
      %s33 = sphi 0, %s30
      %s34 = sphi 0, %s33
      %s50 = sphi 0, %s34
      %s54 = sphi 0, %s54
      %s56 = sphi 0, %s54
      %s57 = sphi 0, %s56
      %s71 = sphi 0, %s57
      %s75 = sphi 0, %s75
      %s77 = sphi 0, %s75
      %s78 = sphi 0, %s77
      %s92 = sphi 0, %s78
      %s96 = sphi 0, %s96
      %s98 = sphi 0, %s96
      %s99 = sphi 0, %s98
      %s113 = sphi 0, %s99
      %s117 = sphi 0, %s117
      %s119 = sphi 0, %s117
      %s120 = sphi 0, %s119
      %s134 = sphi 0, %s120
      %s138 = sphi 0, %s138
      %s140 = sphi 0, %s138
      %s141 = sphi 0, %s140
      %s155 = sphi 0, %s141
      %s159 = sphi 0, %s159
      %s161 = sphi 0, %s159
      %s162 = sphi 0, %s161
      %s176 = sphi 0, %s162
      %s180 = sphi 0, %s180
      %s182 = sphi 0, %s180
      %s183 = sphi 0, %s182
      %s197 = sphi 0, %s183
      %s201 = sphi 0, %s201
      %s203 = sphi 0, %s201
      %s204 = sphi 0, %s203
      %s218 = sphi 0, %s204
      %s222 = sphi 0, %s222
      %s224 = sphi 0, %s222
      %s225 = sphi 0, %s224
      %s239 = sphi 0, %s225
      %s243 = sphi 0, %s243
      %s245 = sphi 0, %s243
      %s246 = sphi 0, %s245
      %s260 = sphi 0, %s246
      %s266 = sphi 0, %s268
      %s269 = sphi 0, %s266
      %s270 = sphi 0, %s269
      %s286 = sphi 0, %s270
    $region4: #{tpu_custom_call.1} parent=1 // loop_header_branch
      %23 = sbr.rel (%p21) target = $region8
    $region5: #{tpu_custom_call.1} parent=1 // loop_body
      %s25 = ssub.s32 %s20, 1
      %s26 = ssub.s32 %s20, 2
      %s27 = sadd.s32 %s20, 1
      %s28 = ssub.s32 %s20, %s27
      %p29 = scmp.eq.s32.totalorder %s28, 0
      %s31 = sadd.s32 %s30, 1
      %s32 = scalar_select %p29, %s30, %s31
      %p35 = pneg %p29
      %p36 = scmp.eq.s32.totalorder %s20, 1
      %p37 = por %p35, %p36
      %p38 = scmp.ne.s32.totalorder %s30, %s33
      %p39 = scmp.eq.s32.totalorder %s20, 0
      %p40 = por %p38, %p39
      %p41 = scmp.ne.s32.totalorder %s30, %s33
      %p42 = scmp.eq.s32.totalorder %s25, 1
      %p43 = por %p41, %p42
      %p44 = scmp.ne.s32.totalorder %s33, %s34
      %p45 = scmp.eq.s32.totalorder %s25, 0
      %p46 = por %p44, %p45
      %p47 = scmp.ne.s32.totalorder %s33, %s34
      %p48 = scmp.eq.s32.totalorder %s26, 1
      %p49 = por %p47, %p48
      %p51 = scmp.ne.s32.totalorder %s34, %s50
      %p52 = scmp.eq.s32.totalorder %s26, 0
      %p53 = por %p51, %p52
      %s55 = sadd.s32 %s54, 1
      %p58 = scmp.eq.s32.totalorder %s20, 1
      %p59 = scmp.ne.s32.totalorder %s54, %s56
      %p60 = scmp.eq.s32.totalorder %s20, 0
      %p61 = por %p59, %p60
      %p62 = scmp.ne.s32.totalorder %s54, %s56
      %p63 = scmp.eq.s32.totalorder %s25, 1
      %p64 = por %p62, %p63
      %p65 = scmp.ne.s32.totalorder %s56, %s57
      %p66 = scmp.eq.s32.totalorder %s25, 0
      %p67 = por %p65, %p66
      %p68 = scmp.ne.s32.totalorder %s56, %s57
      %p69 = scmp.eq.s32.totalorder %s26, 1
      %p70 = por %p68, %p69
      %p72 = scmp.ne.s32.totalorder %s57, %s71
      %p73 = scmp.eq.s32.totalorder %s26, 0
      %p74 = por %p72, %p73
      %s76 = sadd.s32 %s75, 1
      %p79 = scmp.eq.s32.totalorder %s20, 1
      %p80 = scmp.ne.s32.totalorder %s75, %s77
      %p81 = scmp.eq.s32.totalorder %s20, 0
      %p82 = por %p80, %p81
      %p83 = scmp.ne.s32.totalorder %s75, %s77
      %p84 = scmp.eq.s32.totalorder %s25, 1
      %p85 = por %p83, %p84
      %p86 = scmp.ne.s32.totalorder %s77, %s78
      %p87 = scmp.eq.s32.totalorder %s25, 0
      %p88 = por %p86, %p87
      %p89 = scmp.ne.s32.totalorder %s77, %s78
      %p90 = scmp.eq.s32.totalorder %s26, 1
      %p91 = por %p89, %p90
      %p93 = scmp.ne.s32.totalorder %s78, %s92
      %p94 = scmp.eq.s32.totalorder %s26, 0
      %p95 = por %p93, %p94
      %s97 = sadd.s32 %s96, 1
      %p100 = scmp.eq.s32.totalorder %s20, 1
      %p101 = scmp.ne.s32.totalorder %s96, %s98
      %p102 = scmp.eq.s32.totalorder %s20, 0
      %p103 = por %p101, %p102
      %p104 = scmp.ne.s32.totalorder %s96, %s98
      %p105 = scmp.eq.s32.totalorder %s25, 1
      %p106 = por %p104, %p105
      %p107 = scmp.ne.s32.totalorder %s98, %s99
      %p108 = scmp.eq.s32.totalorder %s25, 0
      %p109 = por %p107, %p108
      %p110 = scmp.ne.s32.totalorder %s98, %s99
      %p111 = scmp.eq.s32.totalorder %s26, 1
      %p112 = por %p110, %p111
      %p114 = scmp.ne.s32.totalorder %s99, %s113
      %p115 = scmp.eq.s32.totalorder %s26, 0
      %p116 = por %p114, %p115
      %s118 = sadd.s32 %s117, 1
      %p121 = scmp.eq.s32.totalorder %s20, 1
      %p122 = scmp.ne.s32.totalorder %s117, %s119
      %p123 = scmp.eq.s32.totalorder %s20, 0
      %p124 = por %p122, %p123
      %p125 = scmp.ne.s32.totalorder %s117, %s119
      %p126 = scmp.eq.s32.totalorder %s25, 1
      %p127 = por %p125, %p126
      %p128 = scmp.ne.s32.totalorder %s119, %s120
      %p129 = scmp.eq.s32.totalorder %s25, 0
      %p130 = por %p128, %p129
      %p131 = scmp.ne.s32.totalorder %s119, %s120
      %p132 = scmp.eq.s32.totalorder %s26, 1
      %p133 = por %p131, %p132
      %p135 = scmp.ne.s32.totalorder %s120, %s134
      %p136 = scmp.eq.s32.totalorder %s26, 0
      %p137 = por %p135, %p136
      %s139 = sadd.s32 %s138, 1
      %p142 = scmp.eq.s32.totalorder %s20, 1
      %p143 = scmp.ne.s32.totalorder %s138, %s140
      %p144 = scmp.eq.s32.totalorder %s20, 0
      %p145 = por %p143, %p144
      %p146 = scmp.ne.s32.totalorder %s138, %s140
      %p147 = scmp.eq.s32.totalorder %s25, 1
      %p148 = por %p146, %p147
      %p149 = scmp.ne.s32.totalorder %s140, %s141
      %p150 = scmp.eq.s32.totalorder %s25, 0
      %p151 = por %p149, %p150
      %p152 = scmp.ne.s32.totalorder %s140, %s141
      %p153 = scmp.eq.s32.totalorder %s26, 1
      %p154 = por %p152, %p153
      %p156 = scmp.ne.s32.totalorder %s141, %s155
      %p157 = scmp.eq.s32.totalorder %s26, 0
      %p158 = por %p156, %p157
      %s160 = sadd.s32 %s159, 1
      %p163 = scmp.eq.s32.totalorder %s20, 1
      %p164 = scmp.ne.s32.totalorder %s159, %s161
      %p165 = scmp.eq.s32.totalorder %s20, 0
      %p166 = por %p164, %p165
      %p167 = scmp.ne.s32.totalorder %s159, %s161
      %p168 = scmp.eq.s32.totalorder %s25, 1
      %p169 = por %p167, %p168
      %p170 = scmp.ne.s32.totalorder %s161, %s162
      %p171 = scmp.eq.s32.totalorder %s25, 0
      %p172 = por %p170, %p171
      %p173 = scmp.ne.s32.totalorder %s161, %s162
      %p174 = scmp.eq.s32.totalorder %s26, 1
      %p175 = por %p173, %p174
      %p177 = scmp.ne.s32.totalorder %s162, %s176
      %p178 = scmp.eq.s32.totalorder %s26, 0
      %p179 = por %p177, %p178
      %s181 = sadd.s32 %s180, 1
      %p184 = scmp.eq.s32.totalorder %s20, 1
      %p185 = scmp.ne.s32.totalorder %s180, %s182
      %p186 = scmp.eq.s32.totalorder %s20, 0
      %p187 = por %p185, %p186
      %p188 = scmp.ne.s32.totalorder %s180, %s182
      %p189 = scmp.eq.s32.totalorder %s25, 1
      %p190 = por %p188, %p189
      %p191 = scmp.ne.s32.totalorder %s182, %s183
      %p192 = scmp.eq.s32.totalorder %s25, 0
      %p193 = por %p191, %p192
      %p194 = scmp.ne.s32.totalorder %s182, %s183
      %p195 = scmp.eq.s32.totalorder %s26, 1
      %p196 = por %p194, %p195
      %p198 = scmp.ne.s32.totalorder %s183, %s197
      %p199 = scmp.eq.s32.totalorder %s26, 0
      %p200 = por %p198, %p199
      %s202 = sadd.s32 %s201, 1
      %p205 = scmp.eq.s32.totalorder %s20, 1
      %p206 = scmp.ne.s32.totalorder %s201, %s203
      %p207 = scmp.eq.s32.totalorder %s20, 0
      %p208 = por %p206, %p207
      %p209 = scmp.ne.s32.totalorder %s201, %s203
      %p210 = scmp.eq.s32.totalorder %s25, 1
      %p211 = por %p209, %p210
      %p212 = scmp.ne.s32.totalorder %s203, %s204
      %p213 = scmp.eq.s32.totalorder %s25, 0
      %p214 = por %p212, %p213
      %p215 = scmp.ne.s32.totalorder %s203, %s204
      %p216 = scmp.eq.s32.totalorder %s26, 1
      %p217 = por %p215, %p216
      %p219 = scmp.ne.s32.totalorder %s204, %s218
      %p220 = scmp.eq.s32.totalorder %s26, 0
      %p221 = por %p219, %p220
      %s223 = sadd.s32 %s222, 1
      %p226 = scmp.eq.s32.totalorder %s20, 1
      %p227 = scmp.ne.s32.totalorder %s222, %s224
      %p228 = scmp.eq.s32.totalorder %s20, 0
      %p229 = por %p227, %p228
      %p230 = scmp.ne.s32.totalorder %s222, %s224
      %p231 = scmp.eq.s32.totalorder %s25, 1
      %p232 = por %p230, %p231
      %p233 = scmp.ne.s32.totalorder %s224, %s225
      %p234 = scmp.eq.s32.totalorder %s25, 0
      %p235 = por %p233, %p234
      %p236 = scmp.ne.s32.totalorder %s224, %s225
      %p237 = scmp.eq.s32.totalorder %s26, 1
      %p238 = por %p236, %p237
      %p240 = scmp.ne.s32.totalorder %s225, %s239
      %p241 = scmp.eq.s32.totalorder %s26, 0
      %p242 = por %p240, %p241
      %s244 = sadd.s32 %s243, 1
      %p247 = scmp.eq.s32.totalorder %s20, 1
      %p248 = scmp.ne.s32.totalorder %s243, %s245
      %p249 = scmp.eq.s32.totalorder %s20, 0
      %p250 = por %p248, %p249
      %p251 = scmp.ne.s32.totalorder %s243, %s245
      %p252 = scmp.eq.s32.totalorder %s25, 1
      %p253 = por %p251, %p252
      %p254 = scmp.ne.s32.totalorder %s245, %s246
      %p255 = scmp.eq.s32.totalorder %s25, 0
      %p256 = por %p254, %p255
      %p257 = scmp.ne.s32.totalorder %s245, %s246
      %p258 = scmp.eq.s32.totalorder %s26, 1
      %p259 = por %p257, %p258
      %p261 = scmp.ne.s32.totalorder %s246, %s260
      %p262 = scmp.eq.s32.totalorder %s26, 0
      %p263 = por %p261, %p262
      %s264 = ssub.s32 %s20, %s27
      %p265 = scmp.eq.s32.totalorder %s264, 0
      %s267 = sadd.s32 %s266, 1
      %s268 = scalar_select %p265, %s266, %s267
      %p271 = pneg %p265
      %p272 = scmp.eq.s32.totalorder %s20, 1
      %p273 = por %p271, %p272
      %p274 = scmp.ne.s32.totalorder %s266, %s269
      %p275 = scmp.eq.s32.totalorder %s20, 0
      %p276 = por %p274, %p275
      %p277 = scmp.ne.s32.totalorder %s266, %s269
      %p278 = scmp.eq.s32.totalorder %s25, 1
      %p279 = por %p277, %p278
      %p280 = scmp.ne.s32.totalorder %s269, %s270
      %p281 = scmp.eq.s32.totalorder %s25, 0
      %p282 = por %p280, %p281
      %p283 = scmp.ne.s32.totalorder %s269, %s270
      %p284 = scmp.eq.s32.totalorder %s26, 1
      %p285 = por %p283, %p284
      %p287 = scmp.ne.s32.totalorder %s270, %s286
      %p288 = scmp.eq.s32.totalorder %s26, 0
      %p289 = por %p287, %p288
      %p290 = scmp.le.s32.totalorder 1, %s20
      %p291 = scmp.lt.s32.totalorder %s20, 3
      %p292 = pnand %p290, %p291
      %p293 = pneg %p292
      // Predicated region
      $region9: #{tpu_custom_call.1} parent=5 // pred_check
        _
      $region10: #{tpu_custom_call.1} parent=5 // pred_check_branch
        %295 = sbr.rel (%p292) target = $region12
      $region11: #{tpu_custom_call.1} parent=5 // pred_region
        %s296 = ssub.s32 %s20, 1
        // Predicated region
        $region13: #{tpu_custom_call.1} parent=11 // pred_check
          %p297 = pneg %p67
        $region14: #{tpu_custom_call.1} parent=11 // pred_check_branch
          %299 = sbr.rel (%p297) target = $region16
        $region15: #{tpu_custom_call.1} parent=11 // pred_region
          _
        $region16: #{tpu_custom_call.1} parent=11 // pred_fallthru
          _
        // Predicated region
        $region17: #{tpu_custom_call.1} parent=11 // pred_check
          %p300 = pneg %p88
        $region18: #{tpu_custom_call.1} parent=11 // pred_check_branch
          %302 = sbr.rel (%p300) target = $region20
        $region19: #{tpu_custom_call.1} parent=11 // pred_region
          _
        $region20: #{tpu_custom_call.1} parent=11 // pred_fallthru
          _
        // Predicated region
        $region21: #{tpu_custom_call.1} parent=11 // pred_check
          %p303 = pneg %p109
        $region22: #{tpu_custom_call.1} parent=11 // pred_check_branch
          %305 = sbr.rel (%p303) target = $region24
        $region23: #{tpu_custom_call.1} parent=11 // pred_region
          _
        $region24: #{tpu_custom_call.1} parent=11 // pred_fallthru
          _
        // Predicated region
        $region25: #{tpu_custom_call.1} parent=11 // pred_check
          %p306 = pneg %p130
        $region26: #{tpu_custom_call.1} parent=11 // pred_check_branch
          %308 = sbr.rel (%p306) target = $region28
        $region27: #{tpu_custom_call.1} parent=11 // pred_region
          _
        $region28: #{tpu_custom_call.1} parent=11 // pred_fallthru
          _
        // Predicated region
        $region29: #{tpu_custom_call.1} parent=11 // pred_check
          %p309 = pneg %p151
        $region30: #{tpu_custom_call.1} parent=11 // pred_check_branch
          %311 = sbr.rel (%p309) target = $region32
        $region31: #{tpu_custom_call.1} parent=11 // pred_region
          _
        $region32: #{tpu_custom_call.1} parent=11 // pred_fallthru
          _
        // Predicated region
        $region33: #{tpu_custom_call.1} parent=11 // pred_check
          %p312 = pneg %p172
        $region34: #{tpu_custom_call.1} parent=11 // pred_check_branch
          %314 = sbr.rel (%p312) target = $region36
        $region35: #{tpu_custom_call.1} parent=11 // pred_region
          _
        $region36: #{tpu_custom_call.1} parent=11 // pred_fallthru
          _
        // Predicated region
        $region37: #{tpu_custom_call.1} parent=11 // pred_check
          %p315 = pneg %p193
        $region38: #{tpu_custom_call.1} parent=11 // pred_check_branch
          %317 = sbr.rel (%p315) target = $region40
        $region39: #{tpu_custom_call.1} parent=11 // pred_region
          _
        $region40: #{tpu_custom_call.1} parent=11 // pred_fallthru
          _
        // Predicated region
        $region41: #{tpu_custom_call.1} parent=11 // pred_check
          %p318 = pneg %p214
        $region42: #{tpu_custom_call.1} parent=11 // pred_check_branch
          %320 = sbr.rel (%p318) target = $region44
        $region43: #{tpu_custom_call.1} parent=11 // pred_region
          _
        $region44: #{tpu_custom_call.1} parent=11 // pred_fallthru
          _
        // Predicated region
        $region45: #{tpu_custom_call.1} parent=11 // pred_check
          %p321 = pneg %p235
        $region46: #{tpu_custom_call.1} parent=11 // pred_check_branch
          %323 = sbr.rel (%p321) target = $region48
        $region47: #{tpu_custom_call.1} parent=11 // pred_region
          _
        $region48: #{tpu_custom_call.1} parent=11 // pred_fallthru
          _
        // Predicated region
        $region49: #{tpu_custom_call.1} parent=11 // pred_check
          %p324 = pneg %p256
        $region50: #{tpu_custom_call.1} parent=11 // pred_check_branch
          %326 = sbr.rel (%p324) target = $region52
        $region51: #{tpu_custom_call.1} parent=11 // pred_region
          _
        $region52: #{tpu_custom_call.1} parent=11 // pred_fallthru
          _
      $region12: #{tpu_custom_call.1} parent=5 // pred_fallthru
        _
      %p327 = scmp.lt.s32.totalorder %s20, 2
      // Predicated region
      $region53: #{tpu_custom_call.1} parent=5 // pred_check
        %p328 = pneg %p327
      $region54: #{tpu_custom_call.1} parent=5 // pred_check_branch
        %330 = sbr.rel (%p328) target = $region56
      $region55: #{tpu_custom_call.1} parent=5 // pred_region
        // Predicated region
        $region57: #{tpu_custom_call.1} parent=55 // pred_check
          %p331 = pneg %p40
        $region58: #{tpu_custom_call.1} parent=55 // pred_check_branch
          %333 = sbr.rel (%p331) target = $region60
        $region59: #{tpu_custom_call.1} parent=55 // pred_region
          %p334 = scmp.lt.s32.totalorder %s20, 1
          %s335 = scalar_select %p334, %s20, 1
          %s336 = smul.addr %s335, 54
          %s337 = smul.addr %s336, 8
          %s338 = scalar_lea.vmem %s0, %s337
        $region60: #{tpu_custom_call.1} parent=55 // pred_fallthru
          _
      $region56: #{tpu_custom_call.1} parent=5 // pred_fallthru
        _
      %p339 = scmp.le.s32.totalorder 1, %s20
      %p340 = scmp.lt.s32.totalorder %s20, 3
      %p341 = pnand %p339, %p340
      %p342 = pneg %p341
      // Predicated region
      $region61: #{tpu_custom_call.1} parent=5 // pred_check
        _
      $region62: #{tpu_custom_call.1} parent=5 // pred_check_branch
        %344 = sbr.rel (%p341) target = $region64
      $region63: #{tpu_custom_call.1} parent=5 // pred_region
        %s345 = ssub.s32 %s20, 1
        %p346 = scmp.lt.s32.totalorder %s25, 1
        %s347 = scalar_select %p346, %s25, 1
        %s348 = smul.addr %s347, 54
        %s349 = smul.addr %s348, 8
        %s350 = scalar_lea.vmem %s0, %s349
        %p351 = pneg %p46
        %p352 = pneg %p43
        %p353 = pneg %p67
        %p354 = pneg %p64
        %p355 = pneg %p88
        %p356 = pneg %p85
        %p357 = pneg %p109
        %p358 = pneg %p106
        %p359 = pneg %p130
        %p360 = pneg %p127
        %p361 = pneg %p151
        %p362 = pneg %p148
        %p363 = pneg %p172
        %p364 = pneg %p169
        %p365 = pneg %p193
        %p366 = pneg %p190
        %p367 = pneg %p214
        %p368 = pneg %p211
        %p369 = pneg %p235
        %p370 = pneg %p232
        %p371 = pneg %p256
        %p372 = pneg %p253
        %p373 = pneg %p282
        %p374 = pneg %p279
        %s375 = sand.u32 %s269, 1
        %s376 = scalar_lea.sflag [#allocation3], %s375
        %s377 = sand.u32 %s269, 1
        %s378 = smul.addr %s377, 256
        %s379 = scalar_lea.vmem [#allocation2], %s378
        %p380 = scmp.lt.s32.totalorder %s25, 1
        %s381 = scalar_select %p380, %s25, 1
        %s382 = smul.addr %s381, 54
        %s383 = smul.addr %s382, 8
        %s384 = scalar_lea.vmem %s0, %s383
        %v385 = vld [vmem:[%s384] sm:$0xff]
        %v386 = vld [vmem:[%s384 + $0x8] sm:$0xff]
        %v387 = vld [vmem:[%s384 + $0x10] sm:$0x3]
        %v388 = vld [vmem:[%s384 + $0x18] sm:$0xff]
        %v389 = vld [vmem:[%s384 + $0x20] sm:$0xff]
        %v390 = vld [vmem:[%s384 + $0x28] sm:$0x3]
        %v391 = vld [vmem:[%s384 + $0x30] sm:$0xff]
        %v392 = vld [vmem:[%s384 + $0x38] sm:$0xff]
        %v393 = vld [vmem:[%s384 + $0x40] sm:$0x3]
        %v394 = vld [vmem:[%s384 + $0x48] sm:$0xff]
        %v395 = vld [vmem:[%s384 + $0x50] sm:$0xff]
        %v396 = vld [vmem:[%s384 + $0x58] sm:$0x3]
        %v397 = vld [vmem:[%s384 + $0x60] sm:$0xff]
        %v398 = vld [vmem:[%s384 + $0x68] sm:$0xff]
        %v399 = vld [vmem:[%s384 + $0x70] sm:$0x3]
        %v400 = vld [vmem:[%s384 + $0x78] sm:$0xff]
        %v401 = vld [vmem:[%s384 + $0x80] sm:$0xff]
        %v402 = vld [vmem:[%s384 + $0x88] sm:$0x3]
        %v403 = vld [vmem:[%s384 + $0x90] sm:$0xff]
        %v404 = vld [vmem:[%s384 + $0x98] sm:$0xff]
        %v405 = vld [vmem:[%s384 + $0xa0] sm:$0x3]
        %v406 = vld [vmem:[%s384 + $0xa8] sm:$0xff]
        %v407 = vld [vmem:[%s384 + $0xb0] sm:$0xff]
        %v408 = vld [vmem:[%s384 + $0xb8] sm:$0x3]
        %v409 = vld [vmem:[%s384 + $0xc0] sm:$0xff]
        %v410 = vld [vmem:[%s384 + $0xc8] sm:$0xff]
        %v411 = vld [vmem:[%s384 + $0xd0] sm:$0x3]
        %v412 = vld [vmem:[%s384 + $0xd8] sm:$0xff]
        %v413 = vld [vmem:[%s384 + $0xe0] sm:$0xff]
        %v414 = vld [vmem:[%s384 + $0xe8] sm:$0x3]
        %v415 = vld [vmem:[%s384 + $0xf0] sm:$0xff]
        %v416 = vld [vmem:[%s384 + $0xf8] sm:$0xff]
        %v417 = vld [vmem:[%s384 + $0x100] sm:$0x3]
        %v418 = vld [vmem:[%s384 + $0x108] sm:$0xff]
        %v419 = vld [vmem:[%s384 + $0x110] sm:$0xff]
        %v420 = vld [vmem:[%s384 + $0x118] sm:$0x3]
        %v421 = vld [vmem:[%s384 + $0x120] sm:$0xff]
        %v422 = vld [vmem:[%s384 + $0x128] sm:$0xff]
        %v423 = vld [vmem:[%s384 + $0x130] sm:$0x3]
        %v424 = vld [vmem:[%s384 + $0x138] sm:$0xff]
        %v425 = vld [vmem:[%s384 + $0x140] sm:$0xff]
        %v426 = vld [vmem:[%s384 + $0x148] sm:$0x3]
        %v427 = vld [vmem:[%s384 + $0x150] sm:$0xff]
        %v428 = vld [vmem:[%s384 + $0x158] sm:$0xff]
        %v429 = vld [vmem:[%s384 + $0x160] sm:$0x3]
        %v430 = vld [vmem:[%s384 + $0x168] sm:$0xff]
        %v431 = vld [vmem:[%s384 + $0x170] sm:$0xff]
        %v432 = vld [vmem:[%s384 + $0x178] sm:$0x3]
        %v433 = vld [vmem:[%s384 + $0x180] sm:$0xff]
        %v434 = vld [vmem:[%s384 + $0x188] sm:$0xff]
        %v435 = vld [vmem:[%s384 + $0x190] sm:$0x3]
        %v436 = vld [vmem:[%s384 + $0x198] sm:$0xff]
        %v437 = vld [vmem:[%s384 + $0x1a0] sm:$0xff]
        %v438 = vld [vmem:[%s384 + $0x1a8] sm:$0x3]
        %v439 = vld [vmem:[%s1] sm:$0xff]
        %v440 = vld [vmem:[%s1 + $0x8] sm:$0x1]
        %v441 = vlaneseq
        %v442 = vshrl.u32 %v441, 7
        %v443 = vsub.s32 0, %v442
        %v444 = vrot.slane %v439, %v443
        %v445 = vmul.f32 %v385, %v444
        %v446 = vmul.f32 %v386, %v444
        %v447 = vmul.f32 %v388, %v444
        %v448 = vmul.f32 %v389, %v444
        %v449 = vmul.f32 %v391, %v444
        %v450 = vmul.f32 %v392, %v444
        %v451 = vmul.f32 %v394, %v444
        %v452 = vmul.f32 %v395, %v444
        %v453 = vmul.f32 %v397, %v444
        %v454 = vmul.f32 %v398, %v444
        %v455 = vmul.f32 %v400, %v444
        %v456 = vmul.f32 %v401, %v444
        %v457 = vmul.f32 %v403, %v444
        %v458 = vmul.f32 %v404, %v444
        %v459 = vmul.f32 %v406, %v444
        %v460 = vmul.f32 %v407, %v444
        %v461 = vmul.f32 %v409, %v444
        %v462 = vmul.f32 %v410, %v444
        %v463 = vmul.f32 %v412, %v444
        %v464 = vmul.f32 %v413, %v444
        %v465 = vmul.f32 %v415, %v444
        %v466 = vmul.f32 %v416, %v444
        %v467 = vmul.f32 %v418, %v444
        %v468 = vmul.f32 %v419, %v444
        %v469 = vmul.f32 %v421, %v444
        %v470 = vmul.f32 %v422, %v444
        %v471 = vmul.f32 %v424, %v444
        %v472 = vmul.f32 %v425, %v444
        %v473 = vmul.f32 %v427, %v444
        %v474 = vmul.f32 %v428, %v444
        %v475 = vmul.f32 %v430, %v444
        %v476 = vmul.f32 %v431, %v444
        %v477 = vadd.f32 %v445, 0.0
        %v478 = vadd.f32 %v446, 0.0
        %v479 = vadd.f32 %v447, 0.0
        %v480 = vadd.f32 %v448, 0.0
        %v481 = vadd.f32 %v449, 0.0
        %v482 = vadd.f32 %v450, 0.0
        %v483 = vadd.f32 %v451, 0.0
        %v484 = vadd.f32 %v452, 0.0
        %v485 = vadd.f32 %v453, 0.0
        %v486 = vadd.f32 %v454, 0.0
        %v487 = vadd.f32 %v455, 0.0
        %v488 = vadd.f32 %v456, 0.0
        %v489 = vadd.f32 %v457, 0.0
        %v490 = vadd.f32 %v458, 0.0
        %v491 = vadd.f32 %v459, 0.0
        %v492 = vadd.f32 %v460, 0.0
        %v493 = vadd.f32 %v461, 0.0
        %v494 = vadd.f32 %v462, 0.0
        %v495 = vadd.f32 %v463, 0.0
        %v496 = vadd.f32 %v464, 0.0
        %v497 = vadd.f32 %v465, 0.0
        %v498 = vadd.f32 %v466, 0.0
        %v499 = vadd.f32 %v467, 0.0
        %v500 = vadd.f32 %v468, 0.0
        %v501 = vadd.f32 %v469, 0.0
        %v502 = vadd.f32 %v470, 0.0
        %v503 = vadd.f32 %v471, 0.0
        %v504 = vadd.f32 %v472, 0.0
        %v505 = vadd.f32 %v473, 0.0
        %v506 = vadd.f32 %v474, 0.0
        %v507 = vadd.f32 %v475, 0.0
        %v508 = vadd.f32 %v476, 0.0
        %v509 = vlaneseq
        %v510 = vshrl.u32 %v509, 7
        %v511 = vsub.s32 1, %v510
        %v512 = vrot.slane %v439, %v511
        %v513 = vmul.f32 %v385, %v512
        %v514 = vmul.f32 %v386, %v512
        %v515 = vmul.f32 %v387, %v512
        %v516 = vmul.f32 %v388, %v512
        %v517 = vmul.f32 %v389, %v512
        %v518 = vmul.f32 %v390, %v512
        %v519 = vmul.f32 %v391, %v512
        %v520 = vmul.f32 %v392, %v512
        %v521 = vmul.f32 %v393, %v512
        %v522 = vmul.f32 %v394, %v512
        %v523 = vmul.f32 %v395, %v512
        %v524 = vmul.f32 %v396, %v512
        %v525 = vmul.f32 %v397, %v512
        %v526 = vmul.f32 %v398, %v512
        %v527 = vmul.f32 %v399, %v512
        %v528 = vmul.f32 %v400, %v512
        %v529 = vmul.f32 %v401, %v512
        %v530 = vmul.f32 %v402, %v512
        %v531 = vmul.f32 %v403, %v512
        %v532 = vmul.f32 %v404, %v512
        %v533 = vmul.f32 %v405, %v512
        %v534 = vmul.f32 %v406, %v512
        %v535 = vmul.f32 %v407, %v512
        %v536 = vmul.f32 %v408, %v512
        %v537 = vmul.f32 %v409, %v512
        %v538 = vmul.f32 %v410, %v512
        %v539 = vmul.f32 %v411, %v512
        %v540 = vmul.f32 %v412, %v512
        %v541 = vmul.f32 %v413, %v512
        %v542 = vmul.f32 %v414, %v512
        %v543 = vmul.f32 %v415, %v512
        %v544 = vmul.f32 %v416, %v512
        %v545 = vmul.f32 %v417, %v512
        %v546 = vmul.f32 %v418, %v512
        %v547 = vmul.f32 %v419, %v512
        %v548 = vmul.f32 %v420, %v512
        %v549 = vmul.f32 %v421, %v512
        %v550 = vmul.f32 %v422, %v512
        %v551 = vmul.f32 %v423, %v512
        %v552 = vmul.f32 %v424, %v512
        %v553 = vmul.f32 %v425, %v512
        %v554 = vmul.f32 %v426, %v512
        %v555 = vmul.f32 %v427, %v512
        %v556 = vmul.f32 %v428, %v512
        %v557 = vmul.f32 %v429, %v512
        %v558 = vmul.f32 %v430, %v512
        %v559 = vmul.f32 %v431, %v512
        %v560 = vmul.f32 %v432, %v512
        %vm609 = vcmask 1046528
        %v610 = vrot.slane %v513, 1
        %v611 = vrot.slane %v514, 1
        %v612 = vsel %vm609, %v610, %v611
        %v613 = vrot.slane %v515, 1
        %v614 = vsel %vm609, %v611, %v613
        %v615 = vrot.slane %v516, 1
        %v616 = vrot.slane %v517, 1
        %v617 = vsel %vm609, %v615, %v616
        %v618 = vrot.slane %v518, 1
        %v619 = vsel %vm609, %v616, %v618
        %v620 = vrot.slane %v519, 1
        %v621 = vrot.slane %v520, 1
        %v622 = vsel %vm609, %v620, %v621
        %v623 = vrot.slane %v521, 1
        %v624 = vsel %vm609, %v621, %v623
        %v625 = vrot.slane %v522, 1
        %v626 = vrot.slane %v523, 1
        %v627 = vsel %vm609, %v625, %v626
        %v628 = vrot.slane %v524, 1
        %v629 = vsel %vm609, %v626, %v628
        %v630 = vrot.slane %v525, 1
        %v631 = vrot.slane %v526, 1
        %v632 = vsel %vm609, %v630, %v631
        %v633 = vrot.slane %v527, 1
        %v634 = vsel %vm609, %v631, %v633
        %v635 = vrot.slane %v528, 1
        %v636 = vrot.slane %v529, 1
        %v637 = vsel %vm609, %v635, %v636
        %v638 = vrot.slane %v530, 1
        %v639 = vsel %vm609, %v636, %v638
        %v640 = vrot.slane %v531, 1
        %v641 = vrot.slane %v532, 1
        %v642 = vsel %vm609, %v640, %v641
        %v643 = vrot.slane %v533, 1
        %v644 = vsel %vm609, %v641, %v643
        %v645 = vrot.slane %v534, 1
        %v646 = vrot.slane %v535, 1
        %v647 = vsel %vm609, %v645, %v646
        %v648 = vrot.slane %v536, 1
        %v649 = vsel %vm609, %v646, %v648
        %v650 = vrot.slane %v537, 1
        %v651 = vrot.slane %v538, 1
        %v652 = vsel %vm609, %v650, %v651
        %v653 = vrot.slane %v539, 1
        %v654 = vsel %vm609, %v651, %v653
        %v655 = vrot.slane %v540, 1
        %v656 = vrot.slane %v541, 1
        %v657 = vsel %vm609, %v655, %v656
        %v658 = vrot.slane %v542, 1
        %v659 = vsel %vm609, %v656, %v658
        %v660 = vrot.slane %v543, 1
        %v661 = vrot.slane %v544, 1
        %v662 = vsel %vm609, %v660, %v661
        %v663 = vrot.slane %v545, 1
        %v664 = vsel %vm609, %v661, %v663
        %v665 = vrot.slane %v546, 1
        %v666 = vrot.slane %v547, 1
        %v667 = vsel %vm609, %v665, %v666
        %v668 = vrot.slane %v548, 1
        %v669 = vsel %vm609, %v666, %v668
        %v670 = vrot.slane %v549, 1
        %v671 = vrot.slane %v550, 1
        %v672 = vsel %vm609, %v670, %v671
        %v673 = vrot.slane %v551, 1
        %v674 = vsel %vm609, %v671, %v673
        %v675 = vrot.slane %v552, 1
        %v676 = vrot.slane %v553, 1
        %v677 = vsel %vm609, %v675, %v676
        %v678 = vrot.slane %v554, 1
        %v679 = vsel %vm609, %v676, %v678
        %v680 = vrot.slane %v555, 1
        %v681 = vrot.slane %v556, 1
        %v682 = vsel %vm609, %v680, %v681
        %v683 = vrot.slane %v557, 1
        %v684 = vsel %vm609, %v681, %v683
        %v685 = vrot.slane %v558, 1
        %v686 = vrot.slane %v559, 1
        %v687 = vsel %vm609, %v685, %v686
        %v688 = vrot.slane %v560, 1
        %v689 = vsel %vm609, %v686, %v688
        %v722 = vadd.f32 %v477, %v612
        %v723 = vadd.f32 %v478, %v614
        %v724 = vadd.f32 %v479, %v617
        %v725 = vadd.f32 %v480, %v619
        %v726 = vadd.f32 %v481, %v622
        %v727 = vadd.f32 %v482, %v624
        %v728 = vadd.f32 %v483, %v627
        %v729 = vadd.f32 %v484, %v629
        %v730 = vadd.f32 %v485, %v632
        %v731 = vadd.f32 %v486, %v634
        %v732 = vadd.f32 %v487, %v637
        %v733 = vadd.f32 %v488, %v639
        %v734 = vadd.f32 %v489, %v642
        %v735 = vadd.f32 %v490, %v644
        %v736 = vadd.f32 %v491, %v647
        %v737 = vadd.f32 %v492, %v649
        %v738 = vadd.f32 %v493, %v652
        %v739 = vadd.f32 %v494, %v654
        %v740 = vadd.f32 %v495, %v657
        %v741 = vadd.f32 %v496, %v659
        %v742 = vadd.f32 %v497, %v662
        %v743 = vadd.f32 %v498, %v664
        %v744 = vadd.f32 %v499, %v667
        %v745 = vadd.f32 %v500, %v669
        %v746 = vadd.f32 %v501, %v672
        %v747 = vadd.f32 %v502, %v674
        %v748 = vadd.f32 %v503, %v677
        %v749 = vadd.f32 %v504, %v679
        %v750 = vadd.f32 %v505, %v682
        %v751 = vadd.f32 %v506, %v684
        %v752 = vadd.f32 %v507, %v687
        %v753 = vadd.f32 %v508, %v689
        %v754 = vlaneseq
        %v755 = vshrl.u32 %v754, 7
        %v756 = vsub.s32 2, %v755
        %v757 = vrot.slane %v439, %v756
        %v758 = vmul.f32 %v385, %v757
        %v759 = vmul.f32 %v386, %v757
        %v760 = vmul.f32 %v387, %v757
        %v761 = vmul.f32 %v388, %v757
        %v762 = vmul.f32 %v389, %v757
        %v763 = vmul.f32 %v390, %v757
        %v764 = vmul.f32 %v391, %v757
        %v765 = vmul.f32 %v392, %v757
        %v766 = vmul.f32 %v393, %v757
        %v767 = vmul.f32 %v394, %v757
        %v768 = vmul.f32 %v395, %v757
        %v769 = vmul.f32 %v396, %v757
        %v770 = vmul.f32 %v397, %v757
        %v771 = vmul.f32 %v398, %v757
        %v772 = vmul.f32 %v399, %v757
        %v773 = vmul.f32 %v400, %v757
        %v774 = vmul.f32 %v401, %v757
        %v775 = vmul.f32 %v402, %v757
        %v776 = vmul.f32 %v403, %v757
        %v777 = vmul.f32 %v404, %v757
        %v778 = vmul.f32 %v405, %v757
        %v779 = vmul.f32 %v406, %v757
        %v780 = vmul.f32 %v407, %v757
        %v781 = vmul.f32 %v408, %v757
        %v782 = vmul.f32 %v409, %v757
        %v783 = vmul.f32 %v410, %v757
        %v784 = vmul.f32 %v411, %v757
        %v785 = vmul.f32 %v412, %v757
        %v786 = vmul.f32 %v413, %v757
        %v787 = vmul.f32 %v414, %v757
        %v788 = vmul.f32 %v415, %v757
        %v789 = vmul.f32 %v416, %v757
        %v790 = vmul.f32 %v417, %v757
        %v791 = vmul.f32 %v418, %v757
        %v792 = vmul.f32 %v419, %v757
        %v793 = vmul.f32 %v420, %v757
        %v794 = vmul.f32 %v421, %v757
        %v795 = vmul.f32 %v422, %v757
        %v796 = vmul.f32 %v423, %v757
        %v797 = vmul.f32 %v424, %v757
        %v798 = vmul.f32 %v425, %v757
        %v799 = vmul.f32 %v426, %v757
        %v800 = vmul.f32 %v427, %v757
        %v801 = vmul.f32 %v428, %v757
        %v802 = vmul.f32 %v429, %v757
        %v803 = vmul.f32 %v430, %v757
        %v804 = vmul.f32 %v431, %v757
        %v805 = vmul.f32 %v432, %v757
        %vm854 = vcmask 1045504
        %v855 = vrot.slane %v758, 2
        %v856 = vrot.slane %v759, 2
        %v857 = vsel %vm854, %v855, %v856
        %v858 = vrot.slane %v760, 2
        %v859 = vsel %vm854, %v856, %v858
        %v860 = vrot.slane %v761, 2
        %v861 = vrot.slane %v762, 2
        %v862 = vsel %vm854, %v860, %v861
        %v863 = vrot.slane %v763, 2
        %v864 = vsel %vm854, %v861, %v863
        %v865 = vrot.slane %v764, 2
        %v866 = vrot.slane %v765, 2
        %v867 = vsel %vm854, %v865, %v866
        %v868 = vrot.slane %v766, 2
        %v869 = vsel %vm854, %v866, %v868
        %v870 = vrot.slane %v767, 2
        %v871 = vrot.slane %v768, 2
        %v872 = vsel %vm854, %v870, %v871
        %v873 = vrot.slane %v769, 2
        %v874 = vsel %vm854, %v871, %v873
        %v875 = vrot.slane %v770, 2
        %v876 = vrot.slane %v771, 2
        %v877 = vsel %vm854, %v875, %v876
        %v878 = vrot.slane %v772, 2
        %v879 = vsel %vm854, %v876, %v878
        %v880 = vrot.slane %v773, 2
        %v881 = vrot.slane %v774, 2
        %v882 = vsel %vm854, %v880, %v881
        %v883 = vrot.slane %v775, 2
        %v884 = vsel %vm854, %v881, %v883
        %v885 = vrot.slane %v776, 2
        %v886 = vrot.slane %v777, 2
        %v887 = vsel %vm854, %v885, %v886
        %v888 = vrot.slane %v778, 2
        %v889 = vsel %vm854, %v886, %v888
        %v890 = vrot.slane %v779, 2
        %v891 = vrot.slane %v780, 2
        %v892 = vsel %vm854, %v890, %v891
        %v893 = vrot.slane %v781, 2
        %v894 = vsel %vm854, %v891, %v893
        %v895 = vrot.slane %v782, 2
        %v896 = vrot.slane %v783, 2
        %v897 = vsel %vm854, %v895, %v896
        %v898 = vrot.slane %v784, 2
        %v899 = vsel %vm854, %v896, %v898
        %v900 = vrot.slane %v785, 2
        %v901 = vrot.slane %v786, 2
        %v902 = vsel %vm854, %v900, %v901
        %v903 = vrot.slane %v787, 2
        %v904 = vsel %vm854, %v901, %v903
        %v905 = vrot.slane %v788, 2
        %v906 = vrot.slane %v789, 2
        %v907 = vsel %vm854, %v905, %v906
        %v908 = vrot.slane %v790, 2
        %v909 = vsel %vm854, %v906, %v908
        %v910 = vrot.slane %v791, 2
        %v911 = vrot.slane %v792, 2
        %v912 = vsel %vm854, %v910, %v911
        %v913 = vrot.slane %v793, 2
        %v914 = vsel %vm854, %v911, %v913
        %v915 = vrot.slane %v794, 2
        %v916 = vrot.slane %v795, 2
        %v917 = vsel %vm854, %v915, %v916
        %v918 = vrot.slane %v796, 2
        %v919 = vsel %vm854, %v916, %v918
        %v920 = vrot.slane %v797, 2
        %v921 = vrot.slane %v798, 2
        %v922 = vsel %vm854, %v920, %v921
        %v923 = vrot.slane %v799, 2
        %v924 = vsel %vm854, %v921, %v923
        %v925 = vrot.slane %v800, 2
        %v926 = vrot.slane %v801, 2
        %v927 = vsel %vm854, %v925, %v926
        %v928 = vrot.slane %v802, 2
        %v929 = vsel %vm854, %v926, %v928
        %v930 = vrot.slane %v803, 2
        %v931 = vrot.slane %v804, 2
        %v932 = vsel %vm854, %v930, %v931
        %v933 = vrot.slane %v805, 2
        %v934 = vsel %vm854, %v931, %v933
        %v967 = vadd.f32 %v722, %v857
        %v968 = vadd.f32 %v723, %v859
        %v969 = vadd.f32 %v724, %v862
        %v970 = vadd.f32 %v725, %v864
        %v971 = vadd.f32 %v726, %v867
        %v972 = vadd.f32 %v727, %v869
        %v973 = vadd.f32 %v728, %v872
        %v974 = vadd.f32 %v729, %v874
        %v975 = vadd.f32 %v730, %v877
        %v976 = vadd.f32 %v731, %v879
        %v977 = vadd.f32 %v732, %v882
        %v978 = vadd.f32 %v733, %v884
        %v979 = vadd.f32 %v734, %v887
        %v980 = vadd.f32 %v735, %v889
        %v981 = vadd.f32 %v736, %v892
        %v982 = vadd.f32 %v737, %v894
        %v983 = vadd.f32 %v738, %v897
        %v984 = vadd.f32 %v739, %v899
        %v985 = vadd.f32 %v740, %v902
        %v986 = vadd.f32 %v741, %v904
        %v987 = vadd.f32 %v742, %v907
        %v988 = vadd.f32 %v743, %v909
        %v989 = vadd.f32 %v744, %v912
        %v990 = vadd.f32 %v745, %v914
        %v991 = vadd.f32 %v746, %v917
        %v992 = vadd.f32 %v747, %v919
        %v993 = vadd.f32 %v748, %v922
        %v994 = vadd.f32 %v749, %v924
        %v995 = vadd.f32 %v750, %v927
        %v996 = vadd.f32 %v751, %v929
        %v997 = vadd.f32 %v752, %v932
        %v998 = vadd.f32 %v753, %v934
        %v999 = vlaneseq
        %v1000 = vshrl.u32 %v999, 7
        %v1001 = vsub.s32 3, %v1000
        %v1002 = vrot.slane %v439, %v1001
        %v1003 = vmul.f32 %v388, %v1002
        %v1004 = vmul.f32 %v389, %v1002
        %v1005 = vmul.f32 %v391, %v1002
        %v1006 = vmul.f32 %v392, %v1002
        %v1007 = vmul.f32 %v394, %v1002
        %v1008 = vmul.f32 %v395, %v1002
        %v1009 = vmul.f32 %v397, %v1002
        %v1010 = vmul.f32 %v398, %v1002
        %v1011 = vmul.f32 %v400, %v1002
        %v1012 = vmul.f32 %v401, %v1002
        %v1013 = vmul.f32 %v403, %v1002
        %v1014 = vmul.f32 %v404, %v1002
        %v1015 = vmul.f32 %v406, %v1002
        %v1016 = vmul.f32 %v407, %v1002
        %v1017 = vmul.f32 %v409, %v1002
        %v1018 = vmul.f32 %v410, %v1002
        %v1019 = vmul.f32 %v412, %v1002
        %v1020 = vmul.f32 %v413, %v1002
        %v1021 = vmul.f32 %v415, %v1002
        %v1022 = vmul.f32 %v416, %v1002
        %v1023 = vmul.f32 %v418, %v1002
        %v1024 = vmul.f32 %v419, %v1002
        %v1025 = vmul.f32 %v421, %v1002
        %v1026 = vmul.f32 %v422, %v1002
        %v1027 = vmul.f32 %v424, %v1002
        %v1028 = vmul.f32 %v425, %v1002
        %v1029 = vmul.f32 %v427, %v1002
        %v1030 = vmul.f32 %v428, %v1002
        %v1031 = vmul.f32 %v430, %v1002
        %v1032 = vmul.f32 %v431, %v1002
        %v1033 = vmul.f32 %v433, %v1002
        %v1034 = vmul.f32 %v434, %v1002
        %v1035 = vadd.f32 %v967, %v1003
        %v1036 = vadd.f32 %v968, %v1004
        %v1037 = vadd.f32 %v969, %v1005
        %v1038 = vadd.f32 %v970, %v1006
        %v1039 = vadd.f32 %v971, %v1007
        %v1040 = vadd.f32 %v972, %v1008
        %v1041 = vadd.f32 %v973, %v1009
        %v1042 = vadd.f32 %v974, %v1010
        %v1043 = vadd.f32 %v975, %v1011
        %v1044 = vadd.f32 %v976, %v1012
        %v1045 = vadd.f32 %v977, %v1013
        %v1046 = vadd.f32 %v978, %v1014
        %v1047 = vadd.f32 %v979, %v1015
        %v1048 = vadd.f32 %v980, %v1016
        %v1049 = vadd.f32 %v981, %v1017
        %v1050 = vadd.f32 %v982, %v1018
        %v1051 = vadd.f32 %v983, %v1019
        %v1052 = vadd.f32 %v984, %v1020
        %v1053 = vadd.f32 %v985, %v1021
        %v1054 = vadd.f32 %v986, %v1022
        %v1055 = vadd.f32 %v987, %v1023
        %v1056 = vadd.f32 %v988, %v1024
        %v1057 = vadd.f32 %v989, %v1025
        %v1058 = vadd.f32 %v990, %v1026
        %v1059 = vadd.f32 %v991, %v1027
        %v1060 = vadd.f32 %v992, %v1028
        %v1061 = vadd.f32 %v993, %v1029
        %v1062 = vadd.f32 %v994, %v1030
        %v1063 = vadd.f32 %v995, %v1031
        %v1064 = vadd.f32 %v996, %v1032
        %v1065 = vadd.f32 %v997, %v1033
        %v1066 = vadd.f32 %v998, %v1034
        %v1067 = vlaneseq
        %v1068 = vshrl.u32 %v1067, 7
        %v1069 = vsub.s32 4, %v1068
        %v1070 = vrot.slane %v439, %v1069
        %v1071 = vmul.f32 %v388, %v1070
        %v1072 = vmul.f32 %v389, %v1070
        %v1073 = vmul.f32 %v390, %v1070
        %v1074 = vmul.f32 %v391, %v1070
        %v1075 = vmul.f32 %v392, %v1070
        %v1076 = vmul.f32 %v393, %v1070
        %v1077 = vmul.f32 %v394, %v1070
        %v1078 = vmul.f32 %v395, %v1070
        %v1079 = vmul.f32 %v396, %v1070
        %v1080 = vmul.f32 %v397, %v1070
        %v1081 = vmul.f32 %v398, %v1070
        %v1082 = vmul.f32 %v399, %v1070
        %v1083 = vmul.f32 %v400, %v1070
        %v1084 = vmul.f32 %v401, %v1070
        %v1085 = vmul.f32 %v402, %v1070
        %v1086 = vmul.f32 %v403, %v1070
        %v1087 = vmul.f32 %v404, %v1070
        %v1088 = vmul.f32 %v405, %v1070
        %v1089 = vmul.f32 %v406, %v1070
        %v1090 = vmul.f32 %v407, %v1070
        %v1091 = vmul.f32 %v408, %v1070
        %v1092 = vmul.f32 %v409, %v1070
        %v1093 = vmul.f32 %v410, %v1070
        %v1094 = vmul.f32 %v411, %v1070
        %v1095 = vmul.f32 %v412, %v1070
        %v1096 = vmul.f32 %v413, %v1070
        %v1097 = vmul.f32 %v414, %v1070
        %v1098 = vmul.f32 %v415, %v1070
        %v1099 = vmul.f32 %v416, %v1070
        %v1100 = vmul.f32 %v417, %v1070
        %v1101 = vmul.f32 %v418, %v1070
        %v1102 = vmul.f32 %v419, %v1070
        %v1103 = vmul.f32 %v420, %v1070
        %v1104 = vmul.f32 %v421, %v1070
        %v1105 = vmul.f32 %v422, %v1070
        %v1106 = vmul.f32 %v423, %v1070
        %v1107 = vmul.f32 %v424, %v1070
        %v1108 = vmul.f32 %v425, %v1070
        %v1109 = vmul.f32 %v426, %v1070
        %v1110 = vmul.f32 %v427, %v1070
        %v1111 = vmul.f32 %v428, %v1070
        %v1112 = vmul.f32 %v429, %v1070
        %v1113 = vmul.f32 %v430, %v1070
        %v1114 = vmul.f32 %v431, %v1070
        %v1115 = vmul.f32 %v432, %v1070
        %v1116 = vmul.f32 %v433, %v1070
        %v1117 = vmul.f32 %v434, %v1070
        %v1118 = vmul.f32 %v435, %v1070
        %v1167 = vrot.slane %v1071, 1
        %v1168 = vrot.slane %v1072, 1
        %v1169 = vsel %vm609, %v1167, %v1168
        %v1170 = vrot.slane %v1073, 1
        %v1171 = vsel %vm609, %v1168, %v1170
        %v1172 = vrot.slane %v1074, 1
        %v1173 = vrot.slane %v1075, 1
        %v1174 = vsel %vm609, %v1172, %v1173
        %v1175 = vrot.slane %v1076, 1
        %v1176 = vsel %vm609, %v1173, %v1175
        %v1177 = vrot.slane %v1077, 1
        %v1178 = vrot.slane %v1078, 1
        %v1179 = vsel %vm609, %v1177, %v1178
        %v1180 = vrot.slane %v1079, 1
        %v1181 = vsel %vm609, %v1178, %v1180
        %v1182 = vrot.slane %v1080, 1
        %v1183 = vrot.slane %v1081, 1
        %v1184 = vsel %vm609, %v1182, %v1183
        %v1185 = vrot.slane %v1082, 1
        %v1186 = vsel %vm609, %v1183, %v1185
        %v1187 = vrot.slane %v1083, 1
        %v1188 = vrot.slane %v1084, 1
        %v1189 = vsel %vm609, %v1187, %v1188
        %v1190 = vrot.slane %v1085, 1
        %v1191 = vsel %vm609, %v1188, %v1190
        %v1192 = vrot.slane %v1086, 1
        %v1193 = vrot.slane %v1087, 1
        %v1194 = vsel %vm609, %v1192, %v1193
        %v1195 = vrot.slane %v1088, 1
        %v1196 = vsel %vm609, %v1193, %v1195
        %v1197 = vrot.slane %v1089, 1
        %v1198 = vrot.slane %v1090, 1
        %v1199 = vsel %vm609, %v1197, %v1198
        %v1200 = vrot.slane %v1091, 1
        %v1201 = vsel %vm609, %v1198, %v1200
        %v1202 = vrot.slane %v1092, 1
        %v1203 = vrot.slane %v1093, 1
        %v1204 = vsel %vm609, %v1202, %v1203
        %v1205 = vrot.slane %v1094, 1
        %v1206 = vsel %vm609, %v1203, %v1205
        %v1207 = vrot.slane %v1095, 1
        %v1208 = vrot.slane %v1096, 1
        %v1209 = vsel %vm609, %v1207, %v1208
        %v1210 = vrot.slane %v1097, 1
        %v1211 = vsel %vm609, %v1208, %v1210
        %v1212 = vrot.slane %v1098, 1
        %v1213 = vrot.slane %v1099, 1
        %v1214 = vsel %vm609, %v1212, %v1213
        %v1215 = vrot.slane %v1100, 1
        %v1216 = vsel %vm609, %v1213, %v1215
        %v1217 = vrot.slane %v1101, 1
        %v1218 = vrot.slane %v1102, 1
        %v1219 = vsel %vm609, %v1217, %v1218
        %v1220 = vrot.slane %v1103, 1
        %v1221 = vsel %vm609, %v1218, %v1220
        %v1222 = vrot.slane %v1104, 1
        %v1223 = vrot.slane %v1105, 1
        %v1224 = vsel %vm609, %v1222, %v1223
        %v1225 = vrot.slane %v1106, 1
        %v1226 = vsel %vm609, %v1223, %v1225
        %v1227 = vrot.slane %v1107, 1
        %v1228 = vrot.slane %v1108, 1
        %v1229 = vsel %vm609, %v1227, %v1228
        %v1230 = vrot.slane %v1109, 1
        %v1231 = vsel %vm609, %v1228, %v1230
        %v1232 = vrot.slane %v1110, 1
        %v1233 = vrot.slane %v1111, 1
        %v1234 = vsel %vm609, %v1232, %v1233
        %v1235 = vrot.slane %v1112, 1
        %v1236 = vsel %vm609, %v1233, %v1235
        %v1237 = vrot.slane %v1113, 1
        %v1238 = vrot.slane %v1114, 1
        %v1239 = vsel %vm609, %v1237, %v1238
        %v1240 = vrot.slane %v1115, 1
        %v1241 = vsel %vm609, %v1238, %v1240
        %v1242 = vrot.slane %v1116, 1
        %v1243 = vrot.slane %v1117, 1
        %v1244 = vsel %vm609, %v1242, %v1243
        %v1245 = vrot.slane %v1118, 1
        %v1246 = vsel %vm609, %v1243, %v1245
        %v1279 = vadd.f32 %v1035, %v1169
        %v1280 = vadd.f32 %v1036, %v1171
        %v1281 = vadd.f32 %v1037, %v1174
        %v1282 = vadd.f32 %v1038, %v1176
        %v1283 = vadd.f32 %v1039, %v1179
        %v1284 = vadd.f32 %v1040, %v1181
        %v1285 = vadd.f32 %v1041, %v1184
        %v1286 = vadd.f32 %v1042, %v1186
        %v1287 = vadd.f32 %v1043, %v1189
        %v1288 = vadd.f32 %v1044, %v1191
        %v1289 = vadd.f32 %v1045, %v1194
        %v1290 = vadd.f32 %v1046, %v1196
        %v1291 = vadd.f32 %v1047, %v1199
        %v1292 = vadd.f32 %v1048, %v1201
        %v1293 = vadd.f32 %v1049, %v1204
        %v1294 = vadd.f32 %v1050, %v1206
        %v1295 = vadd.f32 %v1051, %v1209
        %v1296 = vadd.f32 %v1052, %v1211
        %v1297 = vadd.f32 %v1053, %v1214
        %v1298 = vadd.f32 %v1054, %v1216
        %v1299 = vadd.f32 %v1055, %v1219
        %v1300 = vadd.f32 %v1056, %v1221
        %v1301 = vadd.f32 %v1057, %v1224
        %v1302 = vadd.f32 %v1058, %v1226
        %v1303 = vadd.f32 %v1059, %v1229
        %v1304 = vadd.f32 %v1060, %v1231
        %v1305 = vadd.f32 %v1061, %v1234
        %v1306 = vadd.f32 %v1062, %v1236
        %v1307 = vadd.f32 %v1063, %v1239
        %v1308 = vadd.f32 %v1064, %v1241
        %v1309 = vadd.f32 %v1065, %v1244
        %v1310 = vadd.f32 %v1066, %v1246
        %v1311 = vlaneseq
        %v1312 = vshrl.u32 %v1311, 7
        %v1313 = vsub.s32 5, %v1312
        %v1314 = vrot.slane %v439, %v1313
        %v1315 = vmul.f32 %v388, %v1314
        %v1316 = vmul.f32 %v389, %v1314
        %v1317 = vmul.f32 %v390, %v1314
        %v1318 = vmul.f32 %v391, %v1314
        %v1319 = vmul.f32 %v392, %v1314
        %v1320 = vmul.f32 %v393, %v1314
        %v1321 = vmul.f32 %v394, %v1314
        %v1322 = vmul.f32 %v395, %v1314
        %v1323 = vmul.f32 %v396, %v1314
        %v1324 = vmul.f32 %v397, %v1314
        %v1325 = vmul.f32 %v398, %v1314
        %v1326 = vmul.f32 %v399, %v1314
        %v1327 = vmul.f32 %v400, %v1314
        %v1328 = vmul.f32 %v401, %v1314
        %v1329 = vmul.f32 %v402, %v1314
        %v1330 = vmul.f32 %v403, %v1314
        %v1331 = vmul.f32 %v404, %v1314
        %v1332 = vmul.f32 %v405, %v1314
        %v1333 = vmul.f32 %v406, %v1314
        %v1334 = vmul.f32 %v407, %v1314
        %v1335 = vmul.f32 %v408, %v1314
        %v1336 = vmul.f32 %v409, %v1314
        %v1337 = vmul.f32 %v410, %v1314
        %v1338 = vmul.f32 %v411, %v1314
        %v1339 = vmul.f32 %v412, %v1314
        %v1340 = vmul.f32 %v413, %v1314
        %v1341 = vmul.f32 %v414, %v1314
        %v1342 = vmul.f32 %v415, %v1314
        %v1343 = vmul.f32 %v416, %v1314
        %v1344 = vmul.f32 %v417, %v1314
        %v1345 = vmul.f32 %v418, %v1314
        %v1346 = vmul.f32 %v419, %v1314
        %v1347 = vmul.f32 %v420, %v1314
        %v1348 = vmul.f32 %v421, %v1314
        %v1349 = vmul.f32 %v422, %v1314
        %v1350 = vmul.f32 %v423, %v1314
        %v1351 = vmul.f32 %v424, %v1314
        %v1352 = vmul.f32 %v425, %v1314
        %v1353 = vmul.f32 %v426, %v1314
        %v1354 = vmul.f32 %v427, %v1314
        %v1355 = vmul.f32 %v428, %v1314
        %v1356 = vmul.f32 %v429, %v1314
        %v1357 = vmul.f32 %v430, %v1314
        %v1358 = vmul.f32 %v431, %v1314
        %v1359 = vmul.f32 %v432, %v1314
        %v1360 = vmul.f32 %v433, %v1314
        %v1361 = vmul.f32 %v434, %v1314
        %v1362 = vmul.f32 %v435, %v1314
        %v1411 = vrot.slane %v1315, 2
        %v1412 = vrot.slane %v1316, 2
        %v1413 = vsel %vm854, %v1411, %v1412
        %v1414 = vrot.slane %v1317, 2
        %v1415 = vsel %vm854, %v1412, %v1414
        %v1416 = vrot.slane %v1318, 2
        %v1417 = vrot.slane %v1319, 2
        %v1418 = vsel %vm854, %v1416, %v1417
        %v1419 = vrot.slane %v1320, 2
        %v1420 = vsel %vm854, %v1417, %v1419
        %v1421 = vrot.slane %v1321, 2
        %v1422 = vrot.slane %v1322, 2
        %v1423 = vsel %vm854, %v1421, %v1422
        %v1424 = vrot.slane %v1323, 2
        %v1425 = vsel %vm854, %v1422, %v1424
        %v1426 = vrot.slane %v1324, 2
        %v1427 = vrot.slane %v1325, 2
        %v1428 = vsel %vm854, %v1426, %v1427
        %v1429 = vrot.slane %v1326, 2
        %v1430 = vsel %vm854, %v1427, %v1429
        %v1431 = vrot.slane %v1327, 2
        %v1432 = vrot.slane %v1328, 2
        %v1433 = vsel %vm854, %v1431, %v1432
        %v1434 = vrot.slane %v1329, 2
        %v1435 = vsel %vm854, %v1432, %v1434
        %v1436 = vrot.slane %v1330, 2
        %v1437 = vrot.slane %v1331, 2
        %v1438 = vsel %vm854, %v1436, %v1437
        %v1439 = vrot.slane %v1332, 2
        %v1440 = vsel %vm854, %v1437, %v1439
        %v1441 = vrot.slane %v1333, 2
        %v1442 = vrot.slane %v1334, 2
        %v1443 = vsel %vm854, %v1441, %v1442
        %v1444 = vrot.slane %v1335, 2
        %v1445 = vsel %vm854, %v1442, %v1444
        %v1446 = vrot.slane %v1336, 2
        %v1447 = vrot.slane %v1337, 2
        %v1448 = vsel %vm854, %v1446, %v1447
        %v1449 = vrot.slane %v1338, 2
        %v1450 = vsel %vm854, %v1447, %v1449
        %v1451 = vrot.slane %v1339, 2
        %v1452 = vrot.slane %v1340, 2
        %v1453 = vsel %vm854, %v1451, %v1452
        %v1454 = vrot.slane %v1341, 2
        %v1455 = vsel %vm854, %v1452, %v1454
        %v1456 = vrot.slane %v1342, 2
        %v1457 = vrot.slane %v1343, 2
        %v1458 = vsel %vm854, %v1456, %v1457
        %v1459 = vrot.slane %v1344, 2
        %v1460 = vsel %vm854, %v1457, %v1459
        %v1461 = vrot.slane %v1345, 2
        %v1462 = vrot.slane %v1346, 2
        %v1463 = vsel %vm854, %v1461, %v1462
        %v1464 = vrot.slane %v1347, 2
        %v1465 = vsel %vm854, %v1462, %v1464
        %v1466 = vrot.slane %v1348, 2
        %v1467 = vrot.slane %v1349, 2
        %v1468 = vsel %vm854, %v1466, %v1467
        %v1469 = vrot.slane %v1350, 2
        %v1470 = vsel %vm854, %v1467, %v1469
        %v1471 = vrot.slane %v1351, 2
        %v1472 = vrot.slane %v1352, 2
        %v1473 = vsel %vm854, %v1471, %v1472
        %v1474 = vrot.slane %v1353, 2
        %v1475 = vsel %vm854, %v1472, %v1474
        %v1476 = vrot.slane %v1354, 2
        %v1477 = vrot.slane %v1355, 2
        %v1478 = vsel %vm854, %v1476, %v1477
        %v1479 = vrot.slane %v1356, 2
        %v1480 = vsel %vm854, %v1477, %v1479
        %v1481 = vrot.slane %v1357, 2
        %v1482 = vrot.slane %v1358, 2
        %v1483 = vsel %vm854, %v1481, %v1482
        %v1484 = vrot.slane %v1359, 2
        %v1485 = vsel %vm854, %v1482, %v1484
        %v1486 = vrot.slane %v1360, 2
        %v1487 = vrot.slane %v1361, 2
        %v1488 = vsel %vm854, %v1486, %v1487
        %v1489 = vrot.slane %v1362, 2
        %v1490 = vsel %vm854, %v1487, %v1489
        %v1523 = vadd.f32 %v1279, %v1413
        %v1524 = vadd.f32 %v1280, %v1415
        %v1525 = vadd.f32 %v1281, %v1418
        %v1526 = vadd.f32 %v1282, %v1420
        %v1527 = vadd.f32 %v1283, %v1423
        %v1528 = vadd.f32 %v1284, %v1425
        %v1529 = vadd.f32 %v1285, %v1428
        %v1530 = vadd.f32 %v1286, %v1430
        %v1531 = vadd.f32 %v1287, %v1433
        %v1532 = vadd.f32 %v1288, %v1435
        %v1533 = vadd.f32 %v1289, %v1438
        %v1534 = vadd.f32 %v1290, %v1440
        %v1535 = vadd.f32 %v1291, %v1443
        %v1536 = vadd.f32 %v1292, %v1445
        %v1537 = vadd.f32 %v1293, %v1448
        %v1538 = vadd.f32 %v1294, %v1450
        %v1539 = vadd.f32 %v1295, %v1453
        %v1540 = vadd.f32 %v1296, %v1455
        %v1541 = vadd.f32 %v1297, %v1458
        %v1542 = vadd.f32 %v1298, %v1460
        %v1543 = vadd.f32 %v1299, %v1463
        %v1544 = vadd.f32 %v1300, %v1465
        %v1545 = vadd.f32 %v1301, %v1468
        %v1546 = vadd.f32 %v1302, %v1470
        %v1547 = vadd.f32 %v1303, %v1473
        %v1548 = vadd.f32 %v1304, %v1475
        %v1549 = vadd.f32 %v1305, %v1478
        %v1550 = vadd.f32 %v1306, %v1480
        %v1551 = vadd.f32 %v1307, %v1483
        %v1552 = vadd.f32 %v1308, %v1485
        %v1553 = vadd.f32 %v1309, %v1488
        %v1554 = vadd.f32 %v1310, %v1490
        %v1555 = vlaneseq
        %v1556 = vshrl.u32 %v1555, 7
        %v1557 = vsub.s32 6, %v1556
        %v1558 = vrot.slane %v439, %v1557
        %v1559 = vmul.f32 %v391, %v1558
        %v1560 = vmul.f32 %v392, %v1558
        %v1561 = vmul.f32 %v394, %v1558
        %v1562 = vmul.f32 %v395, %v1558
        %v1563 = vmul.f32 %v397, %v1558
        %v1564 = vmul.f32 %v398, %v1558
        %v1565 = vmul.f32 %v400, %v1558
        %v1566 = vmul.f32 %v401, %v1558
        %v1567 = vmul.f32 %v403, %v1558
        %v1568 = vmul.f32 %v404, %v1558
        %v1569 = vmul.f32 %v406, %v1558
        %v1570 = vmul.f32 %v407, %v1558
        %v1571 = vmul.f32 %v409, %v1558
        %v1572 = vmul.f32 %v410, %v1558
        %v1573 = vmul.f32 %v412, %v1558
        %v1574 = vmul.f32 %v413, %v1558
        %v1575 = vmul.f32 %v415, %v1558
        %v1576 = vmul.f32 %v416, %v1558
        %v1577 = vmul.f32 %v418, %v1558
        %v1578 = vmul.f32 %v419, %v1558
        %v1579 = vmul.f32 %v421, %v1558
        %v1580 = vmul.f32 %v422, %v1558
        %v1581 = vmul.f32 %v424, %v1558
        %v1582 = vmul.f32 %v425, %v1558
        %v1583 = vmul.f32 %v427, %v1558
        %v1584 = vmul.f32 %v428, %v1558
        %v1585 = vmul.f32 %v430, %v1558
        %v1586 = vmul.f32 %v431, %v1558
        %v1587 = vmul.f32 %v433, %v1558
        %v1588 = vmul.f32 %v434, %v1558
        %v1589 = vmul.f32 %v436, %v1558
        %v1590 = vmul.f32 %v437, %v1558
        %v1591 = vadd.f32 %v1523, %v1559
        %v1592 = vadd.f32 %v1524, %v1560
        %v1593 = vadd.f32 %v1525, %v1561
        %v1594 = vadd.f32 %v1526, %v1562
        %v1595 = vadd.f32 %v1527, %v1563
        %v1596 = vadd.f32 %v1528, %v1564
        %v1597 = vadd.f32 %v1529, %v1565
        %v1598 = vadd.f32 %v1530, %v1566
        %v1599 = vadd.f32 %v1531, %v1567
        %v1600 = vadd.f32 %v1532, %v1568
        %v1601 = vadd.f32 %v1533, %v1569
        %v1602 = vadd.f32 %v1534, %v1570
        %v1603 = vadd.f32 %v1535, %v1571
        %v1604 = vadd.f32 %v1536, %v1572
        %v1605 = vadd.f32 %v1537, %v1573
        %v1606 = vadd.f32 %v1538, %v1574
        %v1607 = vadd.f32 %v1539, %v1575
        %v1608 = vadd.f32 %v1540, %v1576
        %v1609 = vadd.f32 %v1541, %v1577
        %v1610 = vadd.f32 %v1542, %v1578
        %v1611 = vadd.f32 %v1543, %v1579
        %v1612 = vadd.f32 %v1544, %v1580
        %v1613 = vadd.f32 %v1545, %v1581
        %v1614 = vadd.f32 %v1546, %v1582
        %v1615 = vadd.f32 %v1547, %v1583
        %v1616 = vadd.f32 %v1548, %v1584
        %v1617 = vadd.f32 %v1549, %v1585
        %v1618 = vadd.f32 %v1550, %v1586
        %v1619 = vadd.f32 %v1551, %v1587
        %v1620 = vadd.f32 %v1552, %v1588
        %v1621 = vadd.f32 %v1553, %v1589
        %v1622 = vadd.f32 %v1554, %v1590
        %v1623 = vlaneseq
        %v1624 = vshrl.u32 %v1623, 7
        %v1625 = vsub.s32 7, %v1624
        %v1626 = vrot.slane %v439, %v1625
        %v1627 = vmul.f32 %v391, %v1626
        %v1628 = vmul.f32 %v392, %v1626
        %v1629 = vmul.f32 %v393, %v1626
        %v1630 = vmul.f32 %v394, %v1626
        %v1631 = vmul.f32 %v395, %v1626
        %v1632 = vmul.f32 %v396, %v1626
        %v1633 = vmul.f32 %v397, %v1626
        %v1634 = vmul.f32 %v398, %v1626
        %v1635 = vmul.f32 %v399, %v1626
        %v1636 = vmul.f32 %v400, %v1626
        %v1637 = vmul.f32 %v401, %v1626
        %v1638 = vmul.f32 %v402, %v1626
        %v1639 = vmul.f32 %v403, %v1626
        %v1640 = vmul.f32 %v404, %v1626
        %v1641 = vmul.f32 %v405, %v1626
        %v1642 = vmul.f32 %v406, %v1626
        %v1643 = vmul.f32 %v407, %v1626
        %v1644 = vmul.f32 %v408, %v1626
        %v1645 = vmul.f32 %v409, %v1626
        %v1646 = vmul.f32 %v410, %v1626
        %v1647 = vmul.f32 %v411, %v1626
        %v1648 = vmul.f32 %v412, %v1626
        %v1649 = vmul.f32 %v413, %v1626
        %v1650 = vmul.f32 %v414, %v1626
        %v1651 = vmul.f32 %v415, %v1626
        %v1652 = vmul.f32 %v416, %v1626
        %v1653 = vmul.f32 %v417, %v1626
        %v1654 = vmul.f32 %v418, %v1626
        %v1655 = vmul.f32 %v419, %v1626
        %v1656 = vmul.f32 %v420, %v1626
        %v1657 = vmul.f32 %v421, %v1626
        %v1658 = vmul.f32 %v422, %v1626
        %v1659 = vmul.f32 %v423, %v1626
        %v1660 = vmul.f32 %v424, %v1626
        %v1661 = vmul.f32 %v425, %v1626
        %v1662 = vmul.f32 %v426, %v1626
        %v1663 = vmul.f32 %v427, %v1626
        %v1664 = vmul.f32 %v428, %v1626
        %v1665 = vmul.f32 %v429, %v1626
        %v1666 = vmul.f32 %v430, %v1626
        %v1667 = vmul.f32 %v431, %v1626
        %v1668 = vmul.f32 %v432, %v1626
        %v1669 = vmul.f32 %v433, %v1626
        %v1670 = vmul.f32 %v434, %v1626
        %v1671 = vmul.f32 %v435, %v1626
        %v1672 = vmul.f32 %v436, %v1626
        %v1673 = vmul.f32 %v437, %v1626
        %v1674 = vmul.f32 %v438, %v1626
        %v1723 = vrot.slane %v1627, 1
        %v1724 = vrot.slane %v1628, 1
        %v1725 = vsel %vm609, %v1723, %v1724
        %v1726 = vrot.slane %v1629, 1
        %v1727 = vsel %vm609, %v1724, %v1726
        %v1728 = vrot.slane %v1630, 1
        %v1729 = vrot.slane %v1631, 1
        %v1730 = vsel %vm609, %v1728, %v1729
        %v1731 = vrot.slane %v1632, 1
        %v1732 = vsel %vm609, %v1729, %v1731
        %v1733 = vrot.slane %v1633, 1
        %v1734 = vrot.slane %v1634, 1
        %v1735 = vsel %vm609, %v1733, %v1734
        %v1736 = vrot.slane %v1635, 1
        %v1737 = vsel %vm609, %v1734, %v1736
        %v1738 = vrot.slane %v1636, 1
        %v1739 = vrot.slane %v1637, 1
        %v1740 = vsel %vm609, %v1738, %v1739
        %v1741 = vrot.slane %v1638, 1
        %v1742 = vsel %vm609, %v1739, %v1741
        %v1743 = vrot.slane %v1639, 1
        %v1744 = vrot.slane %v1640, 1
        %v1745 = vsel %vm609, %v1743, %v1744
        %v1746 = vrot.slane %v1641, 1
        %v1747 = vsel %vm609, %v1744, %v1746
        %v1748 = vrot.slane %v1642, 1
        %v1749 = vrot.slane %v1643, 1
        %v1750 = vsel %vm609, %v1748, %v1749
        %v1751 = vrot.slane %v1644, 1
        %v1752 = vsel %vm609, %v1749, %v1751
        %v1753 = vrot.slane %v1645, 1
        %v1754 = vrot.slane %v1646, 1
        %v1755 = vsel %vm609, %v1753, %v1754
        %v1756 = vrot.slane %v1647, 1
        %v1757 = vsel %vm609, %v1754, %v1756
        %v1758 = vrot.slane %v1648, 1
        %v1759 = vrot.slane %v1649, 1
        %v1760 = vsel %vm609, %v1758, %v1759
        %v1761 = vrot.slane %v1650, 1
        %v1762 = vsel %vm609, %v1759, %v1761
        %v1763 = vrot.slane %v1651, 1
        %v1764 = vrot.slane %v1652, 1
        %v1765 = vsel %vm609, %v1763, %v1764
        %v1766 = vrot.slane %v1653, 1
        %v1767 = vsel %vm609, %v1764, %v1766
        %v1768 = vrot.slane %v1654, 1
        %v1769 = vrot.slane %v1655, 1
        %v1770 = vsel %vm609, %v1768, %v1769
        %v1771 = vrot.slane %v1656, 1
        %v1772 = vsel %vm609, %v1769, %v1771
        %v1773 = vrot.slane %v1657, 1
        %v1774 = vrot.slane %v1658, 1
        %v1775 = vsel %vm609, %v1773, %v1774
        %v1776 = vrot.slane %v1659, 1
        %v1777 = vsel %vm609, %v1774, %v1776
        %v1778 = vrot.slane %v1660, 1
        %v1779 = vrot.slane %v1661, 1
        %v1780 = vsel %vm609, %v1778, %v1779
        %v1781 = vrot.slane %v1662, 1
        %v1782 = vsel %vm609, %v1779, %v1781
        %v1783 = vrot.slane %v1663, 1
        %v1784 = vrot.slane %v1664, 1
        %v1785 = vsel %vm609, %v1783, %v1784
        %v1786 = vrot.slane %v1665, 1
        %v1787 = vsel %vm609, %v1784, %v1786
        %v1788 = vrot.slane %v1666, 1
        %v1789 = vrot.slane %v1667, 1
        %v1790 = vsel %vm609, %v1788, %v1789
        %v1791 = vrot.slane %v1668, 1
        %v1792 = vsel %vm609, %v1789, %v1791
        %v1793 = vrot.slane %v1669, 1
        %v1794 = vrot.slane %v1670, 1
        %v1795 = vsel %vm609, %v1793, %v1794
        %v1796 = vrot.slane %v1671, 1
        %v1797 = vsel %vm609, %v1794, %v1796
        %v1798 = vrot.slane %v1672, 1
        %v1799 = vrot.slane %v1673, 1
        %v1800 = vsel %vm609, %v1798, %v1799
        %v1801 = vrot.slane %v1674, 1
        %v1802 = vsel %vm609, %v1799, %v1801
        %v1835 = vadd.f32 %v1591, %v1725
        %v1836 = vadd.f32 %v1592, %v1727
        %v1837 = vadd.f32 %v1593, %v1730
        %v1838 = vadd.f32 %v1594, %v1732
        %v1839 = vadd.f32 %v1595, %v1735
        %v1840 = vadd.f32 %v1596, %v1737
        %v1841 = vadd.f32 %v1597, %v1740
        %v1842 = vadd.f32 %v1598, %v1742
        %v1843 = vadd.f32 %v1599, %v1745
        %v1844 = vadd.f32 %v1600, %v1747
        %v1845 = vadd.f32 %v1601, %v1750
        %v1846 = vadd.f32 %v1602, %v1752
        %v1847 = vadd.f32 %v1603, %v1755
        %v1848 = vadd.f32 %v1604, %v1757
        %v1849 = vadd.f32 %v1605, %v1760
        %v1850 = vadd.f32 %v1606, %v1762
        %v1851 = vadd.f32 %v1607, %v1765
        %v1852 = vadd.f32 %v1608, %v1767
        %v1853 = vadd.f32 %v1609, %v1770
        %v1854 = vadd.f32 %v1610, %v1772
        %v1855 = vadd.f32 %v1611, %v1775
        %v1856 = vadd.f32 %v1612, %v1777
        %v1857 = vadd.f32 %v1613, %v1780
        %v1858 = vadd.f32 %v1614, %v1782
        %v1859 = vadd.f32 %v1615, %v1785
        %v1860 = vadd.f32 %v1616, %v1787
        %v1861 = vadd.f32 %v1617, %v1790
        %v1862 = vadd.f32 %v1618, %v1792
        %v1863 = vadd.f32 %v1619, %v1795
        %v1864 = vadd.f32 %v1620, %v1797
        %v1865 = vadd.f32 %v1621, %v1800
        %v1866 = vadd.f32 %v1622, %v1802
        %v1867 = vlaneseq
        %v1868 = vshrl.u32 %v1867, 7
        %v1869 = vsub.s32 0, %v1868
        %v1870 = vrot.slane %v440, %v1869
        %v1871 = vmul.f32 %v391, %v1870
        %v1872 = vmul.f32 %v392, %v1870
        %v1873 = vmul.f32 %v393, %v1870
        %v1874 = vmul.f32 %v394, %v1870
        %v1875 = vmul.f32 %v395, %v1870
        %v1876 = vmul.f32 %v396, %v1870
        %v1877 = vmul.f32 %v397, %v1870
        %v1878 = vmul.f32 %v398, %v1870
        %v1879 = vmul.f32 %v399, %v1870
        %v1880 = vmul.f32 %v400, %v1870
        %v1881 = vmul.f32 %v401, %v1870
        %v1882 = vmul.f32 %v402, %v1870
        %v1883 = vmul.f32 %v403, %v1870
        %v1884 = vmul.f32 %v404, %v1870
        %v1885 = vmul.f32 %v405, %v1870
        %v1886 = vmul.f32 %v406, %v1870
        %v1887 = vmul.f32 %v407, %v1870
        %v1888 = vmul.f32 %v408, %v1870
        %v1889 = vmul.f32 %v409, %v1870
        %v1890 = vmul.f32 %v410, %v1870
        %v1891 = vmul.f32 %v411, %v1870
        %v1892 = vmul.f32 %v412, %v1870
        %v1893 = vmul.f32 %v413, %v1870
        %v1894 = vmul.f32 %v414, %v1870
        %v1895 = vmul.f32 %v415, %v1870
        %v1896 = vmul.f32 %v416, %v1870
        %v1897 = vmul.f32 %v417, %v1870
        %v1898 = vmul.f32 %v418, %v1870
        %v1899 = vmul.f32 %v419, %v1870
        %v1900 = vmul.f32 %v420, %v1870
        %v1901 = vmul.f32 %v421, %v1870
        %v1902 = vmul.f32 %v422, %v1870
        %v1903 = vmul.f32 %v423, %v1870
        %v1904 = vmul.f32 %v424, %v1870
        %v1905 = vmul.f32 %v425, %v1870
        %v1906 = vmul.f32 %v426, %v1870
        %v1907 = vmul.f32 %v427, %v1870
        %v1908 = vmul.f32 %v428, %v1870
        %v1909 = vmul.f32 %v429, %v1870
        %v1910 = vmul.f32 %v430, %v1870
        %v1911 = vmul.f32 %v431, %v1870
        %v1912 = vmul.f32 %v432, %v1870
        %v1913 = vmul.f32 %v433, %v1870
        %v1914 = vmul.f32 %v434, %v1870
        %v1915 = vmul.f32 %v435, %v1870
        %v1916 = vmul.f32 %v436, %v1870
        %v1917 = vmul.f32 %v437, %v1870
        %v1918 = vmul.f32 %v438, %v1870
        %v1967 = vrot.slane %v1871, 2
        %v1968 = vrot.slane %v1872, 2
        %v1969 = vsel %vm854, %v1967, %v1968
        %v1970 = vrot.slane %v1873, 2
        %v1971 = vsel %vm854, %v1968, %v1970
        %v1972 = vrot.slane %v1874, 2
        %v1973 = vrot.slane %v1875, 2
        %v1974 = vsel %vm854, %v1972, %v1973
        %v1975 = vrot.slane %v1876, 2
        %v1976 = vsel %vm854, %v1973, %v1975
        %v1977 = vrot.slane %v1877, 2
        %v1978 = vrot.slane %v1878, 2
        %v1979 = vsel %vm854, %v1977, %v1978
        %v1980 = vrot.slane %v1879, 2
        %v1981 = vsel %vm854, %v1978, %v1980
        %v1982 = vrot.slane %v1880, 2
        %v1983 = vrot.slane %v1881, 2
        %v1984 = vsel %vm854, %v1982, %v1983
        %v1985 = vrot.slane %v1882, 2
        %v1986 = vsel %vm854, %v1983, %v1985
        %v1987 = vrot.slane %v1883, 2
        %v1988 = vrot.slane %v1884, 2
        %v1989 = vsel %vm854, %v1987, %v1988
        %v1990 = vrot.slane %v1885, 2
        %v1991 = vsel %vm854, %v1988, %v1990
        %v1992 = vrot.slane %v1886, 2
        %v1993 = vrot.slane %v1887, 2
        %v1994 = vsel %vm854, %v1992, %v1993
        %v1995 = vrot.slane %v1888, 2
        %v1996 = vsel %vm854, %v1993, %v1995
        %v1997 = vrot.slane %v1889, 2
        %v1998 = vrot.slane %v1890, 2
        %v1999 = vsel %vm854, %v1997, %v1998
        %v2000 = vrot.slane %v1891, 2
        %v2001 = vsel %vm854, %v1998, %v2000
        %v2002 = vrot.slane %v1892, 2
        %v2003 = vrot.slane %v1893, 2
        %v2004 = vsel %vm854, %v2002, %v2003
        %v2005 = vrot.slane %v1894, 2
        %v2006 = vsel %vm854, %v2003, %v2005
        %v2007 = vrot.slane %v1895, 2
        %v2008 = vrot.slane %v1896, 2
        %v2009 = vsel %vm854, %v2007, %v2008
        %v2010 = vrot.slane %v1897, 2
        %v2011 = vsel %vm854, %v2008, %v2010
        %v2012 = vrot.slane %v1898, 2
        %v2013 = vrot.slane %v1899, 2
        %v2014 = vsel %vm854, %v2012, %v2013
        %v2015 = vrot.slane %v1900, 2
        %v2016 = vsel %vm854, %v2013, %v2015
        %v2017 = vrot.slane %v1901, 2
        %v2018 = vrot.slane %v1902, 2
        %v2019 = vsel %vm854, %v2017, %v2018
        %v2020 = vrot.slane %v1903, 2
        %v2021 = vsel %vm854, %v2018, %v2020
        %v2022 = vrot.slane %v1904, 2
        %v2023 = vrot.slane %v1905, 2
        %v2024 = vsel %vm854, %v2022, %v2023
        %v2025 = vrot.slane %v1906, 2
        %v2026 = vsel %vm854, %v2023, %v2025
        %v2027 = vrot.slane %v1907, 2
        %v2028 = vrot.slane %v1908, 2
        %v2029 = vsel %vm854, %v2027, %v2028
        %v2030 = vrot.slane %v1909, 2
        %v2031 = vsel %vm854, %v2028, %v2030
        %v2032 = vrot.slane %v1910, 2
        %v2033 = vrot.slane %v1911, 2
        %v2034 = vsel %vm854, %v2032, %v2033
        %v2035 = vrot.slane %v1912, 2
        %v2036 = vsel %vm854, %v2033, %v2035
        %v2037 = vrot.slane %v1913, 2
        %v2038 = vrot.slane %v1914, 2
        %v2039 = vsel %vm854, %v2037, %v2038
        %v2040 = vrot.slane %v1915, 2
        %v2041 = vsel %vm854, %v2038, %v2040
        %v2042 = vrot.slane %v1916, 2
        %v2043 = vrot.slane %v1917, 2
        %v2044 = vsel %vm854, %v2042, %v2043
        %v2045 = vrot.slane %v1918, 2
        %v2046 = vsel %vm854, %v2043, %v2045
        %v2079 = vadd.f32 %v1835, %v1969
        %v2080 = vadd.f32 %v1836, %v1971
        %v2081 = vadd.f32 %v1837, %v1974
        %v2082 = vadd.f32 %v1838, %v1976
        %v2083 = vadd.f32 %v1839, %v1979
        %v2084 = vadd.f32 %v1840, %v1981
        %v2085 = vadd.f32 %v1841, %v1984
        %v2086 = vadd.f32 %v1842, %v1986
        %v2087 = vadd.f32 %v1843, %v1989
        %v2088 = vadd.f32 %v1844, %v1991
        %v2089 = vadd.f32 %v1845, %v1994
        %v2090 = vadd.f32 %v1846, %v1996
        %v2091 = vadd.f32 %v1847, %v1999
        %v2092 = vadd.f32 %v1848, %v2001
        %v2093 = vadd.f32 %v1849, %v2004
        %v2094 = vadd.f32 %v1850, %v2006
        %v2095 = vadd.f32 %v1851, %v2009
        %v2096 = vadd.f32 %v1852, %v2011
        %v2097 = vadd.f32 %v1853, %v2014
        %v2098 = vadd.f32 %v1854, %v2016
        %v2099 = vadd.f32 %v1855, %v2019
        %v2100 = vadd.f32 %v1856, %v2021
        %v2101 = vadd.f32 %v1857, %v2024
        %v2102 = vadd.f32 %v1858, %v2026
        %v2103 = vadd.f32 %v1859, %v2029
        %v2104 = vadd.f32 %v1860, %v2031
        %v2105 = vadd.f32 %v1861, %v2034
        %v2106 = vadd.f32 %v1862, %v2036
        %v2107 = vadd.f32 %v1863, %v2039
        %v2108 = vadd.f32 %v1864, %v2041
        %v2109 = vadd.f32 %v1865, %v2044
        %v2110 = vadd.f32 %v1866, %v2046
        %v2111 = vld [vmem:[%s2] sm:$0x1]
        %v2113 = vlaneseq
        %v2114 = vshrl.u32 %v2113, 7
        %v2115 = vsub.s32 0, %v2114
        %v2116 = vrot.slane %v2111, %v2115
        %v2118 = vadd.f32 %v2079, %v2116
        %v2119 = vadd.f32 %v2080, %v2116
        %v2120 = vadd.f32 %v2081, %v2116
        %v2121 = vadd.f32 %v2082, %v2116
        %v2122 = vadd.f32 %v2083, %v2116
        %v2123 = vadd.f32 %v2084, %v2116
        %v2124 = vadd.f32 %v2085, %v2116
        %v2125 = vadd.f32 %v2086, %v2116
        %v2126 = vadd.f32 %v2087, %v2116
        %v2127 = vadd.f32 %v2088, %v2116
        %v2128 = vadd.f32 %v2089, %v2116
        %v2129 = vadd.f32 %v2090, %v2116
        %v2130 = vadd.f32 %v2091, %v2116
        %v2131 = vadd.f32 %v2092, %v2116
        %v2132 = vadd.f32 %v2093, %v2116
        %v2133 = vadd.f32 %v2094, %v2116
        %v2134 = vadd.f32 %v2095, %v2116
        %v2135 = vadd.f32 %v2096, %v2116
        %v2136 = vadd.f32 %v2097, %v2116
        %v2137 = vadd.f32 %v2098, %v2116
        %v2138 = vadd.f32 %v2099, %v2116
        %v2139 = vadd.f32 %v2100, %v2116
        %v2140 = vadd.f32 %v2101, %v2116
        %v2141 = vadd.f32 %v2102, %v2116
        %v2142 = vadd.f32 %v2103, %v2116
        %v2143 = vadd.f32 %v2104, %v2116
        %v2144 = vadd.f32 %v2105, %v2116
        %v2145 = vadd.f32 %v2106, %v2116
        %v2146 = vadd.f32 %v2107, %v2116
        %v2147 = vadd.f32 %v2108, %v2116
        %v2148 = vadd.f32 %v2109, %v2116
        %v2149 = vadd.f32 %v2110, %v2116
        %v2150 = vld [vmem:[%s3] sm:$0x1]
        %v2151 = vld [vmem:[%s4] sm:$0x1]
        %vm2152 = vcmask 261120
        %v2153 = vsel %vm2152, %v2118, 0.0
        %2154 = vadd.xlane.f32.xlu0 %v2153
        %v2155 = vpop.xlane.xlu0 %2154
        %v2156 = vsel %vm2152, %v2119, 0.0
        %2157 = vadd.xlane.f32.xlu0 %v2156
        %v2158 = vpop.xlane.xlu0 %2157
        %v2159 = vsel %vm2152, %v2120, 0.0
        %2160 = vadd.xlane.f32.xlu0 %v2159
        %v2161 = vpop.xlane.xlu0 %2160
        %v2162 = vsel %vm2152, %v2121, 0.0
        %2163 = vadd.xlane.f32.xlu0 %v2162
        %v2164 = vpop.xlane.xlu0 %2163
        %v2165 = vsel %vm2152, %v2122, 0.0
        %2166 = vadd.xlane.f32.xlu0 %v2165
        %v2167 = vpop.xlane.xlu0 %2166
        %v2168 = vsel %vm2152, %v2123, 0.0
        %2169 = vadd.xlane.f32.xlu0 %v2168
        %v2170 = vpop.xlane.xlu0 %2169
        %v2171 = vsel %vm2152, %v2124, 0.0
        %2172 = vadd.xlane.f32.xlu0 %v2171
        %v2173 = vpop.xlane.xlu0 %2172
        %v2174 = vsel %vm2152, %v2125, 0.0
        %2175 = vadd.xlane.f32.xlu0 %v2174
        %v2176 = vpop.xlane.xlu0 %2175
        %v2177 = vsel %vm2152, %v2126, 0.0
        %2178 = vadd.xlane.f32.xlu0 %v2177
        %v2179 = vpop.xlane.xlu0 %2178
        %v2180 = vsel %vm2152, %v2127, 0.0
        %2181 = vadd.xlane.f32.xlu0 %v2180
        %v2182 = vpop.xlane.xlu0 %2181
        %v2183 = vsel %vm2152, %v2128, 0.0
        %2184 = vadd.xlane.f32.xlu0 %v2183
        %v2185 = vpop.xlane.xlu0 %2184
        %v2186 = vsel %vm2152, %v2129, 0.0
        %2187 = vadd.xlane.f32.xlu0 %v2186
        %v2188 = vpop.xlane.xlu0 %2187
        %v2189 = vsel %vm2152, %v2130, 0.0
        %2190 = vadd.xlane.f32.xlu0 %v2189
        %v2191 = vpop.xlane.xlu0 %2190
        %v2192 = vsel %vm2152, %v2131, 0.0
        %2193 = vadd.xlane.f32.xlu0 %v2192
        %v2194 = vpop.xlane.xlu0 %2193
        %v2195 = vsel %vm2152, %v2132, 0.0
        %2196 = vadd.xlane.f32.xlu0 %v2195
        %v2197 = vpop.xlane.xlu0 %2196
        %v2198 = vsel %vm2152, %v2133, 0.0
        %2199 = vadd.xlane.f32.xlu0 %v2198
        %v2200 = vpop.xlane.xlu0 %2199
        %v2201 = vsel %vm2152, %v2134, 0.0
        %2202 = vadd.xlane.f32.xlu0 %v2201
        %v2203 = vpop.xlane.xlu0 %2202
        %v2204 = vsel %vm2152, %v2135, 0.0
        %2205 = vadd.xlane.f32.xlu0 %v2204
        %v2206 = vpop.xlane.xlu0 %2205
        %v2207 = vsel %vm2152, %v2136, 0.0
        %2208 = vadd.xlane.f32.xlu0 %v2207
        %v2209 = vpop.xlane.xlu0 %2208
        %v2210 = vsel %vm2152, %v2137, 0.0
        %2211 = vadd.xlane.f32.xlu0 %v2210
        %v2212 = vpop.xlane.xlu0 %2211
        %v2213 = vsel %vm2152, %v2138, 0.0
        %2214 = vadd.xlane.f32.xlu0 %v2213
        %v2215 = vpop.xlane.xlu0 %2214
        %v2216 = vsel %vm2152, %v2139, 0.0
        %2217 = vadd.xlane.f32.xlu0 %v2216
        %v2218 = vpop.xlane.xlu0 %2217
        %v2219 = vsel %vm2152, %v2140, 0.0
        %2220 = vadd.xlane.f32.xlu0 %v2219
        %v2221 = vpop.xlane.xlu0 %2220
        %v2222 = vsel %vm2152, %v2141, 0.0
        %2223 = vadd.xlane.f32.xlu0 %v2222
        %v2224 = vpop.xlane.xlu0 %2223
        %v2225 = vsel %vm2152, %v2142, 0.0
        %2226 = vadd.xlane.f32.xlu0 %v2225
        %v2227 = vpop.xlane.xlu0 %2226
        %v2228 = vsel %vm2152, %v2143, 0.0
        %2229 = vadd.xlane.f32.xlu0 %v2228
        %v2230 = vpop.xlane.xlu0 %2229
        %v2231 = vsel %vm2152, %v2144, 0.0
        %2232 = vadd.xlane.f32.xlu0 %v2231
        %v2233 = vpop.xlane.xlu0 %2232
        %v2234 = vsel %vm2152, %v2145, 0.0
        %2235 = vadd.xlane.f32.xlu0 %v2234
        %v2236 = vpop.xlane.xlu0 %2235
        %v2237 = vsel %vm2152, %v2146, 0.0
        %2238 = vadd.xlane.f32.xlu0 %v2237
        %v2239 = vpop.xlane.xlu0 %2238
        %v2240 = vsel %vm2152, %v2147, 0.0
        %2241 = vadd.xlane.f32.xlu0 %v2240
        %v2242 = vpop.xlane.xlu0 %2241
        %v2243 = vsel %vm2152, %v2148, 0.0
        %2244 = vadd.xlane.f32.xlu0 %v2243
        %v2245 = vpop.xlane.xlu0 %2244
        %v2246 = vsel %vm2152, %v2149, 0.0
        %2247 = vadd.xlane.f32.xlu0 %v2246
        %v2248 = vpop.xlane.xlu0 %2247
        %v2249 = vrcp.pop 32.0
        %v2250 = vmul.f32 %v2155, %v2249
        %v2251 = vmul.f32 %v2158, %v2249
        %v2252 = vmul.f32 %v2161, %v2249
        %v2253 = vmul.f32 %v2164, %v2249
        %v2254 = vmul.f32 %v2167, %v2249
        %v2255 = vmul.f32 %v2170, %v2249
        %v2256 = vmul.f32 %v2173, %v2249
        %v2257 = vmul.f32 %v2176, %v2249
        %v2258 = vmul.f32 %v2179, %v2249
        %v2259 = vmul.f32 %v2182, %v2249
        %v2260 = vmul.f32 %v2185, %v2249
        %v2261 = vmul.f32 %v2188, %v2249
        %v2262 = vmul.f32 %v2191, %v2249
        %v2263 = vmul.f32 %v2194, %v2249
        %v2264 = vmul.f32 %v2197, %v2249
        %v2265 = vmul.f32 %v2200, %v2249
        %v2266 = vmul.f32 %v2203, %v2249
        %v2267 = vmul.f32 %v2206, %v2249
        %v2268 = vmul.f32 %v2209, %v2249
        %v2269 = vmul.f32 %v2212, %v2249
        %v2270 = vmul.f32 %v2215, %v2249
        %v2271 = vmul.f32 %v2218, %v2249
        %v2272 = vmul.f32 %v2221, %v2249
        %v2273 = vmul.f32 %v2224, %v2249
        %v2274 = vmul.f32 %v2227, %v2249
        %v2275 = vmul.f32 %v2230, %v2249
        %v2276 = vmul.f32 %v2233, %v2249
        %v2277 = vmul.f32 %v2236, %v2249
        %v2278 = vmul.f32 %v2239, %v2249
        %v2279 = vmul.f32 %v2242, %v2249
        %v2280 = vmul.f32 %v2245, %v2249
        %v2281 = vmul.f32 %v2248, %v2249
        %v2282 = vsub.f32 %v2118, %v2250
        %v2283 = vsub.f32 %v2119, %v2251
        %v2284 = vsub.f32 %v2120, %v2252
        %v2285 = vsub.f32 %v2121, %v2253
        %v2286 = vsub.f32 %v2122, %v2254
        %v2287 = vsub.f32 %v2123, %v2255
        %v2288 = vsub.f32 %v2124, %v2256
        %v2289 = vsub.f32 %v2125, %v2257
        %v2290 = vsub.f32 %v2126, %v2258
        %v2291 = vsub.f32 %v2127, %v2259
        %v2292 = vsub.f32 %v2128, %v2260
        %v2293 = vsub.f32 %v2129, %v2261
        %v2294 = vsub.f32 %v2130, %v2262
        %v2295 = vsub.f32 %v2131, %v2263
        %v2296 = vsub.f32 %v2132, %v2264
        %v2297 = vsub.f32 %v2133, %v2265
        %v2298 = vsub.f32 %v2134, %v2266
        %v2299 = vsub.f32 %v2135, %v2267
        %v2300 = vsub.f32 %v2136, %v2268
        %v2301 = vsub.f32 %v2137, %v2269
        %v2302 = vsub.f32 %v2138, %v2270
        %v2303 = vsub.f32 %v2139, %v2271
        %v2304 = vsub.f32 %v2140, %v2272
        %v2305 = vsub.f32 %v2141, %v2273
        %v2306 = vsub.f32 %v2142, %v2274
        %v2307 = vsub.f32 %v2143, %v2275
        %v2308 = vsub.f32 %v2144, %v2276
        %v2309 = vsub.f32 %v2145, %v2277
        %v2310 = vsub.f32 %v2146, %v2278
        %v2311 = vsub.f32 %v2147, %v2279
        %v2312 = vsub.f32 %v2148, %v2280
        %v2313 = vsub.f32 %v2149, %v2281
        %v2314 = vmul.f32 %v2282, %v2282
        %v2315 = vmul.f32 %v2283, %v2283
        %v2316 = vmul.f32 %v2284, %v2284
        %v2317 = vmul.f32 %v2285, %v2285
        %v2318 = vmul.f32 %v2286, %v2286
        %v2319 = vmul.f32 %v2287, %v2287
        %v2320 = vmul.f32 %v2288, %v2288
        %v2321 = vmul.f32 %v2289, %v2289
        %v2322 = vmul.f32 %v2290, %v2290
        %v2323 = vmul.f32 %v2291, %v2291
        %v2324 = vmul.f32 %v2292, %v2292
        %v2325 = vmul.f32 %v2293, %v2293
        %v2326 = vmul.f32 %v2294, %v2294
        %v2327 = vmul.f32 %v2295, %v2295
        %v2328 = vmul.f32 %v2296, %v2296
        %v2329 = vmul.f32 %v2297, %v2297
        %v2330 = vmul.f32 %v2298, %v2298
        %v2331 = vmul.f32 %v2299, %v2299
        %v2332 = vmul.f32 %v2300, %v2300
        %v2333 = vmul.f32 %v2301, %v2301
        %v2334 = vmul.f32 %v2302, %v2302
        %v2335 = vmul.f32 %v2303, %v2303
        %v2336 = vmul.f32 %v2304, %v2304
        %v2337 = vmul.f32 %v2305, %v2305
        %v2338 = vmul.f32 %v2306, %v2306
        %v2339 = vmul.f32 %v2307, %v2307
        %v2340 = vmul.f32 %v2308, %v2308
        %v2341 = vmul.f32 %v2309, %v2309
        %v2342 = vmul.f32 %v2310, %v2310
        %v2343 = vmul.f32 %v2311, %v2311
        %v2344 = vmul.f32 %v2312, %v2312
        %v2345 = vmul.f32 %v2313, %v2313
        %v2346 = vsel %vm2152, %v2314, 0.0
        %2347 = vadd.xlane.f32.xlu0 %v2346
        %v2348 = vpop.xlane.xlu0 %2347
        %v2349 = vsel %vm2152, %v2315, 0.0
        %2350 = vadd.xlane.f32.xlu0 %v2349
        %v2351 = vpop.xlane.xlu0 %2350
        %v2352 = vsel %vm2152, %v2316, 0.0
        %2353 = vadd.xlane.f32.xlu0 %v2352
        %v2354 = vpop.xlane.xlu0 %2353
        %v2355 = vsel %vm2152, %v2317, 0.0
        %2356 = vadd.xlane.f32.xlu0 %v2355
        %v2357 = vpop.xlane.xlu0 %2356
        %v2358 = vsel %vm2152, %v2318, 0.0
        %2359 = vadd.xlane.f32.xlu0 %v2358
        %v2360 = vpop.xlane.xlu0 %2359
        %v2361 = vsel %vm2152, %v2319, 0.0
        %2362 = vadd.xlane.f32.xlu0 %v2361
        %v2363 = vpop.xlane.xlu0 %2362
        %v2364 = vsel %vm2152, %v2320, 0.0
        %2365 = vadd.xlane.f32.xlu0 %v2364
        %v2366 = vpop.xlane.xlu0 %2365
        %v2367 = vsel %vm2152, %v2321, 0.0
        %2368 = vadd.xlane.f32.xlu0 %v2367
        %v2369 = vpop.xlane.xlu0 %2368
        %v2370 = vsel %vm2152, %v2322, 0.0
        %2371 = vadd.xlane.f32.xlu0 %v2370
        %v2372 = vpop.xlane.xlu0 %2371
        %v2373 = vsel %vm2152, %v2323, 0.0
        %2374 = vadd.xlane.f32.xlu0 %v2373
        %v2375 = vpop.xlane.xlu0 %2374
        %v2376 = vsel %vm2152, %v2324, 0.0
        %2377 = vadd.xlane.f32.xlu0 %v2376
        %v2378 = vpop.xlane.xlu0 %2377
        %v2379 = vsel %vm2152, %v2325, 0.0
        %2380 = vadd.xlane.f32.xlu0 %v2379
        %v2381 = vpop.xlane.xlu0 %2380
        %v2382 = vsel %vm2152, %v2326, 0.0
        %2383 = vadd.xlane.f32.xlu0 %v2382
        %v2384 = vpop.xlane.xlu0 %2383
        %v2385 = vsel %vm2152, %v2327, 0.0
        %2386 = vadd.xlane.f32.xlu0 %v2385
        %v2387 = vpop.xlane.xlu0 %2386
        %v2388 = vsel %vm2152, %v2328, 0.0
        %2389 = vadd.xlane.f32.xlu0 %v2388
        %v2390 = vpop.xlane.xlu0 %2389
        %v2391 = vsel %vm2152, %v2329, 0.0
        %2392 = vadd.xlane.f32.xlu0 %v2391
        %v2393 = vpop.xlane.xlu0 %2392
        %v2394 = vsel %vm2152, %v2330, 0.0
        %2395 = vadd.xlane.f32.xlu0 %v2394
        %v2396 = vpop.xlane.xlu0 %2395
        %v2397 = vsel %vm2152, %v2331, 0.0
        %2398 = vadd.xlane.f32.xlu0 %v2397
        %v2399 = vpop.xlane.xlu0 %2398
        %v2400 = vsel %vm2152, %v2332, 0.0
        %2401 = vadd.xlane.f32.xlu0 %v2400
        %v2402 = vpop.xlane.xlu0 %2401
        %v2403 = vsel %vm2152, %v2333, 0.0
        %2404 = vadd.xlane.f32.xlu0 %v2403
        %v2405 = vpop.xlane.xlu0 %2404
        %v2406 = vsel %vm2152, %v2334, 0.0
        %2407 = vadd.xlane.f32.xlu0 %v2406
        %v2408 = vpop.xlane.xlu0 %2407
        %v2409 = vsel %vm2152, %v2335, 0.0
        %2410 = vadd.xlane.f32.xlu0 %v2409
        %v2411 = vpop.xlane.xlu0 %2410
        %v2412 = vsel %vm2152, %v2336, 0.0
        %2413 = vadd.xlane.f32.xlu0 %v2412
        %v2414 = vpop.xlane.xlu0 %2413
        %v2415 = vsel %vm2152, %v2337, 0.0
        %2416 = vadd.xlane.f32.xlu0 %v2415
        %v2417 = vpop.xlane.xlu0 %2416
        %v2418 = vsel %vm2152, %v2338, 0.0
        %2419 = vadd.xlane.f32.xlu0 %v2418
        %v2420 = vpop.xlane.xlu0 %2419
        %v2421 = vsel %vm2152, %v2339, 0.0
        %2422 = vadd.xlane.f32.xlu0 %v2421
        %v2423 = vpop.xlane.xlu0 %2422
        %v2424 = vsel %vm2152, %v2340, 0.0
        %2425 = vadd.xlane.f32.xlu0 %v2424
        %v2426 = vpop.xlane.xlu0 %2425
        %v2427 = vsel %vm2152, %v2341, 0.0
        %2428 = vadd.xlane.f32.xlu0 %v2427
        %v2429 = vpop.xlane.xlu0 %2428
        %v2430 = vsel %vm2152, %v2342, 0.0
        %2431 = vadd.xlane.f32.xlu0 %v2430
        %v2432 = vpop.xlane.xlu0 %2431
        %v2433 = vsel %vm2152, %v2343, 0.0
        %2434 = vadd.xlane.f32.xlu0 %v2433
        %v2435 = vpop.xlane.xlu0 %2434
        %v2436 = vsel %vm2152, %v2344, 0.0
        %2437 = vadd.xlane.f32.xlu0 %v2436
        %v2438 = vpop.xlane.xlu0 %2437
        %v2439 = vsel %vm2152, %v2345, 0.0
        %2440 = vadd.xlane.f32.xlu0 %v2439
        %v2441 = vpop.xlane.xlu0 %2440
        %v2442 = vmul.f32 %v2348, %v2249
        %v2443 = vmul.f32 %v2351, %v2249
        %v2444 = vmul.f32 %v2354, %v2249
        %v2445 = vmul.f32 %v2357, %v2249
        %v2446 = vmul.f32 %v2360, %v2249
        %v2447 = vmul.f32 %v2363, %v2249
        %v2448 = vmul.f32 %v2366, %v2249
        %v2449 = vmul.f32 %v2369, %v2249
        %v2450 = vmul.f32 %v2372, %v2249
        %v2451 = vmul.f32 %v2375, %v2249
        %v2452 = vmul.f32 %v2378, %v2249
        %v2453 = vmul.f32 %v2381, %v2249
        %v2454 = vmul.f32 %v2384, %v2249
        %v2455 = vmul.f32 %v2387, %v2249
        %v2456 = vmul.f32 %v2390, %v2249
        %v2457 = vmul.f32 %v2393, %v2249
        %v2458 = vmul.f32 %v2396, %v2249
        %v2459 = vmul.f32 %v2399, %v2249
        %v2460 = vmul.f32 %v2402, %v2249
        %v2461 = vmul.f32 %v2405, %v2249
        %v2462 = vmul.f32 %v2408, %v2249
        %v2463 = vmul.f32 %v2411, %v2249
        %v2464 = vmul.f32 %v2414, %v2249
        %v2465 = vmul.f32 %v2417, %v2249
        %v2466 = vmul.f32 %v2420, %v2249
        %v2467 = vmul.f32 %v2423, %v2249
        %v2468 = vmul.f32 %v2426, %v2249
        %v2469 = vmul.f32 %v2429, %v2249
        %v2470 = vmul.f32 %v2432, %v2249
        %v2471 = vmul.f32 %v2435, %v2249
        %v2472 = vmul.f32 %v2438, %v2249
        %v2473 = vmul.f32 %v2441, %v2249
        %v2474 = vadd.f32 %v2442, 1e-06
        %v2475 = vadd.f32 %v2443, 1e-06
        %v2476 = vadd.f32 %v2444, 1e-06
        %v2477 = vadd.f32 %v2445, 1e-06
        %v2478 = vadd.f32 %v2446, 1e-06
        %v2479 = vadd.f32 %v2447, 1e-06
        %v2480 = vadd.f32 %v2448, 1e-06
        %v2481 = vadd.f32 %v2449, 1e-06
        %v2482 = vadd.f32 %v2450, 1e-06
        %v2483 = vadd.f32 %v2451, 1e-06
        %v2484 = vadd.f32 %v2452, 1e-06
        %v2485 = vadd.f32 %v2453, 1e-06
        %v2486 = vadd.f32 %v2454, 1e-06
        %v2487 = vadd.f32 %v2455, 1e-06
        %v2488 = vadd.f32 %v2456, 1e-06
        %v2489 = vadd.f32 %v2457, 1e-06
        %v2490 = vadd.f32 %v2458, 1e-06
        %v2491 = vadd.f32 %v2459, 1e-06
        %v2492 = vadd.f32 %v2460, 1e-06
        %v2493 = vadd.f32 %v2461, 1e-06
        %v2494 = vadd.f32 %v2462, 1e-06
        %v2495 = vadd.f32 %v2463, 1e-06
        %v2496 = vadd.f32 %v2464, 1e-06
        %v2497 = vadd.f32 %v2465, 1e-06
        %v2498 = vadd.f32 %v2466, 1e-06
        %v2499 = vadd.f32 %v2467, 1e-06
        %v2500 = vadd.f32 %v2468, 1e-06
        %v2501 = vadd.f32 %v2469, 1e-06
        %v2502 = vadd.f32 %v2470, 1e-06
        %v2503 = vadd.f32 %v2471, 1e-06
        %v2504 = vadd.f32 %v2472, 1e-06
        %v2505 = vadd.f32 %v2473, 1e-06
        %v2506 = vrsqrt.pop %v2474
        %v2507 = vrsqrt.pop %v2475
        %v2508 = vrsqrt.pop %v2476
        %v2509 = vrsqrt.pop %v2477
        %v2510 = vrsqrt.pop %v2478
        %v2511 = vrsqrt.pop %v2479
        %v2512 = vrsqrt.pop %v2480
        %v2513 = vrsqrt.pop %v2481
        %v2514 = vrsqrt.pop %v2482
        %v2515 = vrsqrt.pop %v2483
        %v2516 = vrsqrt.pop %v2484
        %v2517 = vrsqrt.pop %v2485
        %v2518 = vrsqrt.pop %v2486
        %v2519 = vrsqrt.pop %v2487
        %v2520 = vrsqrt.pop %v2488
        %v2521 = vrsqrt.pop %v2489
        %v2522 = vrsqrt.pop %v2490
        %v2523 = vrsqrt.pop %v2491
        %v2524 = vrsqrt.pop %v2492
        %v2525 = vrsqrt.pop %v2493
        %v2526 = vrsqrt.pop %v2494
        %v2527 = vrsqrt.pop %v2495
        %v2528 = vrsqrt.pop %v2496
        %v2529 = vrsqrt.pop %v2497
        %v2530 = vrsqrt.pop %v2498
        %v2531 = vrsqrt.pop %v2499
        %v2532 = vrsqrt.pop %v2500
        %v2533 = vrsqrt.pop %v2501
        %v2534 = vrsqrt.pop %v2502
        %v2535 = vrsqrt.pop %v2503
        %v2536 = vrsqrt.pop %v2504
        %v2537 = vrsqrt.pop %v2505
        %v2538 = vmul.f32 %v2282, %v2506
        %v2539 = vmul.f32 %v2283, %v2507
        %v2540 = vmul.f32 %v2284, %v2508
        %v2541 = vmul.f32 %v2285, %v2509
        %v2542 = vmul.f32 %v2286, %v2510
        %v2543 = vmul.f32 %v2287, %v2511
        %v2544 = vmul.f32 %v2288, %v2512
        %v2545 = vmul.f32 %v2289, %v2513
        %v2546 = vmul.f32 %v2290, %v2514
        %v2547 = vmul.f32 %v2291, %v2515
        %v2548 = vmul.f32 %v2292, %v2516
        %v2549 = vmul.f32 %v2293, %v2517
        %v2550 = vmul.f32 %v2294, %v2518
        %v2551 = vmul.f32 %v2295, %v2519
        %v2552 = vmul.f32 %v2296, %v2520
        %v2553 = vmul.f32 %v2297, %v2521
        %v2554 = vmul.f32 %v2298, %v2522
        %v2555 = vmul.f32 %v2299, %v2523
        %v2556 = vmul.f32 %v2300, %v2524
        %v2557 = vmul.f32 %v2301, %v2525
        %v2558 = vmul.f32 %v2302, %v2526
        %v2559 = vmul.f32 %v2303, %v2527
        %v2560 = vmul.f32 %v2304, %v2528
        %v2561 = vmul.f32 %v2305, %v2529
        %v2562 = vmul.f32 %v2306, %v2530
        %v2563 = vmul.f32 %v2307, %v2531
        %v2564 = vmul.f32 %v2308, %v2532
        %v2565 = vmul.f32 %v2309, %v2533
        %v2566 = vmul.f32 %v2310, %v2534
        %v2567 = vmul.f32 %v2311, %v2535
        %v2568 = vmul.f32 %v2312, %v2536
        %v2569 = vmul.f32 %v2313, %v2537
        %v2571 = vlaneseq
        %v2572 = vshrl.u32 %v2571, 7
        %v2573 = vsub.s32 0, %v2572
        %v2574 = vrot.slane %v2150, %v2573
        %v2576 = vmul.f32 %v2538, %v2574
        %v2577 = vmul.f32 %v2539, %v2574
        %v2578 = vmul.f32 %v2540, %v2574
        %v2579 = vmul.f32 %v2541, %v2574
        %v2580 = vmul.f32 %v2542, %v2574
        %v2581 = vmul.f32 %v2543, %v2574
        %v2582 = vmul.f32 %v2544, %v2574
        %v2583 = vmul.f32 %v2545, %v2574
        %v2584 = vmul.f32 %v2546, %v2574
        %v2585 = vmul.f32 %v2547, %v2574
        %v2586 = vmul.f32 %v2548, %v2574
        %v2587 = vmul.f32 %v2549, %v2574
        %v2588 = vmul.f32 %v2550, %v2574
        %v2589 = vmul.f32 %v2551, %v2574
        %v2590 = vmul.f32 %v2552, %v2574
        %v2591 = vmul.f32 %v2553, %v2574
        %v2592 = vmul.f32 %v2554, %v2574
        %v2593 = vmul.f32 %v2555, %v2574
        %v2594 = vmul.f32 %v2556, %v2574
        %v2595 = vmul.f32 %v2557, %v2574
        %v2596 = vmul.f32 %v2558, %v2574
        %v2597 = vmul.f32 %v2559, %v2574
        %v2598 = vmul.f32 %v2560, %v2574
        %v2599 = vmul.f32 %v2561, %v2574
        %v2600 = vmul.f32 %v2562, %v2574
        %v2601 = vmul.f32 %v2563, %v2574
        %v2602 = vmul.f32 %v2564, %v2574
        %v2603 = vmul.f32 %v2565, %v2574
        %v2604 = vmul.f32 %v2566, %v2574
        %v2605 = vmul.f32 %v2567, %v2574
        %v2606 = vmul.f32 %v2568, %v2574
        %v2607 = vmul.f32 %v2569, %v2574
        %v2609 = vlaneseq
        %v2610 = vshrl.u32 %v2609, 7
        %v2611 = vsub.s32 0, %v2610
        %v2612 = vrot.slane %v2151, %v2611
        %v2614 = vadd.f32 %v2576, %v2612
        %v2615 = vadd.f32 %v2577, %v2612
        %v2616 = vadd.f32 %v2578, %v2612
        %v2617 = vadd.f32 %v2579, %v2612
        %v2618 = vadd.f32 %v2580, %v2612
        %v2619 = vadd.f32 %v2581, %v2612
        %v2620 = vadd.f32 %v2582, %v2612
        %v2621 = vadd.f32 %v2583, %v2612
        %v2622 = vadd.f32 %v2584, %v2612
        %v2623 = vadd.f32 %v2585, %v2612
        %v2624 = vadd.f32 %v2586, %v2612
        %v2625 = vadd.f32 %v2587, %v2612
        %v2626 = vadd.f32 %v2588, %v2612
        %v2627 = vadd.f32 %v2589, %v2612
        %v2628 = vadd.f32 %v2590, %v2612
        %v2629 = vadd.f32 %v2591, %v2612
        %v2630 = vadd.f32 %v2592, %v2612
        %v2631 = vadd.f32 %v2593, %v2612
        %v2632 = vadd.f32 %v2594, %v2612
        %v2633 = vadd.f32 %v2595, %v2612
        %v2634 = vadd.f32 %v2596, %v2612
        %v2635 = vadd.f32 %v2597, %v2612
        %v2636 = vadd.f32 %v2598, %v2612
        %v2637 = vadd.f32 %v2599, %v2612
        %v2638 = vadd.f32 %v2600, %v2612
        %v2639 = vadd.f32 %v2601, %v2612
        %v2640 = vadd.f32 %v2602, %v2612
        %v2641 = vadd.f32 %v2603, %v2612
        %v2642 = vadd.f32 %v2604, %v2612
        %v2643 = vadd.f32 %v2605, %v2612
        %v2644 = vadd.f32 %v2606, %v2612
        %v2645 = vadd.f32 %v2607, %v2612
        %v2646 = vld [vmem:[%s5] sm:$0xff]
        %v2647 = vld [vmem:[%s5 + $0x8] sm:$0xff]
        %v2648 = vld [vmem:[%s5 + $0x10] sm:$0xff]
        %v2649 = vld [vmem:[%s5 + $0x18] sm:$0xff]
        %v2650 = vld [vmem:[%s6] sm:$0x1]
        %v2652 = vlaneseq
        %v2653 = vshrl.u32 %v2652, 7
        %v2654 = vsub.s32 0, %v2653
        %v2655 = vrot.slane %v2650, %v2654
        %v2658 = vsel %vm2152, %v2614, 0
        %v2661 = vsel %vm2152, %v2615, 0
        %v2664 = vsel %vm2152, %v2616, 0
        %v2667 = vsel %vm2152, %v2617, 0
        %v2670 = vsel %vm2152, %v2618, 0
        %v2673 = vsel %vm2152, %v2619, 0
        %v2676 = vsel %vm2152, %v2620, 0
        %v2679 = vsel %vm2152, %v2621, 0
        %v2682 = vsel %vm2152, %v2622, 0
        %v2685 = vsel %vm2152, %v2623, 0
        %v2688 = vsel %vm2152, %v2624, 0
        %v2691 = vsel %vm2152, %v2625, 0
        %v2694 = vsel %vm2152, %v2626, 0
        %v2697 = vsel %vm2152, %v2627, 0
        %v2700 = vsel %vm2152, %v2628, 0
        %v2703 = vsel %vm2152, %v2629, 0
        %v2706 = vsel %vm2152, %v2630, 0
        %v2709 = vsel %vm2152, %v2631, 0
        %v2712 = vsel %vm2152, %v2632, 0
        %v2715 = vsel %vm2152, %v2633, 0
        %v2718 = vsel %vm2152, %v2634, 0
        %v2721 = vsel %vm2152, %v2635, 0
        %v2724 = vsel %vm2152, %v2636, 0
        %v2727 = vsel %vm2152, %v2637, 0
        %v2730 = vsel %vm2152, %v2638, 0
        %v2733 = vsel %vm2152, %v2639, 0
        %v2736 = vsel %vm2152, %v2640, 0
        %v2739 = vsel %vm2152, %v2641, 0
        %v2742 = vsel %vm2152, %v2642, 0
        %v2745 = vsel %vm2152, %v2643, 0
        %v2748 = vsel %vm2152, %v2644, 0
        %v2751 = vsel %vm2152, %v2645, 0
        %2753 = vmatprep.subr.mxu0 0.0
        %2754 = vmatpush1.msra.mxu0 %v2646
        %2755 = vmatprep.subr.mxu0 0.0
        %2756 = vmatpush1.msra.mxu0 %v2647
        %2757 = vmatprep.subr.mxu0 0.0
        %2758 = vmatpush1.msra.mxu0 %v2648
        %2759 = vmatprep.subr.mxu0 0.0
        %2760 = vmatpush1.msra.mxu0 %v2649
        %2761 = vmatprep.subr.mxu0 0.0
        %2762 = vmatpush1.msra.mxu0 0.0
        %2763 = vmatprep.subr.mxu0 0.0
        %2764 = vmatpush1.msra.mxu0 0.0
        %2765 = vmatprep.subr.mxu0 0.0
        %2766 = vmatpush1.msra.mxu0 0.0
        %2767 = vmatprep.subr.mxu0 0.0
        %2768 = vmatpush1.msra.mxu0 0.0
        %2769 = vmatprep.subr.mxu0 0.0
        %2770 = vmatpush1.msra.mxu0 0.0
        %2771 = vmatprep.subr.mxu0 0.0
        %2772 = vmatpush1.msra.mxu0 0.0
        %2773 = vmatprep.subr.mxu0 0.0
        %2774 = vmatpush1.msra.mxu0 0.0
        %2775 = vmatprep.subr.mxu0 0.0
        %2776 = vmatpush1.msra.mxu0 0.0
        %2777 = vmatprep.subr.mxu0 0.0
        %2778 = vmatpush1.msra.mxu0 0.0
        %2779 = vmatprep.subr.mxu0 0.0
        %2780 = vmatpush1.msra.mxu0 0.0
        %2781 = vmatprep.subr.mxu0 0.0
        %2782 = vmatpush1.msra.mxu0 0.0
        %2783 = vmatprep.subr.mxu0 0.0
        %2784 = vmatpush1.msra.mxu0 0.0
        %2785 = vmatprep.subr.mxu0 0.0
        %2786 = vmatpush1.msra.mxu0 0.0
        %2787 = vmatprep.subr.mxu0 0.0
        %2788 = vmatpush1.msra.mxu0 0.0
        %2789 = vmatprep.subr.mxu0 0.0
        %2790 = vmatpush1.msra.mxu0 0.0
        %2791 = vmatprep.subr.mxu0 0.0
        %2792 = vmatpush1.msra.mxu0 0.0
        %2793 = vmatprep.subr.mxu0 0.0
        %2794 = vmatpush1.msra.mxu0 0.0
        %2795 = vmatprep.subr.mxu0 0.0
        %2796 = vmatpush1.msra.mxu0 0.0
        %2797 = vmatprep.subr.mxu0 0.0
        %2798 = vmatpush1.msra.mxu0 0.0
        %2799 = vmatprep.subr.mxu0 0.0
        %2800 = vmatpush1.msra.mxu0 0.0
        %2801 = vmatprep.subr.mxu0 0.0
        %2802 = vmatpush1.msra.mxu0 0.0
        %2803 = vmatprep.subr.mxu0 0.0
        %2804 = vmatpush1.msra.mxu0 0.0
        %2805 = vmatprep.subr.mxu0 0.0
        %2806 = vmatpush1.msra.mxu0 0.0
        %2807 = vmatprep.subr.mxu0 0.0
        %2808 = vmatpush1.msra.mxu0 0.0
        %2809 = vmatprep.subr.mxu0 0.0
        %2810 = vmatpush1.msra.mxu0 0.0
        %2811 = vmatprep.subr.mxu0 0.0
        %2812 = vmatpush1.msra.mxu0 0.0
        %2813 = vmatprep.subr.mxu0 0.0
        %2814 = vmatpush1.msra.mxu0 0.0
        %2815 = vmatprep.subr.mxu0 0.0
        %2816 = vmatpush1.msra.mxu0 0.0
        %2817 = vmatprep.mubr.f32.mxu0 0.0
        %2818 = vmatmul.mubr.f32.gmra.mrb[0].mxu0 %v2658
        %v2819 = vpop.f32.mrb[0].mxu0
        %v2820 = vadd.f32 %v2655, %v2819
        %v2821 = vpop.f32.mrb[0].mxu0
        %2822 = vmatprep.mubr.f32.mxu0 0.0
        %2823 = vmatmul.mubr.f32.gmra.mrb[0].mxu0 %v2661
        %v2824 = vpop.f32.mrb[0].mxu0
        %v2825 = vadd.f32 %v2655, %v2824
        %v2826 = vpop.f32.mrb[0].mxu0
        %2827 = vmatprep.mubr.f32.mxu0 0.0
        %2828 = vmatmul.mubr.f32.gmra.mrb[0].mxu0 %v2664
        %v2829 = vpop.f32.mrb[0].mxu0
        %v2830 = vadd.f32 %v2655, %v2829
        %v2831 = vpop.f32.mrb[0].mxu0
        %2832 = vmatprep.mubr.f32.mxu0 0.0
        %2833 = vmatmul.mubr.f32.gmra.mrb[0].mxu0 %v2667
        %v2834 = vpop.f32.mrb[0].mxu0
        %v2835 = vadd.f32 %v2655, %v2834
        %v2836 = vpop.f32.mrb[0].mxu0
        %2837 = vmatprep.mubr.f32.mxu0 0.0
        %2838 = vmatmul.mubr.f32.gmra.mrb[0].mxu0 %v2670
        %v2839 = vpop.f32.mrb[0].mxu0
        %v2840 = vadd.f32 %v2655, %v2839
        %v2841 = vpop.f32.mrb[0].mxu0
        %2842 = vmatprep.mubr.f32.mxu0 0.0
        %2843 = vmatmul.mubr.f32.gmra.mrb[0].mxu0 %v2673
        %v2844 = vpop.f32.mrb[0].mxu0
        %v2845 = vadd.f32 %v2655, %v2844
        %v2846 = vpop.f32.mrb[0].mxu0
        %2847 = vmatprep.mubr.f32.mxu0 0.0
        %2848 = vmatmul.mubr.f32.gmra.mrb[0].mxu0 %v2676
        %v2849 = vpop.f32.mrb[0].mxu0
        %v2850 = vadd.f32 %v2655, %v2849
        %v2851 = vpop.f32.mrb[0].mxu0
        %2852 = vmatprep.mubr.f32.mxu0 0.0
        %2853 = vmatmul.mubr.f32.gmra.mrb[0].mxu0 %v2679
        %v2854 = vpop.f32.mrb[0].mxu0
        %v2855 = vadd.f32 %v2655, %v2854
        %v2856 = vpop.f32.mrb[0].mxu0
        %2857 = vmatprep.mubr.f32.mxu0 0.0
        %2858 = vmatmul.mubr.f32.gmra.mrb[0].mxu0 %v2682
        %v2859 = vpop.f32.mrb[0].mxu0
        %v2860 = vadd.f32 %v2655, %v2859
        %v2861 = vpop.f32.mrb[0].mxu0
        %2862 = vmatprep.mubr.f32.mxu0 0.0
        %2863 = vmatmul.mubr.f32.gmra.mrb[0].mxu0 %v2685
        %v2864 = vpop.f32.mrb[0].mxu0
        %v2865 = vadd.f32 %v2655, %v2864
        %v2866 = vpop.f32.mrb[0].mxu0
        %2867 = vmatprep.mubr.f32.mxu0 0.0
        %2868 = vmatmul.mubr.f32.gmra.mrb[0].mxu0 %v2688
        %v2869 = vpop.f32.mrb[0].mxu0
        %v2870 = vadd.f32 %v2655, %v2869
        %v2871 = vpop.f32.mrb[0].mxu0
        %2872 = vmatprep.mubr.f32.mxu0 0.0
        %2873 = vmatmul.mubr.f32.gmra.mrb[0].mxu0 %v2691
        %v2874 = vpop.f32.mrb[0].mxu0
        %v2875 = vadd.f32 %v2655, %v2874
        %v2876 = vpop.f32.mrb[0].mxu0
        %2877 = vmatprep.mubr.f32.mxu0 0.0
        %2878 = vmatmul.mubr.f32.gmra.mrb[0].mxu0 %v2694
        %v2879 = vpop.f32.mrb[0].mxu0
        %v2880 = vadd.f32 %v2655, %v2879
        %v2881 = vpop.f32.mrb[0].mxu0
        %2882 = vmatprep.mubr.f32.mxu0 0.0
        %2883 = vmatmul.mubr.f32.gmra.mrb[0].mxu0 %v2697
        %v2884 = vpop.f32.mrb[0].mxu0
        %v2885 = vadd.f32 %v2655, %v2884
        %v2886 = vpop.f32.mrb[0].mxu0
        %2887 = vmatprep.mubr.f32.mxu0 0.0
        %2888 = vmatmul.mubr.f32.gmra.mrb[0].mxu0 %v2700
        %v2889 = vpop.f32.mrb[0].mxu0
        %v2890 = vadd.f32 %v2655, %v2889
        %v2891 = vpop.f32.mrb[0].mxu0
        %2892 = vmatprep.mubr.f32.mxu0 0.0
        %2893 = vmatmul.mubr.f32.gmra.mrb[0].mxu0 %v2703
        %v2894 = vpop.f32.mrb[0].mxu0
        %v2895 = vadd.f32 %v2655, %v2894
        %v2896 = vpop.f32.mrb[0].mxu0
        %2897 = vmatprep.mubr.f32.mxu0 0.0
        %2898 = vmatmul.mubr.f32.gmra.mrb[0].mxu0 %v2706
        %v2899 = vpop.f32.mrb[0].mxu0
        %v2900 = vadd.f32 %v2655, %v2899
        %v2901 = vpop.f32.mrb[0].mxu0
        %2902 = vmatprep.mubr.f32.mxu0 0.0
        %2903 = vmatmul.mubr.f32.gmra.mrb[0].mxu0 %v2709
        %v2904 = vpop.f32.mrb[0].mxu0
        %v2905 = vadd.f32 %v2655, %v2904
        %v2906 = vpop.f32.mrb[0].mxu0
        %2907 = vmatprep.mubr.f32.mxu0 0.0
        %2908 = vmatmul.mubr.f32.gmra.mrb[0].mxu0 %v2712
        %v2909 = vpop.f32.mrb[0].mxu0
        %v2910 = vadd.f32 %v2655, %v2909
        %v2911 = vpop.f32.mrb[0].mxu0
        %2912 = vmatprep.mubr.f32.mxu0 0.0
        %2913 = vmatmul.mubr.f32.gmra.mrb[0].mxu0 %v2715
        %v2914 = vpop.f32.mrb[0].mxu0
        %v2915 = vadd.f32 %v2655, %v2914
        %v2916 = vpop.f32.mrb[0].mxu0
        %2917 = vmatprep.mubr.f32.mxu0 0.0
        %2918 = vmatmul.mubr.f32.gmra.mrb[0].mxu0 %v2718
        %v2919 = vpop.f32.mrb[0].mxu0
        %v2920 = vadd.f32 %v2655, %v2919
        %v2921 = vpop.f32.mrb[0].mxu0
        %2922 = vmatprep.mubr.f32.mxu0 0.0
        %2923 = vmatmul.mubr.f32.gmra.mrb[0].mxu0 %v2721
        %v2924 = vpop.f32.mrb[0].mxu0
        %v2925 = vadd.f32 %v2655, %v2924
        %v2926 = vpop.f32.mrb[0].mxu0
        %2927 = vmatprep.mubr.f32.mxu0 0.0
        %2928 = vmatmul.mubr.f32.gmra.mrb[0].mxu0 %v2724
        %v2929 = vpop.f32.mrb[0].mxu0
        %v2930 = vadd.f32 %v2655, %v2929
        %v2931 = vpop.f32.mrb[0].mxu0
        %2932 = vmatprep.mubr.f32.mxu0 0.0
        %2933 = vmatmul.mubr.f32.gmra.mrb[0].mxu0 %v2727
        %v2934 = vpop.f32.mrb[0].mxu0
        %v2935 = vadd.f32 %v2655, %v2934
        %v2936 = vpop.f32.mrb[0].mxu0
        %2937 = vmatprep.mubr.f32.mxu0 0.0
        %2938 = vmatmul.mubr.f32.gmra.mrb[0].mxu0 %v2730
        %v2939 = vpop.f32.mrb[0].mxu0
        %v2940 = vadd.f32 %v2655, %v2939
        %v2941 = vpop.f32.mrb[0].mxu0
        %2942 = vmatprep.mubr.f32.mxu0 0.0
        %2943 = vmatmul.mubr.f32.gmra.mrb[0].mxu0 %v2733
        %v2944 = vpop.f32.mrb[0].mxu0
        %v2945 = vadd.f32 %v2655, %v2944
        %v2946 = vpop.f32.mrb[0].mxu0
        %2947 = vmatprep.mubr.f32.mxu0 0.0
        %2948 = vmatmul.mubr.f32.gmra.mrb[0].mxu0 %v2736
        %v2949 = vpop.f32.mrb[0].mxu0
        %v2950 = vadd.f32 %v2655, %v2949
        %v2951 = vpop.f32.mrb[0].mxu0
        %2952 = vmatprep.mubr.f32.mxu0 0.0
        %2953 = vmatmul.mubr.f32.gmra.mrb[0].mxu0 %v2739
        %v2954 = vpop.f32.mrb[0].mxu0
        %v2955 = vadd.f32 %v2655, %v2954
        %v2956 = vpop.f32.mrb[0].mxu0
        %2957 = vmatprep.mubr.f32.mxu0 0.0
        %2958 = vmatmul.mubr.f32.gmra.mrb[0].mxu0 %v2742
        %v2959 = vpop.f32.mrb[0].mxu0
        %v2960 = vadd.f32 %v2655, %v2959
        %v2961 = vpop.f32.mrb[0].mxu0
        %2962 = vmatprep.mubr.f32.mxu0 0.0
        %2963 = vmatmul.mubr.f32.gmra.mrb[0].mxu0 %v2745
        %v2964 = vpop.f32.mrb[0].mxu0
        %v2965 = vadd.f32 %v2655, %v2964
        %v2966 = vpop.f32.mrb[0].mxu0
        %2967 = vmatprep.mubr.f32.mxu0 0.0
        %2968 = vmatmul.mubr.f32.gmra.mrb[0].mxu0 %v2748
        %v2969 = vpop.f32.mrb[0].mxu0
        %v2970 = vadd.f32 %v2655, %v2969
        %v2971 = vpop.f32.mrb[0].mxu0
        %2972 = vmatprep.mubr.f32.mxu0 0.0
        %2973 = vmatmul.mubr.f32.gmra.mrb[0].mxu0 %v2751
        %v2974 = vpop.f32.mrb[0].mxu0
        %v2975 = vadd.f32 %v2655, %v2974
        %v2976 = vpop.f32.mrb[0].mxu0
        %2977 = vdwg.mxu0
        %v2978 = vmul.f32 %v2820, 0.5
        %v2979 = vmul.f32 %v2825, 0.5
        %v2980 = vmul.f32 %v2830, 0.5
        %v2981 = vmul.f32 %v2835, 0.5
        %v2982 = vmul.f32 %v2840, 0.5
        %v2983 = vmul.f32 %v2845, 0.5
        %v2984 = vmul.f32 %v2850, 0.5
        %v2985 = vmul.f32 %v2855, 0.5
        %v2986 = vmul.f32 %v2860, 0.5
        %v2987 = vmul.f32 %v2865, 0.5
        %v2988 = vmul.f32 %v2870, 0.5
        %v2989 = vmul.f32 %v2875, 0.5
        %v2990 = vmul.f32 %v2880, 0.5
        %v2991 = vmul.f32 %v2885, 0.5
        %v2992 = vmul.f32 %v2890, 0.5
        %v2993 = vmul.f32 %v2895, 0.5
        %v2994 = vmul.f32 %v2900, 0.5
        %v2995 = vmul.f32 %v2905, 0.5
        %v2996 = vmul.f32 %v2910, 0.5
        %v2997 = vmul.f32 %v2915, 0.5
        %v2998 = vmul.f32 %v2920, 0.5
        %v2999 = vmul.f32 %v2925, 0.5
        %v3000 = vmul.f32 %v2930, 0.5
        %v3001 = vmul.f32 %v2935, 0.5
        %v3002 = vmul.f32 %v2940, 0.5
        %v3003 = vmul.f32 %v2945, 0.5
        %v3004 = vmul.f32 %v2950, 0.5
        %v3005 = vmul.f32 %v2955, 0.5
        %v3006 = vmul.f32 %v2960, 0.5
        %v3007 = vmul.f32 %v2965, 0.5
        %v3008 = vmul.f32 %v2970, 0.5
        %v3009 = vmul.f32 %v2975, 0.5
        %v3010 = vmul.f32 %v2820, 0.70710677
        %v3011 = vmul.f32 %v2825, 0.70710677
        %v3012 = vmul.f32 %v2830, 0.70710677
        %v3013 = vmul.f32 %v2835, 0.70710677
        %v3014 = vmul.f32 %v2840, 0.70710677
        %v3015 = vmul.f32 %v2845, 0.70710677
        %v3016 = vmul.f32 %v2850, 0.70710677
        %v3017 = vmul.f32 %v2855, 0.70710677
        %v3018 = vmul.f32 %v2860, 0.70710677
        %v3019 = vmul.f32 %v2865, 0.70710677
        %v3020 = vmul.f32 %v2870, 0.70710677
        %v3021 = vmul.f32 %v2875, 0.70710677
        %v3022 = vmul.f32 %v2880, 0.70710677
        %v3023 = vmul.f32 %v2885, 0.70710677
        %v3024 = vmul.f32 %v2890, 0.70710677
        %v3025 = vmul.f32 %v2895, 0.70710677
        %v3026 = vmul.f32 %v2900, 0.70710677
        %v3027 = vmul.f32 %v2905, 0.70710677
        %v3028 = vmul.f32 %v2910, 0.70710677
        %v3029 = vmul.f32 %v2915, 0.70710677
        %v3030 = vmul.f32 %v2920, 0.70710677
        %v3031 = vmul.f32 %v2925, 0.70710677
        %v3032 = vmul.f32 %v2930, 0.70710677
        %v3033 = vmul.f32 %v2935, 0.70710677
        %v3034 = vmul.f32 %v2940, 0.70710677
        %v3035 = vmul.f32 %v2945, 0.70710677
        %v3036 = vmul.f32 %v2950, 0.70710677
        %v3037 = vmul.f32 %v2955, 0.70710677
        %v3038 = vmul.f32 %v2960, 0.70710677
        %v3039 = vmul.f32 %v2965, 0.70710677
        %v3040 = vmul.f32 %v2970, 0.70710677
        %v3041 = vmul.f32 %v2975, 0.70710677
        %v3042 = vand.u32 2147483647, %v3010
        %v3043 = vand.u32 2147483647, %v3011
        %v3044 = vand.u32 2147483647, %v3012
        %v3045 = vand.u32 2147483647, %v3013
        %v3046 = vand.u32 2147483647, %v3014
        %v3047 = vand.u32 2147483647, %v3015
        %v3048 = vand.u32 2147483647, %v3016
        %v3049 = vand.u32 2147483647, %v3017
        %v3050 = vand.u32 2147483647, %v3018
        %v3051 = vand.u32 2147483647, %v3019
        %v3052 = vand.u32 2147483647, %v3020
        %v3053 = vand.u32 2147483647, %v3021
        %v3054 = vand.u32 2147483647, %v3022
        %v3055 = vand.u32 2147483647, %v3023
        %v3056 = vand.u32 2147483647, %v3024
        %v3057 = vand.u32 2147483647, %v3025
        %v3058 = vand.u32 2147483647, %v3026
        %v3059 = vand.u32 2147483647, %v3027
        %v3060 = vand.u32 2147483647, %v3028
        %v3061 = vand.u32 2147483647, %v3029
        %v3062 = vand.u32 2147483647, %v3030
        %v3063 = vand.u32 2147483647, %v3031
        %v3064 = vand.u32 2147483647, %v3032
        %v3065 = vand.u32 2147483647, %v3033
        %v3066 = vand.u32 2147483647, %v3034
        %v3067 = vand.u32 2147483647, %v3035
        %v3068 = vand.u32 2147483647, %v3036
        %v3069 = vand.u32 2147483647, %v3037
        %v3070 = vand.u32 2147483647, %v3038
        %v3071 = vand.u32 2147483647, %v3039
        %v3072 = vand.u32 2147483647, %v3040
        %v3073 = vand.u32 2147483647, %v3041
        %v3074 = vmul.f32 %v3042, 0.3275911
        %v3075 = vmul.f32 %v3043, 0.3275911
        %v3076 = vmul.f32 %v3044, 0.3275911
        %v3077 = vmul.f32 %v3045, 0.3275911
        %v3078 = vmul.f32 %v3046, 0.3275911
        %v3079 = vmul.f32 %v3047, 0.3275911
        %v3080 = vmul.f32 %v3048, 0.3275911
        %v3081 = vmul.f32 %v3049, 0.3275911
        %v3082 = vmul.f32 %v3050, 0.3275911
        %v3083 = vmul.f32 %v3051, 0.3275911
        %v3084 = vmul.f32 %v3052, 0.3275911
        %v3085 = vmul.f32 %v3053, 0.3275911
        %v3086 = vmul.f32 %v3054, 0.3275911
        %v3087 = vmul.f32 %v3055, 0.3275911
        %v3088 = vmul.f32 %v3056, 0.3275911
        %v3089 = vmul.f32 %v3057, 0.3275911
        %v3090 = vmul.f32 %v3058, 0.3275911
        %v3091 = vmul.f32 %v3059, 0.3275911
        %v3092 = vmul.f32 %v3060, 0.3275911
        %v3093 = vmul.f32 %v3061, 0.3275911
        %v3094 = vmul.f32 %v3062, 0.3275911
        %v3095 = vmul.f32 %v3063, 0.3275911
        %v3096 = vmul.f32 %v3064, 0.3275911
        %v3097 = vmul.f32 %v3065, 0.3275911
        %v3098 = vmul.f32 %v3066, 0.3275911
        %v3099 = vmul.f32 %v3067, 0.3275911
        %v3100 = vmul.f32 %v3068, 0.3275911
        %v3101 = vmul.f32 %v3069, 0.3275911
        %v3102 = vmul.f32 %v3070, 0.3275911
        %v3103 = vmul.f32 %v3071, 0.3275911
        %v3104 = vmul.f32 %v3072, 0.3275911
        %v3105 = vmul.f32 %v3073, 0.3275911
        %v3106 = vadd.f32 %v3074, 1.0
        %v3107 = vadd.f32 %v3075, 1.0
        %v3108 = vadd.f32 %v3076, 1.0
        %v3109 = vadd.f32 %v3077, 1.0
        %v3110 = vadd.f32 %v3078, 1.0
        %v3111 = vadd.f32 %v3079, 1.0
        %v3112 = vadd.f32 %v3080, 1.0
        %v3113 = vadd.f32 %v3081, 1.0
        %v3114 = vadd.f32 %v3082, 1.0
        %v3115 = vadd.f32 %v3083, 1.0
        %v3116 = vadd.f32 %v3084, 1.0
        %v3117 = vadd.f32 %v3085, 1.0
        %v3118 = vadd.f32 %v3086, 1.0
        %v3119 = vadd.f32 %v3087, 1.0
        %v3120 = vadd.f32 %v3088, 1.0
        %v3121 = vadd.f32 %v3089, 1.0
        %v3122 = vadd.f32 %v3090, 1.0
        %v3123 = vadd.f32 %v3091, 1.0
        %v3124 = vadd.f32 %v3092, 1.0
        %v3125 = vadd.f32 %v3093, 1.0
        %v3126 = vadd.f32 %v3094, 1.0
        %v3127 = vadd.f32 %v3095, 1.0
        %v3128 = vadd.f32 %v3096, 1.0
        %v3129 = vadd.f32 %v3097, 1.0
        %v3130 = vadd.f32 %v3098, 1.0
        %v3131 = vadd.f32 %v3099, 1.0
        %v3132 = vadd.f32 %v3100, 1.0
        %v3133 = vadd.f32 %v3101, 1.0
        %v3134 = vadd.f32 %v3102, 1.0
        %v3135 = vadd.f32 %v3103, 1.0
        %v3136 = vadd.f32 %v3104, 1.0
        %v3137 = vadd.f32 %v3105, 1.0
        %v3138 = vrcp.pop %v3106
        %v3139 = vmul.f32 1.0, %v3138
        %v3140 = vrcp.pop %v3107
        %v3141 = vmul.f32 1.0, %v3140
        %v3142 = vrcp.pop %v3108
        %v3143 = vmul.f32 1.0, %v3142
        %v3144 = vrcp.pop %v3109
        %v3145 = vmul.f32 1.0, %v3144
        %v3146 = vrcp.pop %v3110
        %v3147 = vmul.f32 1.0, %v3146
        %v3148 = vrcp.pop %v3111
        %v3149 = vmul.f32 1.0, %v3148
        %v3150 = vrcp.pop %v3112
        %v3151 = vmul.f32 1.0, %v3150
        %v3152 = vrcp.pop %v3113
        %v3153 = vmul.f32 1.0, %v3152
        %v3154 = vrcp.pop %v3114
        %v3155 = vmul.f32 1.0, %v3154
        %v3156 = vrcp.pop %v3115
        %v3157 = vmul.f32 1.0, %v3156
        %v3158 = vrcp.pop %v3116
        %v3159 = vmul.f32 1.0, %v3158
        %v3160 = vrcp.pop %v3117
        %v3161 = vmul.f32 1.0, %v3160
        %v3162 = vrcp.pop %v3118
        %v3163 = vmul.f32 1.0, %v3162
        %v3164 = vrcp.pop %v3119
        %v3165 = vmul.f32 1.0, %v3164
        %v3166 = vrcp.pop %v3120
        %v3167 = vmul.f32 1.0, %v3166
        %v3168 = vrcp.pop %v3121
        %v3169 = vmul.f32 1.0, %v3168
        %v3170 = vrcp.pop %v3122
        %v3171 = vmul.f32 1.0, %v3170
        %v3172 = vrcp.pop %v3123
        %v3173 = vmul.f32 1.0, %v3172
        %v3174 = vrcp.pop %v3124
        %v3175 = vmul.f32 1.0, %v3174
        %v3176 = vrcp.pop %v3125
        %v3177 = vmul.f32 1.0, %v3176
        %v3178 = vrcp.pop %v3126
        %v3179 = vmul.f32 1.0, %v3178
        %v3180 = vrcp.pop %v3127
        %v3181 = vmul.f32 1.0, %v3180
        %v3182 = vrcp.pop %v3128
        %v3183 = vmul.f32 1.0, %v3182
        %v3184 = vrcp.pop %v3129
        %v3185 = vmul.f32 1.0, %v3184
        %v3186 = vrcp.pop %v3130
        %v3187 = vmul.f32 1.0, %v3186
        %v3188 = vrcp.pop %v3131
        %v3189 = vmul.f32 1.0, %v3188
        %v3190 = vrcp.pop %v3132
        %v3191 = vmul.f32 1.0, %v3190
        %v3192 = vrcp.pop %v3133
        %v3193 = vmul.f32 1.0, %v3192
        %v3194 = vrcp.pop %v3134
        %v3195 = vmul.f32 1.0, %v3194
        %v3196 = vrcp.pop %v3135
        %v3197 = vmul.f32 1.0, %v3196
        %v3198 = vrcp.pop %v3136
        %v3199 = vmul.f32 1.0, %v3198
        %v3200 = vrcp.pop %v3137
        %v3201 = vmul.f32 1.0, %v3200
        %v3202 = vmul.f32 %v3139, 1.0614054
        %v3203 = vmul.f32 %v3141, 1.0614054
        %v3204 = vmul.f32 %v3143, 1.0614054
        %v3205 = vmul.f32 %v3145, 1.0614054
        %v3206 = vmul.f32 %v3147, 1.0614054
        %v3207 = vmul.f32 %v3149, 1.0614054
        %v3208 = vmul.f32 %v3151, 1.0614054
        %v3209 = vmul.f32 %v3153, 1.0614054
        %v3210 = vmul.f32 %v3155, 1.0614054
        %v3211 = vmul.f32 %v3157, 1.0614054
        %v3212 = vmul.f32 %v3159, 1.0614054
        %v3213 = vmul.f32 %v3161, 1.0614054
        %v3214 = vmul.f32 %v3163, 1.0614054
        %v3215 = vmul.f32 %v3165, 1.0614054
        %v3216 = vmul.f32 %v3167, 1.0614054
        %v3217 = vmul.f32 %v3169, 1.0614054
        %v3218 = vmul.f32 %v3171, 1.0614054
        %v3219 = vmul.f32 %v3173, 1.0614054
        %v3220 = vmul.f32 %v3175, 1.0614054
        %v3221 = vmul.f32 %v3177, 1.0614054
        %v3222 = vmul.f32 %v3179, 1.0614054
        %v3223 = vmul.f32 %v3181, 1.0614054
        %v3224 = vmul.f32 %v3183, 1.0614054
        %v3225 = vmul.f32 %v3185, 1.0614054
        %v3226 = vmul.f32 %v3187, 1.0614054
        %v3227 = vmul.f32 %v3189, 1.0614054
        %v3228 = vmul.f32 %v3191, 1.0614054
        %v3229 = vmul.f32 %v3193, 1.0614054
        %v3230 = vmul.f32 %v3195, 1.0614054
        %v3231 = vmul.f32 %v3197, 1.0614054
        %v3232 = vmul.f32 %v3199, 1.0614054
        %v3233 = vmul.f32 %v3201, 1.0614054
        %v3234 = vadd.f32 %v3202, -1.4531521
        %v3235 = vadd.f32 %v3203, -1.4531521
        %v3236 = vadd.f32 %v3204, -1.4531521
        %v3237 = vadd.f32 %v3205, -1.4531521
        %v3238 = vadd.f32 %v3206, -1.4531521
        %v3239 = vadd.f32 %v3207, -1.4531521
        %v3240 = vadd.f32 %v3208, -1.4531521
        %v3241 = vadd.f32 %v3209, -1.4531521
        %v3242 = vadd.f32 %v3210, -1.4531521
        %v3243 = vadd.f32 %v3211, -1.4531521
        %v3244 = vadd.f32 %v3212, -1.4531521
        %v3245 = vadd.f32 %v3213, -1.4531521
        %v3246 = vadd.f32 %v3214, -1.4531521
        %v3247 = vadd.f32 %v3215, -1.4531521
        %v3248 = vadd.f32 %v3216, -1.4531521
        %v3249 = vadd.f32 %v3217, -1.4531521
        %v3250 = vadd.f32 %v3218, -1.4531521
        %v3251 = vadd.f32 %v3219, -1.4531521
        %v3252 = vadd.f32 %v3220, -1.4531521
        %v3253 = vadd.f32 %v3221, -1.4531521
        %v3254 = vadd.f32 %v3222, -1.4531521
        %v3255 = vadd.f32 %v3223, -1.4531521
        %v3256 = vadd.f32 %v3224, -1.4531521
        %v3257 = vadd.f32 %v3225, -1.4531521
        %v3258 = vadd.f32 %v3226, -1.4531521
        %v3259 = vadd.f32 %v3227, -1.4531521
        %v3260 = vadd.f32 %v3228, -1.4531521
        %v3261 = vadd.f32 %v3229, -1.4531521
        %v3262 = vadd.f32 %v3230, -1.4531521
        %v3263 = vadd.f32 %v3231, -1.4531521
        %v3264 = vadd.f32 %v3232, -1.4531521
        %v3265 = vadd.f32 %v3233, -1.4531521
        %v3266 = vmul.f32 %v3234, %v3139
        %v3267 = vmul.f32 %v3235, %v3141
        %v3268 = vmul.f32 %v3236, %v3143
        %v3269 = vmul.f32 %v3237, %v3145
        %v3270 = vmul.f32 %v3238, %v3147
        %v3271 = vmul.f32 %v3239, %v3149
        %v3272 = vmul.f32 %v3240, %v3151
        %v3273 = vmul.f32 %v3241, %v3153
        %v3274 = vmul.f32 %v3242, %v3155
        %v3275 = vmul.f32 %v3243, %v3157
        %v3276 = vmul.f32 %v3244, %v3159
        %v3277 = vmul.f32 %v3245, %v3161
        %v3278 = vmul.f32 %v3246, %v3163
        %v3279 = vmul.f32 %v3247, %v3165
        %v3280 = vmul.f32 %v3248, %v3167
        %v3281 = vmul.f32 %v3249, %v3169
        %v3282 = vmul.f32 %v3250, %v3171
        %v3283 = vmul.f32 %v3251, %v3173
        %v3284 = vmul.f32 %v3252, %v3175
        %v3285 = vmul.f32 %v3253, %v3177
        %v3286 = vmul.f32 %v3254, %v3179
        %v3287 = vmul.f32 %v3255, %v3181
        %v3288 = vmul.f32 %v3256, %v3183
        %v3289 = vmul.f32 %v3257, %v3185
        %v3290 = vmul.f32 %v3258, %v3187
        %v3291 = vmul.f32 %v3259, %v3189
        %v3292 = vmul.f32 %v3260, %v3191
        %v3293 = vmul.f32 %v3261, %v3193
        %v3294 = vmul.f32 %v3262, %v3195
        %v3295 = vmul.f32 %v3263, %v3197
        %v3296 = vmul.f32 %v3264, %v3199
        %v3297 = vmul.f32 %v3265, %v3201
        %v3298 = vadd.f32 %v3266, 1.4214138
        %v3299 = vadd.f32 %v3267, 1.4214138
        %v3300 = vadd.f32 %v3268, 1.4214138
        %v3301 = vadd.f32 %v3269, 1.4214138
        %v3302 = vadd.f32 %v3270, 1.4214138
        %v3303 = vadd.f32 %v3271, 1.4214138
        %v3304 = vadd.f32 %v3272, 1.4214138
        %v3305 = vadd.f32 %v3273, 1.4214138
        %v3306 = vadd.f32 %v3274, 1.4214138
        %v3307 = vadd.f32 %v3275, 1.4214138
        %v3308 = vadd.f32 %v3276, 1.4214138
        %v3309 = vadd.f32 %v3277, 1.4214138
        %v3310 = vadd.f32 %v3278, 1.4214138
        %v3311 = vadd.f32 %v3279, 1.4214138
        %v3312 = vadd.f32 %v3280, 1.4214138
        %v3313 = vadd.f32 %v3281, 1.4214138
        %v3314 = vadd.f32 %v3282, 1.4214138
        %v3315 = vadd.f32 %v3283, 1.4214138
        %v3316 = vadd.f32 %v3284, 1.4214138
        %v3317 = vadd.f32 %v3285, 1.4214138
        %v3318 = vadd.f32 %v3286, 1.4214138
        %v3319 = vadd.f32 %v3287, 1.4214138
        %v3320 = vadd.f32 %v3288, 1.4214138
        %v3321 = vadd.f32 %v3289, 1.4214138
        %v3322 = vadd.f32 %v3290, 1.4214138
        %v3323 = vadd.f32 %v3291, 1.4214138
        %v3324 = vadd.f32 %v3292, 1.4214138
        %v3325 = vadd.f32 %v3293, 1.4214138
        %v3326 = vadd.f32 %v3294, 1.4214138
        %v3327 = vadd.f32 %v3295, 1.4214138
        %v3328 = vadd.f32 %v3296, 1.4214138
        %v3329 = vadd.f32 %v3297, 1.4214138
        %v3330 = vmul.f32 %v3298, %v3139
        %v3331 = vmul.f32 %v3299, %v3141
        %v3332 = vmul.f32 %v3300, %v3143
        %v3333 = vmul.f32 %v3301, %v3145
        %v3334 = vmul.f32 %v3302, %v3147
        %v3335 = vmul.f32 %v3303, %v3149
        %v3336 = vmul.f32 %v3304, %v3151
        %v3337 = vmul.f32 %v3305, %v3153
        %v3338 = vmul.f32 %v3306, %v3155
        %v3339 = vmul.f32 %v3307, %v3157
        %v3340 = vmul.f32 %v3308, %v3159
        %v3341 = vmul.f32 %v3309, %v3161
        %v3342 = vmul.f32 %v3310, %v3163
        %v3343 = vmul.f32 %v3311, %v3165
        %v3344 = vmul.f32 %v3312, %v3167
        %v3345 = vmul.f32 %v3313, %v3169
        %v3346 = vmul.f32 %v3314, %v3171
        %v3347 = vmul.f32 %v3315, %v3173
        %v3348 = vmul.f32 %v3316, %v3175
        %v3349 = vmul.f32 %v3317, %v3177
        %v3350 = vmul.f32 %v3318, %v3179
        %v3351 = vmul.f32 %v3319, %v3181
        %v3352 = vmul.f32 %v3320, %v3183
        %v3353 = vmul.f32 %v3321, %v3185
        %v3354 = vmul.f32 %v3322, %v3187
        %v3355 = vmul.f32 %v3323, %v3189
        %v3356 = vmul.f32 %v3324, %v3191
        %v3357 = vmul.f32 %v3325, %v3193
        %v3358 = vmul.f32 %v3326, %v3195
        %v3359 = vmul.f32 %v3327, %v3197
        %v3360 = vmul.f32 %v3328, %v3199
        %v3361 = vmul.f32 %v3329, %v3201
        %v3362 = vadd.f32 %v3330, -0.28449672
        %v3363 = vadd.f32 %v3331, -0.28449672
        %v3364 = vadd.f32 %v3332, -0.28449672
        %v3365 = vadd.f32 %v3333, -0.28449672
        %v3366 = vadd.f32 %v3334, -0.28449672
        %v3367 = vadd.f32 %v3335, -0.28449672
        %v3368 = vadd.f32 %v3336, -0.28449672
        %v3369 = vadd.f32 %v3337, -0.28449672
        %v3370 = vadd.f32 %v3338, -0.28449672
        %v3371 = vadd.f32 %v3339, -0.28449672
        %v3372 = vadd.f32 %v3340, -0.28449672
        %v3373 = vadd.f32 %v3341, -0.28449672
        %v3374 = vadd.f32 %v3342, -0.28449672
        %v3375 = vadd.f32 %v3343, -0.28449672
        %v3376 = vadd.f32 %v3344, -0.28449672
        %v3377 = vadd.f32 %v3345, -0.28449672
        %v3378 = vadd.f32 %v3346, -0.28449672
        %v3379 = vadd.f32 %v3347, -0.28449672
        %v3380 = vadd.f32 %v3348, -0.28449672
        %v3381 = vadd.f32 %v3349, -0.28449672
        %v3382 = vadd.f32 %v3350, -0.28449672
        %v3383 = vadd.f32 %v3351, -0.28449672
        %v3384 = vadd.f32 %v3352, -0.28449672
        %v3385 = vadd.f32 %v3353, -0.28449672
        %v3386 = vadd.f32 %v3354, -0.28449672
        %v3387 = vadd.f32 %v3355, -0.28449672
        %v3388 = vadd.f32 %v3356, -0.28449672
        %v3389 = vadd.f32 %v3357, -0.28449672
        %v3390 = vadd.f32 %v3358, -0.28449672
        %v3391 = vadd.f32 %v3359, -0.28449672
        %v3392 = vadd.f32 %v3360, -0.28449672
        %v3393 = vadd.f32 %v3361, -0.28449672
        %v3394 = vmul.f32 %v3362, %v3139
        %v3395 = vmul.f32 %v3363, %v3141
        %v3396 = vmul.f32 %v3364, %v3143
        %v3397 = vmul.f32 %v3365, %v3145
        %v3398 = vmul.f32 %v3366, %v3147
        %v3399 = vmul.f32 %v3367, %v3149
        %v3400 = vmul.f32 %v3368, %v3151
        %v3401 = vmul.f32 %v3369, %v3153
        %v3402 = vmul.f32 %v3370, %v3155
        %v3403 = vmul.f32 %v3371, %v3157
        %v3404 = vmul.f32 %v3372, %v3159
        %v3405 = vmul.f32 %v3373, %v3161
        %v3406 = vmul.f32 %v3374, %v3163
        %v3407 = vmul.f32 %v3375, %v3165
        %v3408 = vmul.f32 %v3376, %v3167
        %v3409 = vmul.f32 %v3377, %v3169
        %v3410 = vmul.f32 %v3378, %v3171
        %v3411 = vmul.f32 %v3379, %v3173
        %v3412 = vmul.f32 %v3380, %v3175
        %v3413 = vmul.f32 %v3381, %v3177
        %v3414 = vmul.f32 %v3382, %v3179
        %v3415 = vmul.f32 %v3383, %v3181
        %v3416 = vmul.f32 %v3384, %v3183
        %v3417 = vmul.f32 %v3385, %v3185
        %v3418 = vmul.f32 %v3386, %v3187
        %v3419 = vmul.f32 %v3387, %v3189
        %v3420 = vmul.f32 %v3388, %v3191
        %v3421 = vmul.f32 %v3389, %v3193
        %v3422 = vmul.f32 %v3390, %v3195
        %v3423 = vmul.f32 %v3391, %v3197
        %v3424 = vmul.f32 %v3392, %v3199
        %v3425 = vmul.f32 %v3393, %v3201
        %v3426 = vadd.f32 %v3394, 0.2548296
        %v3427 = vadd.f32 %v3395, 0.2548296
        %v3428 = vadd.f32 %v3396, 0.2548296
        %v3429 = vadd.f32 %v3397, 0.2548296
        %v3430 = vadd.f32 %v3398, 0.2548296
        %v3431 = vadd.f32 %v3399, 0.2548296
        %v3432 = vadd.f32 %v3400, 0.2548296
        %v3433 = vadd.f32 %v3401, 0.2548296
        %v3434 = vadd.f32 %v3402, 0.2548296
        %v3435 = vadd.f32 %v3403, 0.2548296
        %v3436 = vadd.f32 %v3404, 0.2548296
        %v3437 = vadd.f32 %v3405, 0.2548296
        %v3438 = vadd.f32 %v3406, 0.2548296
        %v3439 = vadd.f32 %v3407, 0.2548296
        %v3440 = vadd.f32 %v3408, 0.2548296
        %v3441 = vadd.f32 %v3409, 0.2548296
        %v3442 = vadd.f32 %v3410, 0.2548296
        %v3443 = vadd.f32 %v3411, 0.2548296
        %v3444 = vadd.f32 %v3412, 0.2548296
        %v3445 = vadd.f32 %v3413, 0.2548296
        %v3446 = vadd.f32 %v3414, 0.2548296
        %v3447 = vadd.f32 %v3415, 0.2548296
        %v3448 = vadd.f32 %v3416, 0.2548296
        %v3449 = vadd.f32 %v3417, 0.2548296
        %v3450 = vadd.f32 %v3418, 0.2548296
        %v3451 = vadd.f32 %v3419, 0.2548296
        %v3452 = vadd.f32 %v3420, 0.2548296
        %v3453 = vadd.f32 %v3421, 0.2548296
        %v3454 = vadd.f32 %v3422, 0.2548296
        %v3455 = vadd.f32 %v3423, 0.2548296
        %v3456 = vadd.f32 %v3424, 0.2548296
        %v3457 = vadd.f32 %v3425, 0.2548296
        %v3458 = vmul.f32 %v3426, %v3139
        %v3459 = vmul.f32 %v3427, %v3141
        %v3460 = vmul.f32 %v3428, %v3143
        %v3461 = vmul.f32 %v3429, %v3145
        %v3462 = vmul.f32 %v3430, %v3147
        %v3463 = vmul.f32 %v3431, %v3149
        %v3464 = vmul.f32 %v3432, %v3151
        %v3465 = vmul.f32 %v3433, %v3153
        %v3466 = vmul.f32 %v3434, %v3155
        %v3467 = vmul.f32 %v3435, %v3157
        %v3468 = vmul.f32 %v3436, %v3159
        %v3469 = vmul.f32 %v3437, %v3161
        %v3470 = vmul.f32 %v3438, %v3163
        %v3471 = vmul.f32 %v3439, %v3165
        %v3472 = vmul.f32 %v3440, %v3167
        %v3473 = vmul.f32 %v3441, %v3169
        %v3474 = vmul.f32 %v3442, %v3171
        %v3475 = vmul.f32 %v3443, %v3173
        %v3476 = vmul.f32 %v3444, %v3175
        %v3477 = vmul.f32 %v3445, %v3177
        %v3478 = vmul.f32 %v3446, %v3179
        %v3479 = vmul.f32 %v3447, %v3181
        %v3480 = vmul.f32 %v3448, %v3183
        %v3481 = vmul.f32 %v3449, %v3185
        %v3482 = vmul.f32 %v3450, %v3187
        %v3483 = vmul.f32 %v3451, %v3189
        %v3484 = vmul.f32 %v3452, %v3191
        %v3485 = vmul.f32 %v3453, %v3193
        %v3486 = vmul.f32 %v3454, %v3195
        %v3487 = vmul.f32 %v3455, %v3197
        %v3488 = vmul.f32 %v3456, %v3199
        %v3489 = vmul.f32 %v3457, %v3201
        %v3490 = vsub.f32 0.0, %v3042
        %v3491 = vsub.f32 0.0, %v3043
        %v3492 = vsub.f32 0.0, %v3044
        %v3493 = vsub.f32 0.0, %v3045
        %v3494 = vsub.f32 0.0, %v3046
        %v3495 = vsub.f32 0.0, %v3047
        %v3496 = vsub.f32 0.0, %v3048
        %v3497 = vsub.f32 0.0, %v3049
        %v3498 = vsub.f32 0.0, %v3050
        %v3499 = vsub.f32 0.0, %v3051
        %v3500 = vsub.f32 0.0, %v3052
        %v3501 = vsub.f32 0.0, %v3053
        %v3502 = vsub.f32 0.0, %v3054
        %v3503 = vsub.f32 0.0, %v3055
        %v3504 = vsub.f32 0.0, %v3056
        %v3505 = vsub.f32 0.0, %v3057
        %v3506 = vsub.f32 0.0, %v3058
        %v3507 = vsub.f32 0.0, %v3059
        %v3508 = vsub.f32 0.0, %v3060
        %v3509 = vsub.f32 0.0, %v3061
        %v3510 = vsub.f32 0.0, %v3062
        %v3511 = vsub.f32 0.0, %v3063
        %v3512 = vsub.f32 0.0, %v3064
        %v3513 = vsub.f32 0.0, %v3065
        %v3514 = vsub.f32 0.0, %v3066
        %v3515 = vsub.f32 0.0, %v3067
        %v3516 = vsub.f32 0.0, %v3068
        %v3517 = vsub.f32 0.0, %v3069
        %v3518 = vsub.f32 0.0, %v3070
        %v3519 = vsub.f32 0.0, %v3071
        %v3520 = vsub.f32 0.0, %v3072
        %v3521 = vsub.f32 0.0, %v3073
        %v3522 = vmul.f32 %v3490, %v3042
        %v3523 = vmul.f32 %v3491, %v3043
        %v3524 = vmul.f32 %v3492, %v3044
        %v3525 = vmul.f32 %v3493, %v3045
        %v3526 = vmul.f32 %v3494, %v3046
        %v3527 = vmul.f32 %v3495, %v3047
        %v3528 = vmul.f32 %v3496, %v3048
        %v3529 = vmul.f32 %v3497, %v3049
        %v3530 = vmul.f32 %v3498, %v3050
        %v3531 = vmul.f32 %v3499, %v3051
        %v3532 = vmul.f32 %v3500, %v3052
        %v3533 = vmul.f32 %v3501, %v3053
        %v3534 = vmul.f32 %v3502, %v3054
        %v3535 = vmul.f32 %v3503, %v3055
        %v3536 = vmul.f32 %v3504, %v3056
        %v3537 = vmul.f32 %v3505, %v3057
        %v3538 = vmul.f32 %v3506, %v3058
        %v3539 = vmul.f32 %v3507, %v3059
        %v3540 = vmul.f32 %v3508, %v3060
        %v3541 = vmul.f32 %v3509, %v3061
        %v3542 = vmul.f32 %v3510, %v3062
        %v3543 = vmul.f32 %v3511, %v3063
        %v3544 = vmul.f32 %v3512, %v3064
        %v3545 = vmul.f32 %v3513, %v3065
        %v3546 = vmul.f32 %v3514, %v3066
        %v3547 = vmul.f32 %v3515, %v3067
        %v3548 = vmul.f32 %v3516, %v3068
        %v3549 = vmul.f32 %v3517, %v3069
        %v3550 = vmul.f32 %v3518, %v3070
        %v3551 = vmul.f32 %v3519, %v3071
        %v3552 = vmul.f32 %v3520, %v3072
        %v3553 = vmul.f32 %v3521, %v3073
        %v3554 = vmul.f32 %v3522, 1.442695
        %v3555 = vpow.pop %v3554
        %v3556 = vmul.f32 %v3523, 1.442695
        %v3557 = vpow.pop %v3556
        %v3558 = vmul.f32 %v3524, 1.442695
        %v3559 = vpow.pop %v3558
        %v3560 = vmul.f32 %v3525, 1.442695
        %v3561 = vpow.pop %v3560
        %v3562 = vmul.f32 %v3526, 1.442695
        %v3563 = vpow.pop %v3562
        %v3564 = vmul.f32 %v3527, 1.442695
        %v3565 = vpow.pop %v3564
        %v3566 = vmul.f32 %v3528, 1.442695
        %v3567 = vpow.pop %v3566
        %v3568 = vmul.f32 %v3529, 1.442695
        %v3569 = vpow.pop %v3568
        %v3570 = vmul.f32 %v3530, 1.442695
        %v3571 = vpow.pop %v3570
        %v3572 = vmul.f32 %v3531, 1.442695
        %v3573 = vpow.pop %v3572
        %v3574 = vmul.f32 %v3532, 1.442695
        %v3575 = vpow.pop %v3574
        %v3576 = vmul.f32 %v3533, 1.442695
        %v3577 = vpow.pop %v3576
        %v3578 = vmul.f32 %v3534, 1.442695
        %v3579 = vpow.pop %v3578
        %v3580 = vmul.f32 %v3535, 1.442695
        %v3581 = vpow.pop %v3580
        %v3582 = vmul.f32 %v3536, 1.442695
        %v3583 = vpow.pop %v3582
        %v3584 = vmul.f32 %v3537, 1.442695
        %v3585 = vpow.pop %v3584
        %v3586 = vmul.f32 %v3538, 1.442695
        %v3587 = vpow.pop %v3586
        %v3588 = vmul.f32 %v3539, 1.442695
        %v3589 = vpow.pop %v3588
        %v3590 = vmul.f32 %v3540, 1.442695
        %v3591 = vpow.pop %v3590
        %v3592 = vmul.f32 %v3541, 1.442695
        %v3593 = vpow.pop %v3592
        %v3594 = vmul.f32 %v3542, 1.442695
        %v3595 = vpow.pop %v3594
        %v3596 = vmul.f32 %v3543, 1.442695
        %v3597 = vpow.pop %v3596
        %v3598 = vmul.f32 %v3544, 1.442695
        %v3599 = vpow.pop %v3598
        %v3600 = vmul.f32 %v3545, 1.442695
        %v3601 = vpow.pop %v3600
        %v3602 = vmul.f32 %v3546, 1.442695
        %v3603 = vpow.pop %v3602
        %v3604 = vmul.f32 %v3547, 1.442695
        %v3605 = vpow.pop %v3604
        %v3606 = vmul.f32 %v3548, 1.442695
        %v3607 = vpow.pop %v3606
        %v3608 = vmul.f32 %v3549, 1.442695
        %v3609 = vpow.pop %v3608
        %v3610 = vmul.f32 %v3550, 1.442695
        %v3611 = vpow.pop %v3610
        %v3612 = vmul.f32 %v3551, 1.442695
        %v3613 = vpow.pop %v3612
        %v3614 = vmul.f32 %v3552, 1.442695
        %v3615 = vpow.pop %v3614
        %v3616 = vmul.f32 %v3553, 1.442695
        %v3617 = vpow.pop %v3616
        %v3618 = vmul.f32 %v3458, %v3555
        %v3619 = vmul.f32 %v3459, %v3557
        %v3620 = vmul.f32 %v3460, %v3559
        %v3621 = vmul.f32 %v3461, %v3561
        %v3622 = vmul.f32 %v3462, %v3563
        %v3623 = vmul.f32 %v3463, %v3565
        %v3624 = vmul.f32 %v3464, %v3567
        %v3625 = vmul.f32 %v3465, %v3569
        %v3626 = vmul.f32 %v3466, %v3571
        %v3627 = vmul.f32 %v3467, %v3573
        %v3628 = vmul.f32 %v3468, %v3575
        %v3629 = vmul.f32 %v3469, %v3577
        %v3630 = vmul.f32 %v3470, %v3579
        %v3631 = vmul.f32 %v3471, %v3581
        %v3632 = vmul.f32 %v3472, %v3583
        %v3633 = vmul.f32 %v3473, %v3585
        %v3634 = vmul.f32 %v3474, %v3587
        %v3635 = vmul.f32 %v3475, %v3589
        %v3636 = vmul.f32 %v3476, %v3591
        %v3637 = vmul.f32 %v3477, %v3593
        %v3638 = vmul.f32 %v3478, %v3595
        %v3639 = vmul.f32 %v3479, %v3597
        %v3640 = vmul.f32 %v3480, %v3599
        %v3641 = vmul.f32 %v3481, %v3601
        %v3642 = vmul.f32 %v3482, %v3603
        %v3643 = vmul.f32 %v3483, %v3605
        %v3644 = vmul.f32 %v3484, %v3607
        %v3645 = vmul.f32 %v3485, %v3609
        %v3646 = vmul.f32 %v3486, %v3611
        %v3647 = vmul.f32 %v3487, %v3613
        %v3648 = vmul.f32 %v3488, %v3615
        %v3649 = vmul.f32 %v3489, %v3617
        %v3650 = vsub.f32 1.0, %v3618
        %v3651 = vsub.f32 1.0, %v3619
        %v3652 = vsub.f32 1.0, %v3620
        %v3653 = vsub.f32 1.0, %v3621
        %v3654 = vsub.f32 1.0, %v3622
        %v3655 = vsub.f32 1.0, %v3623
        %v3656 = vsub.f32 1.0, %v3624
        %v3657 = vsub.f32 1.0, %v3625
        %v3658 = vsub.f32 1.0, %v3626
        %v3659 = vsub.f32 1.0, %v3627
        %v3660 = vsub.f32 1.0, %v3628
        %v3661 = vsub.f32 1.0, %v3629
        %v3662 = vsub.f32 1.0, %v3630
        %v3663 = vsub.f32 1.0, %v3631
        %v3664 = vsub.f32 1.0, %v3632
        %v3665 = vsub.f32 1.0, %v3633
        %v3666 = vsub.f32 1.0, %v3634
        %v3667 = vsub.f32 1.0, %v3635
        %v3668 = vsub.f32 1.0, %v3636
        %v3669 = vsub.f32 1.0, %v3637
        %v3670 = vsub.f32 1.0, %v3638
        %v3671 = vsub.f32 1.0, %v3639
        %v3672 = vsub.f32 1.0, %v3640
        %v3673 = vsub.f32 1.0, %v3641
        %v3674 = vsub.f32 1.0, %v3642
        %v3675 = vsub.f32 1.0, %v3643
        %v3676 = vsub.f32 1.0, %v3644
        %v3677 = vsub.f32 1.0, %v3645
        %v3678 = vsub.f32 1.0, %v3646
        %v3679 = vsub.f32 1.0, %v3647
        %v3680 = vsub.f32 1.0, %v3648
        %v3681 = vsub.f32 1.0, %v3649
        %vm3682 = vcmp.lt.f32.partialorder %v3010, 0.0
        %vm3683 = vcmp.lt.f32.partialorder %v3011, 0.0
        %vm3684 = vcmp.lt.f32.partialorder %v3012, 0.0
        %vm3685 = vcmp.lt.f32.partialorder %v3013, 0.0
        %vm3686 = vcmp.lt.f32.partialorder %v3014, 0.0
        %vm3687 = vcmp.lt.f32.partialorder %v3015, 0.0
        %vm3688 = vcmp.lt.f32.partialorder %v3016, 0.0
        %vm3689 = vcmp.lt.f32.partialorder %v3017, 0.0
        %vm3690 = vcmp.lt.f32.partialorder %v3018, 0.0
        %vm3691 = vcmp.lt.f32.partialorder %v3019, 0.0
        %vm3692 = vcmp.lt.f32.partialorder %v3020, 0.0
        %vm3693 = vcmp.lt.f32.partialorder %v3021, 0.0
        %vm3694 = vcmp.lt.f32.partialorder %v3022, 0.0
        %vm3695 = vcmp.lt.f32.partialorder %v3023, 0.0
        %vm3696 = vcmp.lt.f32.partialorder %v3024, 0.0
        %vm3697 = vcmp.lt.f32.partialorder %v3025, 0.0
        %vm3698 = vcmp.lt.f32.partialorder %v3026, 0.0
        %vm3699 = vcmp.lt.f32.partialorder %v3027, 0.0
        %vm3700 = vcmp.lt.f32.partialorder %v3028, 0.0
        %vm3701 = vcmp.lt.f32.partialorder %v3029, 0.0
        %vm3702 = vcmp.lt.f32.partialorder %v3030, 0.0
        %vm3703 = vcmp.lt.f32.partialorder %v3031, 0.0
        %vm3704 = vcmp.lt.f32.partialorder %v3032, 0.0
        %vm3705 = vcmp.lt.f32.partialorder %v3033, 0.0
        %vm3706 = vcmp.lt.f32.partialorder %v3034, 0.0
        %vm3707 = vcmp.lt.f32.partialorder %v3035, 0.0
        %vm3708 = vcmp.lt.f32.partialorder %v3036, 0.0
        %vm3709 = vcmp.lt.f32.partialorder %v3037, 0.0
        %vm3710 = vcmp.lt.f32.partialorder %v3038, 0.0
        %vm3711 = vcmp.lt.f32.partialorder %v3039, 0.0
        %vm3712 = vcmp.lt.f32.partialorder %v3040, 0.0
        %vm3713 = vcmp.lt.f32.partialorder %v3041, 0.0
        %v3714 = vsub.f32 0.0, %v3650
        %v3715 = vsub.f32 0.0, %v3651
        %v3716 = vsub.f32 0.0, %v3652
        %v3717 = vsub.f32 0.0, %v3653
        %v3718 = vsub.f32 0.0, %v3654
        %v3719 = vsub.f32 0.0, %v3655
        %v3720 = vsub.f32 0.0, %v3656
        %v3721 = vsub.f32 0.0, %v3657
        %v3722 = vsub.f32 0.0, %v3658
        %v3723 = vsub.f32 0.0, %v3659
        %v3724 = vsub.f32 0.0, %v3660
        %v3725 = vsub.f32 0.0, %v3661
        %v3726 = vsub.f32 0.0, %v3662
        %v3727 = vsub.f32 0.0, %v3663
        %v3728 = vsub.f32 0.0, %v3664
        %v3729 = vsub.f32 0.0, %v3665
        %v3730 = vsub.f32 0.0, %v3666
        %v3731 = vsub.f32 0.0, %v3667
        %v3732 = vsub.f32 0.0, %v3668
        %v3733 = vsub.f32 0.0, %v3669
        %v3734 = vsub.f32 0.0, %v3670
        %v3735 = vsub.f32 0.0, %v3671
        %v3736 = vsub.f32 0.0, %v3672
        %v3737 = vsub.f32 0.0, %v3673
        %v3738 = vsub.f32 0.0, %v3674
        %v3739 = vsub.f32 0.0, %v3675
        %v3740 = vsub.f32 0.0, %v3676
        %v3741 = vsub.f32 0.0, %v3677
        %v3742 = vsub.f32 0.0, %v3678
        %v3743 = vsub.f32 0.0, %v3679
        %v3744 = vsub.f32 0.0, %v3680
        %v3745 = vsub.f32 0.0, %v3681
        %v3746 = vsel %vm3682, %v3714, %v3650
        %v3747 = vsel %vm3683, %v3715, %v3651
        %v3748 = vsel %vm3684, %v3716, %v3652
        %v3749 = vsel %vm3685, %v3717, %v3653
        %v3750 = vsel %vm3686, %v3718, %v3654
        %v3751 = vsel %vm3687, %v3719, %v3655
        %v3752 = vsel %vm3688, %v3720, %v3656
        %v3753 = vsel %vm3689, %v3721, %v3657
        %v3754 = vsel %vm3690, %v3722, %v3658
        %v3755 = vsel %vm3691, %v3723, %v3659
        %v3756 = vsel %vm3692, %v3724, %v3660
        %v3757 = vsel %vm3693, %v3725, %v3661
        %v3758 = vsel %vm3694, %v3726, %v3662
        %v3759 = vsel %vm3695, %v3727, %v3663
        %v3760 = vsel %vm3696, %v3728, %v3664
        %v3761 = vsel %vm3697, %v3729, %v3665
        %v3762 = vsel %vm3698, %v3730, %v3666
        %v3763 = vsel %vm3699, %v3731, %v3667
        %v3764 = vsel %vm3700, %v3732, %v3668
        %v3765 = vsel %vm3701, %v3733, %v3669
        %v3766 = vsel %vm3702, %v3734, %v3670
        %v3767 = vsel %vm3703, %v3735, %v3671
        %v3768 = vsel %vm3704, %v3736, %v3672
        %v3769 = vsel %vm3705, %v3737, %v3673
        %v3770 = vsel %vm3706, %v3738, %v3674
        %v3771 = vsel %vm3707, %v3739, %v3675
        %v3772 = vsel %vm3708, %v3740, %v3676
        %v3773 = vsel %vm3709, %v3741, %v3677
        %v3774 = vsel %vm3710, %v3742, %v3678
        %v3775 = vsel %vm3711, %v3743, %v3679
        %v3776 = vsel %vm3712, %v3744, %v3680
        %v3777 = vsel %vm3713, %v3745, %v3681
        %v3778 = vadd.f32 %v3746, 1.0
        %v3779 = vadd.f32 %v3747, 1.0
        %v3780 = vadd.f32 %v3748, 1.0
        %v3781 = vadd.f32 %v3749, 1.0
        %v3782 = vadd.f32 %v3750, 1.0
        %v3783 = vadd.f32 %v3751, 1.0
        %v3784 = vadd.f32 %v3752, 1.0
        %v3785 = vadd.f32 %v3753, 1.0
        %v3786 = vadd.f32 %v3754, 1.0
        %v3787 = vadd.f32 %v3755, 1.0
        %v3788 = vadd.f32 %v3756, 1.0
        %v3789 = vadd.f32 %v3757, 1.0
        %v3790 = vadd.f32 %v3758, 1.0
        %v3791 = vadd.f32 %v3759, 1.0
        %v3792 = vadd.f32 %v3760, 1.0
        %v3793 = vadd.f32 %v3761, 1.0
        %v3794 = vadd.f32 %v3762, 1.0
        %v3795 = vadd.f32 %v3763, 1.0
        %v3796 = vadd.f32 %v3764, 1.0
        %v3797 = vadd.f32 %v3765, 1.0
        %v3798 = vadd.f32 %v3766, 1.0
        %v3799 = vadd.f32 %v3767, 1.0
        %v3800 = vadd.f32 %v3768, 1.0
        %v3801 = vadd.f32 %v3769, 1.0
        %v3802 = vadd.f32 %v3770, 1.0
        %v3803 = vadd.f32 %v3771, 1.0
        %v3804 = vadd.f32 %v3772, 1.0
        %v3805 = vadd.f32 %v3773, 1.0
        %v3806 = vadd.f32 %v3774, 1.0
        %v3807 = vadd.f32 %v3775, 1.0
        %v3808 = vadd.f32 %v3776, 1.0
        %v3809 = vadd.f32 %v3777, 1.0
        %v3810 = vmul.f32 %v2978, %v3778
        %v3811 = vmul.f32 %v2979, %v3779
        %v3812 = vmul.f32 %v2980, %v3780
        %v3813 = vmul.f32 %v2981, %v3781
        %v3814 = vmul.f32 %v2982, %v3782
        %v3815 = vmul.f32 %v2983, %v3783
        %v3816 = vmul.f32 %v2984, %v3784
        %v3817 = vmul.f32 %v2985, %v3785
        %v3818 = vmul.f32 %v2986, %v3786
        %v3819 = vmul.f32 %v2987, %v3787
        %v3820 = vmul.f32 %v2988, %v3788
        %v3821 = vmul.f32 %v2989, %v3789
        %v3822 = vmul.f32 %v2990, %v3790
        %v3823 = vmul.f32 %v2991, %v3791
        %v3824 = vmul.f32 %v2992, %v3792
        %v3825 = vmul.f32 %v2993, %v3793
        %v3826 = vmul.f32 %v2994, %v3794
        %v3827 = vmul.f32 %v2995, %v3795
        %v3828 = vmul.f32 %v2996, %v3796
        %v3829 = vmul.f32 %v2997, %v3797
        %v3830 = vmul.f32 %v2998, %v3798
        %v3831 = vmul.f32 %v2999, %v3799
        %v3832 = vmul.f32 %v3000, %v3800
        %v3833 = vmul.f32 %v3001, %v3801
        %v3834 = vmul.f32 %v3002, %v3802
        %v3835 = vmul.f32 %v3003, %v3803
        %v3836 = vmul.f32 %v3004, %v3804
        %v3837 = vmul.f32 %v3005, %v3805
        %v3838 = vmul.f32 %v3006, %v3806
        %v3839 = vmul.f32 %v3007, %v3807
        %v3840 = vmul.f32 %v3008, %v3808
        %v3841 = vmul.f32 %v3009, %v3809
        %v3842 = vld [vmem:[%s7] sm:$0x1]
        %v3843 = vld [vmem:[%s8] sm:$0x1]
        %3844 = vadd.xlane.f32.xlu0 %v3810
        %v3845 = vpop.xlane.xlu0 %3844
        %3846 = vadd.xlane.f32.xlu0 %v3811
        %v3847 = vpop.xlane.xlu0 %3846
        %3848 = vadd.xlane.f32.xlu0 %v3812
        %v3849 = vpop.xlane.xlu0 %3848
        %3850 = vadd.xlane.f32.xlu0 %v3813
        %v3851 = vpop.xlane.xlu0 %3850
        %3852 = vadd.xlane.f32.xlu0 %v3814
        %v3853 = vpop.xlane.xlu0 %3852
        %3854 = vadd.xlane.f32.xlu0 %v3815
        %v3855 = vpop.xlane.xlu0 %3854
        %3856 = vadd.xlane.f32.xlu0 %v3816
        %v3857 = vpop.xlane.xlu0 %3856
        %3858 = vadd.xlane.f32.xlu0 %v3817
        %v3859 = vpop.xlane.xlu0 %3858
        %3860 = vadd.xlane.f32.xlu0 %v3818
        %v3861 = vpop.xlane.xlu0 %3860
        %3862 = vadd.xlane.f32.xlu0 %v3819
        %v3863 = vpop.xlane.xlu0 %3862
        %3864 = vadd.xlane.f32.xlu0 %v3820
        %v3865 = vpop.xlane.xlu0 %3864
        %3866 = vadd.xlane.f32.xlu0 %v3821
        %v3867 = vpop.xlane.xlu0 %3866
        %3868 = vadd.xlane.f32.xlu0 %v3822
        %v3869 = vpop.xlane.xlu0 %3868
        %3870 = vadd.xlane.f32.xlu0 %v3823
        %v3871 = vpop.xlane.xlu0 %3870
        %3872 = vadd.xlane.f32.xlu0 %v3824
        %v3873 = vpop.xlane.xlu0 %3872
        %3874 = vadd.xlane.f32.xlu0 %v3825
        %v3875 = vpop.xlane.xlu0 %3874
        %3876 = vadd.xlane.f32.xlu0 %v3826
        %v3877 = vpop.xlane.xlu0 %3876
        %3878 = vadd.xlane.f32.xlu0 %v3827
        %v3879 = vpop.xlane.xlu0 %3878
        %3880 = vadd.xlane.f32.xlu0 %v3828
        %v3881 = vpop.xlane.xlu0 %3880
        %3882 = vadd.xlane.f32.xlu0 %v3829
        %v3883 = vpop.xlane.xlu0 %3882
        %3884 = vadd.xlane.f32.xlu0 %v3830
        %v3885 = vpop.xlane.xlu0 %3884
        %3886 = vadd.xlane.f32.xlu0 %v3831
        %v3887 = vpop.xlane.xlu0 %3886
        %3888 = vadd.xlane.f32.xlu0 %v3832
        %v3889 = vpop.xlane.xlu0 %3888
        %3890 = vadd.xlane.f32.xlu0 %v3833
        %v3891 = vpop.xlane.xlu0 %3890
        %3892 = vadd.xlane.f32.xlu0 %v3834
        %v3893 = vpop.xlane.xlu0 %3892
        %3894 = vadd.xlane.f32.xlu0 %v3835
        %v3895 = vpop.xlane.xlu0 %3894
        %3896 = vadd.xlane.f32.xlu0 %v3836
        %v3897 = vpop.xlane.xlu0 %3896
        %3898 = vadd.xlane.f32.xlu0 %v3837
        %v3899 = vpop.xlane.xlu0 %3898
        %3900 = vadd.xlane.f32.xlu0 %v3838
        %v3901 = vpop.xlane.xlu0 %3900
        %3902 = vadd.xlane.f32.xlu0 %v3839
        %v3903 = vpop.xlane.xlu0 %3902
        %3904 = vadd.xlane.f32.xlu0 %v3840
        %v3905 = vpop.xlane.xlu0 %3904
        %3906 = vadd.xlane.f32.xlu0 %v3841
        %v3907 = vpop.xlane.xlu0 %3906
        %v3908 = vrcp.pop 128.0
        %v3909 = vmul.f32 %v3845, %v3908
        %v3910 = vmul.f32 %v3847, %v3908
        %v3911 = vmul.f32 %v3849, %v3908
        %v3912 = vmul.f32 %v3851, %v3908
        %v3913 = vmul.f32 %v3853, %v3908
        %v3914 = vmul.f32 %v3855, %v3908
        %v3915 = vmul.f32 %v3857, %v3908
        %v3916 = vmul.f32 %v3859, %v3908
        %v3917 = vmul.f32 %v3861, %v3908
        %v3918 = vmul.f32 %v3863, %v3908
        %v3919 = vmul.f32 %v3865, %v3908
        %v3920 = vmul.f32 %v3867, %v3908
        %v3921 = vmul.f32 %v3869, %v3908
        %v3922 = vmul.f32 %v3871, %v3908
        %v3923 = vmul.f32 %v3873, %v3908
        %v3924 = vmul.f32 %v3875, %v3908
        %v3925 = vmul.f32 %v3877, %v3908
        %v3926 = vmul.f32 %v3879, %v3908
        %v3927 = vmul.f32 %v3881, %v3908
        %v3928 = vmul.f32 %v3883, %v3908
        %v3929 = vmul.f32 %v3885, %v3908
        %v3930 = vmul.f32 %v3887, %v3908
        %v3931 = vmul.f32 %v3889, %v3908
        %v3932 = vmul.f32 %v3891, %v3908
        %v3933 = vmul.f32 %v3893, %v3908
        %v3934 = vmul.f32 %v3895, %v3908
        %v3935 = vmul.f32 %v3897, %v3908
        %v3936 = vmul.f32 %v3899, %v3908
        %v3937 = vmul.f32 %v3901, %v3908
        %v3938 = vmul.f32 %v3903, %v3908
        %v3939 = vmul.f32 %v3905, %v3908
        %v3940 = vmul.f32 %v3907, %v3908
        %v3941 = vsub.f32 %v3810, %v3909
        %v3942 = vsub.f32 %v3811, %v3910
        %v3943 = vsub.f32 %v3812, %v3911
        %v3944 = vsub.f32 %v3813, %v3912
        %v3945 = vsub.f32 %v3814, %v3913
        %v3946 = vsub.f32 %v3815, %v3914
        %v3947 = vsub.f32 %v3816, %v3915
        %v3948 = vsub.f32 %v3817, %v3916
        %v3949 = vsub.f32 %v3818, %v3917
        %v3950 = vsub.f32 %v3819, %v3918
        %v3951 = vsub.f32 %v3820, %v3919
        %v3952 = vsub.f32 %v3821, %v3920
        %v3953 = vsub.f32 %v3822, %v3921
        %v3954 = vsub.f32 %v3823, %v3922
        %v3955 = vsub.f32 %v3824, %v3923
        %v3956 = vsub.f32 %v3825, %v3924
        %v3957 = vsub.f32 %v3826, %v3925
        %v3958 = vsub.f32 %v3827, %v3926
        %v3959 = vsub.f32 %v3828, %v3927
        %v3960 = vsub.f32 %v3829, %v3928
        %v3961 = vsub.f32 %v3830, %v3929
        %v3962 = vsub.f32 %v3831, %v3930
        %v3963 = vsub.f32 %v3832, %v3931
        %v3964 = vsub.f32 %v3833, %v3932
        %v3965 = vsub.f32 %v3834, %v3933
        %v3966 = vsub.f32 %v3835, %v3934
        %v3967 = vsub.f32 %v3836, %v3935
        %v3968 = vsub.f32 %v3837, %v3936
        %v3969 = vsub.f32 %v3838, %v3937
        %v3970 = vsub.f32 %v3839, %v3938
        %v3971 = vsub.f32 %v3840, %v3939
        %v3972 = vsub.f32 %v3841, %v3940
        %v3973 = vmul.f32 %v3941, %v3941
        %v3974 = vmul.f32 %v3942, %v3942
        %v3975 = vmul.f32 %v3943, %v3943
        %v3976 = vmul.f32 %v3944, %v3944
        %v3977 = vmul.f32 %v3945, %v3945
        %v3978 = vmul.f32 %v3946, %v3946
        %v3979 = vmul.f32 %v3947, %v3947
        %v3980 = vmul.f32 %v3948, %v3948
        %v3981 = vmul.f32 %v3949, %v3949
        %v3982 = vmul.f32 %v3950, %v3950
        %v3983 = vmul.f32 %v3951, %v3951
        %v3984 = vmul.f32 %v3952, %v3952
        %v3985 = vmul.f32 %v3953, %v3953
        %v3986 = vmul.f32 %v3954, %v3954
        %v3987 = vmul.f32 %v3955, %v3955
        %v3988 = vmul.f32 %v3956, %v3956
        %v3989 = vmul.f32 %v3957, %v3957
        %v3990 = vmul.f32 %v3958, %v3958
        %v3991 = vmul.f32 %v3959, %v3959
        %v3992 = vmul.f32 %v3960, %v3960
        %v3993 = vmul.f32 %v3961, %v3961
        %v3994 = vmul.f32 %v3962, %v3962
        %v3995 = vmul.f32 %v3963, %v3963
        %v3996 = vmul.f32 %v3964, %v3964
        %v3997 = vmul.f32 %v3965, %v3965
        %v3998 = vmul.f32 %v3966, %v3966
        %v3999 = vmul.f32 %v3967, %v3967
        %v4000 = vmul.f32 %v3968, %v3968
        %v4001 = vmul.f32 %v3969, %v3969
        %v4002 = vmul.f32 %v3970, %v3970
        %v4003 = vmul.f32 %v3971, %v3971
        %v4004 = vmul.f32 %v3972, %v3972
        %4005 = vadd.xlane.f32.xlu0 %v3973
        %v4006 = vpop.xlane.xlu0 %4005
        %4007 = vadd.xlane.f32.xlu0 %v3974
        %v4008 = vpop.xlane.xlu0 %4007
        %4009 = vadd.xlane.f32.xlu0 %v3975
        %v4010 = vpop.xlane.xlu0 %4009
        %4011 = vadd.xlane.f32.xlu0 %v3976
        %v4012 = vpop.xlane.xlu0 %4011
        %4013 = vadd.xlane.f32.xlu0 %v3977
        %v4014 = vpop.xlane.xlu0 %4013
        %4015 = vadd.xlane.f32.xlu0 %v3978
        %v4016 = vpop.xlane.xlu0 %4015
        %4017 = vadd.xlane.f32.xlu0 %v3979
        %v4018 = vpop.xlane.xlu0 %4017
        %4019 = vadd.xlane.f32.xlu0 %v3980
        %v4020 = vpop.xlane.xlu0 %4019
        %4021 = vadd.xlane.f32.xlu0 %v3981
        %v4022 = vpop.xlane.xlu0 %4021
        %4023 = vadd.xlane.f32.xlu0 %v3982
        %v4024 = vpop.xlane.xlu0 %4023
        %4025 = vadd.xlane.f32.xlu0 %v3983
        %v4026 = vpop.xlane.xlu0 %4025
        %4027 = vadd.xlane.f32.xlu0 %v3984
        %v4028 = vpop.xlane.xlu0 %4027
        %4029 = vadd.xlane.f32.xlu0 %v3985
        %v4030 = vpop.xlane.xlu0 %4029
        %4031 = vadd.xlane.f32.xlu0 %v3986
        %v4032 = vpop.xlane.xlu0 %4031
        %4033 = vadd.xlane.f32.xlu0 %v3987
        %v4034 = vpop.xlane.xlu0 %4033
        %4035 = vadd.xlane.f32.xlu0 %v3988
        %v4036 = vpop.xlane.xlu0 %4035
        %4037 = vadd.xlane.f32.xlu0 %v3989
        %v4038 = vpop.xlane.xlu0 %4037
        %4039 = vadd.xlane.f32.xlu0 %v3990
        %v4040 = vpop.xlane.xlu0 %4039
        %4041 = vadd.xlane.f32.xlu0 %v3991
        %v4042 = vpop.xlane.xlu0 %4041
        %4043 = vadd.xlane.f32.xlu0 %v3992
        %v4044 = vpop.xlane.xlu0 %4043
        %4045 = vadd.xlane.f32.xlu0 %v3993
        %v4046 = vpop.xlane.xlu0 %4045
        %4047 = vadd.xlane.f32.xlu0 %v3994
        %v4048 = vpop.xlane.xlu0 %4047
        %4049 = vadd.xlane.f32.xlu0 %v3995
        %v4050 = vpop.xlane.xlu0 %4049
        %4051 = vadd.xlane.f32.xlu0 %v3996
        %v4052 = vpop.xlane.xlu0 %4051
        %4053 = vadd.xlane.f32.xlu0 %v3997
        %v4054 = vpop.xlane.xlu0 %4053
        %4055 = vadd.xlane.f32.xlu0 %v3998
        %v4056 = vpop.xlane.xlu0 %4055
        %4057 = vadd.xlane.f32.xlu0 %v3999
        %v4058 = vpop.xlane.xlu0 %4057
        %4059 = vadd.xlane.f32.xlu0 %v4000
        %v4060 = vpop.xlane.xlu0 %4059
        %4061 = vadd.xlane.f32.xlu0 %v4001
        %v4062 = vpop.xlane.xlu0 %4061
        %4063 = vadd.xlane.f32.xlu0 %v4002
        %v4064 = vpop.xlane.xlu0 %4063
        %4065 = vadd.xlane.f32.xlu0 %v4003
        %v4066 = vpop.xlane.xlu0 %4065
        %4067 = vadd.xlane.f32.xlu0 %v4004
        %v4068 = vpop.xlane.xlu0 %4067
        %v4069 = vmul.f32 %v4006, %v3908
        %v4070 = vmul.f32 %v4008, %v3908
        %v4071 = vmul.f32 %v4010, %v3908
        %v4072 = vmul.f32 %v4012, %v3908
        %v4073 = vmul.f32 %v4014, %v3908
        %v4074 = vmul.f32 %v4016, %v3908
        %v4075 = vmul.f32 %v4018, %v3908
        %v4076 = vmul.f32 %v4020, %v3908
        %v4077 = vmul.f32 %v4022, %v3908
        %v4078 = vmul.f32 %v4024, %v3908
        %v4079 = vmul.f32 %v4026, %v3908
        %v4080 = vmul.f32 %v4028, %v3908
        %v4081 = vmul.f32 %v4030, %v3908
        %v4082 = vmul.f32 %v4032, %v3908
        %v4083 = vmul.f32 %v4034, %v3908
        %v4084 = vmul.f32 %v4036, %v3908
        %v4085 = vmul.f32 %v4038, %v3908
        %v4086 = vmul.f32 %v4040, %v3908
        %v4087 = vmul.f32 %v4042, %v3908
        %v4088 = vmul.f32 %v4044, %v3908
        %v4089 = vmul.f32 %v4046, %v3908
        %v4090 = vmul.f32 %v4048, %v3908
        %v4091 = vmul.f32 %v4050, %v3908
        %v4092 = vmul.f32 %v4052, %v3908
        %v4093 = vmul.f32 %v4054, %v3908
        %v4094 = vmul.f32 %v4056, %v3908
        %v4095 = vmul.f32 %v4058, %v3908
        %v4096 = vmul.f32 %v4060, %v3908
        %v4097 = vmul.f32 %v4062, %v3908
        %v4098 = vmul.f32 %v4064, %v3908
        %v4099 = vmul.f32 %v4066, %v3908
        %v4100 = vmul.f32 %v4068, %v3908
        %v4101 = vadd.f32 %v4069, 1e-06
        %v4102 = vadd.f32 %v4070, 1e-06
        %v4103 = vadd.f32 %v4071, 1e-06
        %v4104 = vadd.f32 %v4072, 1e-06
        %v4105 = vadd.f32 %v4073, 1e-06
        %v4106 = vadd.f32 %v4074, 1e-06
        %v4107 = vadd.f32 %v4075, 1e-06
        %v4108 = vadd.f32 %v4076, 1e-06
        %v4109 = vadd.f32 %v4077, 1e-06
        %v4110 = vadd.f32 %v4078, 1e-06
        %v4111 = vadd.f32 %v4079, 1e-06
        %v4112 = vadd.f32 %v4080, 1e-06
        %v4113 = vadd.f32 %v4081, 1e-06
        %v4114 = vadd.f32 %v4082, 1e-06
        %v4115 = vadd.f32 %v4083, 1e-06
        %v4116 = vadd.f32 %v4084, 1e-06
        %v4117 = vadd.f32 %v4085, 1e-06
        %v4118 = vadd.f32 %v4086, 1e-06
        %v4119 = vadd.f32 %v4087, 1e-06
        %v4120 = vadd.f32 %v4088, 1e-06
        %v4121 = vadd.f32 %v4089, 1e-06
        %v4122 = vadd.f32 %v4090, 1e-06
        %v4123 = vadd.f32 %v4091, 1e-06
        %v4124 = vadd.f32 %v4092, 1e-06
        %v4125 = vadd.f32 %v4093, 1e-06
        %v4126 = vadd.f32 %v4094, 1e-06
        %v4127 = vadd.f32 %v4095, 1e-06
        %v4128 = vadd.f32 %v4096, 1e-06
        %v4129 = vadd.f32 %v4097, 1e-06
        %v4130 = vadd.f32 %v4098, 1e-06
        %v4131 = vadd.f32 %v4099, 1e-06
        %v4132 = vadd.f32 %v4100, 1e-06
        %v4133 = vrsqrt.pop %v4101
        %v4134 = vrsqrt.pop %v4102
        %v4135 = vrsqrt.pop %v4103
        %v4136 = vrsqrt.pop %v4104
        %v4137 = vrsqrt.pop %v4105
        %v4138 = vrsqrt.pop %v4106
        %v4139 = vrsqrt.pop %v4107
        %v4140 = vrsqrt.pop %v4108
        %v4141 = vrsqrt.pop %v4109
        %v4142 = vrsqrt.pop %v4110
        %v4143 = vrsqrt.pop %v4111
        %v4144 = vrsqrt.pop %v4112
        %v4145 = vrsqrt.pop %v4113
        %v4146 = vrsqrt.pop %v4114
        %v4147 = vrsqrt.pop %v4115
        %v4148 = vrsqrt.pop %v4116
        %v4149 = vrsqrt.pop %v4117
        %v4150 = vrsqrt.pop %v4118
        %v4151 = vrsqrt.pop %v4119
        %v4152 = vrsqrt.pop %v4120
        %v4153 = vrsqrt.pop %v4121
        %v4154 = vrsqrt.pop %v4122
        %v4155 = vrsqrt.pop %v4123
        %v4156 = vrsqrt.pop %v4124
        %v4157 = vrsqrt.pop %v4125
        %v4158 = vrsqrt.pop %v4126
        %v4159 = vrsqrt.pop %v4127
        %v4160 = vrsqrt.pop %v4128
        %v4161 = vrsqrt.pop %v4129
        %v4162 = vrsqrt.pop %v4130
        %v4163 = vrsqrt.pop %v4131
        %v4164 = vrsqrt.pop %v4132
        %v4165 = vmul.f32 %v3941, %v4133
        %v4166 = vmul.f32 %v3942, %v4134
        %v4167 = vmul.f32 %v3943, %v4135
        %v4168 = vmul.f32 %v3944, %v4136
        %v4169 = vmul.f32 %v3945, %v4137
        %v4170 = vmul.f32 %v3946, %v4138
        %v4171 = vmul.f32 %v3947, %v4139
        %v4172 = vmul.f32 %v3948, %v4140
        %v4173 = vmul.f32 %v3949, %v4141
        %v4174 = vmul.f32 %v3950, %v4142
        %v4175 = vmul.f32 %v3951, %v4143
        %v4176 = vmul.f32 %v3952, %v4144
        %v4177 = vmul.f32 %v3953, %v4145
        %v4178 = vmul.f32 %v3954, %v4146
        %v4179 = vmul.f32 %v3955, %v4147
        %v4180 = vmul.f32 %v3956, %v4148
        %v4181 = vmul.f32 %v3957, %v4149
        %v4182 = vmul.f32 %v3958, %v4150
        %v4183 = vmul.f32 %v3959, %v4151
        %v4184 = vmul.f32 %v3960, %v4152
        %v4185 = vmul.f32 %v3961, %v4153
        %v4186 = vmul.f32 %v3962, %v4154
        %v4187 = vmul.f32 %v3963, %v4155
        %v4188 = vmul.f32 %v3964, %v4156
        %v4189 = vmul.f32 %v3965, %v4157
        %v4190 = vmul.f32 %v3966, %v4158
        %v4191 = vmul.f32 %v3967, %v4159
        %v4192 = vmul.f32 %v3968, %v4160
        %v4193 = vmul.f32 %v3969, %v4161
        %v4194 = vmul.f32 %v3970, %v4162
        %v4195 = vmul.f32 %v3971, %v4163
        %v4196 = vmul.f32 %v3972, %v4164
        %v4198 = vlaneseq
        %v4199 = vshrl.u32 %v4198, 7
        %v4200 = vsub.s32 0, %v4199
        %v4201 = vrot.slane %v3842, %v4200
        %v4203 = vmul.f32 %v4165, %v4201
        %v4204 = vmul.f32 %v4166, %v4201
        %v4205 = vmul.f32 %v4167, %v4201
        %v4206 = vmul.f32 %v4168, %v4201
        %v4207 = vmul.f32 %v4169, %v4201
        %v4208 = vmul.f32 %v4170, %v4201
        %v4209 = vmul.f32 %v4171, %v4201
        %v4210 = vmul.f32 %v4172, %v4201
        %v4211 = vmul.f32 %v4173, %v4201
        %v4212 = vmul.f32 %v4174, %v4201
        %v4213 = vmul.f32 %v4175, %v4201
        %v4214 = vmul.f32 %v4176, %v4201
        %v4215 = vmul.f32 %v4177, %v4201
        %v4216 = vmul.f32 %v4178, %v4201
        %v4217 = vmul.f32 %v4179, %v4201
        %v4218 = vmul.f32 %v4180, %v4201
        %v4219 = vmul.f32 %v4181, %v4201
        %v4220 = vmul.f32 %v4182, %v4201
        %v4221 = vmul.f32 %v4183, %v4201
        %v4222 = vmul.f32 %v4184, %v4201
        %v4223 = vmul.f32 %v4185, %v4201
        %v4224 = vmul.f32 %v4186, %v4201
        %v4225 = vmul.f32 %v4187, %v4201
        %v4226 = vmul.f32 %v4188, %v4201
        %v4227 = vmul.f32 %v4189, %v4201
        %v4228 = vmul.f32 %v4190, %v4201
        %v4229 = vmul.f32 %v4191, %v4201
        %v4230 = vmul.f32 %v4192, %v4201
        %v4231 = vmul.f32 %v4193, %v4201
        %v4232 = vmul.f32 %v4194, %v4201
        %v4233 = vmul.f32 %v4195, %v4201
        %v4234 = vmul.f32 %v4196, %v4201
        %v4236 = vlaneseq
        %v4237 = vshrl.u32 %v4236, 7
        %v4238 = vsub.s32 0, %v4237
        %v4239 = vrot.slane %v3843, %v4238
        %v4241 = vadd.f32 %v4203, %v4239
        %v4242 = vadd.f32 %v4204, %v4239
        %v4243 = vadd.f32 %v4205, %v4239
        %v4244 = vadd.f32 %v4206, %v4239
        %v4245 = vadd.f32 %v4207, %v4239
        %v4246 = vadd.f32 %v4208, %v4239
        %v4247 = vadd.f32 %v4209, %v4239
        %v4248 = vadd.f32 %v4210, %v4239
        %v4249 = vadd.f32 %v4211, %v4239
        %v4250 = vadd.f32 %v4212, %v4239
        %v4251 = vadd.f32 %v4213, %v4239
        %v4252 = vadd.f32 %v4214, %v4239
        %v4253 = vadd.f32 %v4215, %v4239
        %v4254 = vadd.f32 %v4216, %v4239
        %v4255 = vadd.f32 %v4217, %v4239
        %v4256 = vadd.f32 %v4218, %v4239
        %v4257 = vadd.f32 %v4219, %v4239
        %v4258 = vadd.f32 %v4220, %v4239
        %v4259 = vadd.f32 %v4221, %v4239
        %v4260 = vadd.f32 %v4222, %v4239
        %v4261 = vadd.f32 %v4223, %v4239
        %v4262 = vadd.f32 %v4224, %v4239
        %v4263 = vadd.f32 %v4225, %v4239
        %v4264 = vadd.f32 %v4226, %v4239
        %v4265 = vadd.f32 %v4227, %v4239
        %v4266 = vadd.f32 %v4228, %v4239
        %v4267 = vadd.f32 %v4229, %v4239
        %v4268 = vadd.f32 %v4230, %v4239
        %v4269 = vadd.f32 %v4231, %v4239
        %v4270 = vadd.f32 %v4232, %v4239
        %v4271 = vadd.f32 %v4233, %v4239
        %v4272 = vadd.f32 %v4234, %v4239
        %v4273 = vld [vmem:[%s9] sm:$0xff]
        %v4274 = vld [vmem:[%s9 + $0x8] sm:$0xff]
        %v4275 = vld [vmem:[%s9 + $0x10] sm:$0xff]
        %v4276 = vld [vmem:[%s9 + $0x18] sm:$0xff]
        %v4277 = vld [vmem:[%s9 + $0x20] sm:$0xff]
        %v4278 = vld [vmem:[%s9 + $0x28] sm:$0xff]
        %v4279 = vld [vmem:[%s9 + $0x30] sm:$0xff]
        %v4280 = vld [vmem:[%s9 + $0x38] sm:$0xff]
        %v4281 = vld [vmem:[%s9 + $0x40] sm:$0xff]
        %v4282 = vld [vmem:[%s9 + $0x48] sm:$0xff]
        %v4283 = vld [vmem:[%s9 + $0x50] sm:$0xff]
        %v4284 = vld [vmem:[%s9 + $0x58] sm:$0xff]
        %v4285 = vld [vmem:[%s9 + $0x60] sm:$0xff]
        %v4286 = vld [vmem:[%s9 + $0x68] sm:$0xff]
        %v4287 = vld [vmem:[%s9 + $0x70] sm:$0xff]
        %v4288 = vld [vmem:[%s9 + $0x78] sm:$0xff]
        %v4289 = vld [vmem:[%s10] sm:$0x1]
        %v4291 = vlaneseq
        %v4292 = vshrl.u32 %v4291, 7
        %v4293 = vsub.s32 0, %v4292
        %v4294 = vrot.slane %v4289, %v4293
        %4296 = vmatprep.subr.mxu0 0.0
        %4297 = vmatpush1.msra.mxu0 %v4273
        %4298 = vmatprep.subr.mxu0 0.0
        %4299 = vmatpush1.msra.mxu0 %v4274
        %4300 = vmatprep.subr.mxu0 0.0
        %4301 = vmatpush1.msra.mxu0 %v4275
        %4302 = vmatprep.subr.mxu0 0.0
        %4303 = vmatpush1.msra.mxu0 %v4276
        %4304 = vmatprep.subr.mxu0 0.0
        %4305 = vmatpush1.msra.mxu0 %v4277
        %4306 = vmatprep.subr.mxu0 0.0
        %4307 = vmatpush1.msra.mxu0 %v4278
        %4308 = vmatprep.subr.mxu0 0.0
        %4309 = vmatpush1.msra.mxu0 %v4279
        %4310 = vmatprep.subr.mxu0 0.0
        %4311 = vmatpush1.msra.mxu0 %v4280
        %4312 = vmatprep.subr.mxu0 0.0
        %4313 = vmatpush1.msra.mxu0 %v4281
        %4314 = vmatprep.subr.mxu0 0.0
        %4315 = vmatpush1.msra.mxu0 %v4282
        %4316 = vmatprep.subr.mxu0 0.0
        %4317 = vmatpush1.msra.mxu0 %v4283
        %4318 = vmatprep.subr.mxu0 0.0
        %4319 = vmatpush1.msra.mxu0 %v4284
        %4320 = vmatprep.subr.mxu0 0.0
        %4321 = vmatpush1.msra.mxu0 %v4285
        %4322 = vmatprep.subr.mxu0 0.0
        %4323 = vmatpush1.msra.mxu0 %v4286
        %4324 = vmatprep.subr.mxu0 0.0
        %4325 = vmatpush1.msra.mxu0 %v4287
        %4326 = vmatprep.subr.mxu0 0.0
        %4327 = vmatpush1.msra.mxu0 %v4288
        %4328 = vmatprep.subr.mxu0 0.0
        %4329 = vmatpush1.msra.mxu0 0.0
        %4330 = vmatprep.subr.mxu0 0.0
        %4331 = vmatpush1.msra.mxu0 0.0
        %4332 = vmatprep.subr.mxu0 0.0
        %4333 = vmatpush1.msra.mxu0 0.0
        %4334 = vmatprep.subr.mxu0 0.0
        %4335 = vmatpush1.msra.mxu0 0.0
        %4336 = vmatprep.subr.mxu0 0.0
        %4337 = vmatpush1.msra.mxu0 0.0
        %4338 = vmatprep.subr.mxu0 0.0
        %4339 = vmatpush1.msra.mxu0 0.0
        %4340 = vmatprep.subr.mxu0 0.0
        %4341 = vmatpush1.msra.mxu0 0.0
        %4342 = vmatprep.subr.mxu0 0.0
        %4343 = vmatpush1.msra.mxu0 0.0
        %4344 = vmatprep.subr.mxu0 0.0
        %4345 = vmatpush1.msra.mxu0 0.0
        %4346 = vmatprep.subr.mxu0 0.0
        %4347 = vmatpush1.msra.mxu0 0.0
        %4348 = vmatprep.subr.mxu0 0.0
        %4349 = vmatpush1.msra.mxu0 0.0
        %4350 = vmatprep.subr.mxu0 0.0
        %4351 = vmatpush1.msra.mxu0 0.0
        %4352 = vmatprep.subr.mxu0 0.0
        %4353 = vmatpush1.msra.mxu0 0.0
        %4354 = vmatprep.subr.mxu0 0.0
        %4355 = vmatpush1.msra.mxu0 0.0
        %4356 = vmatprep.subr.mxu0 0.0
        %4357 = vmatpush1.msra.mxu0 0.0
        %4358 = vmatprep.subr.mxu0 0.0
        %4359 = vmatpush1.msra.mxu0 0.0
        %4360 = vmatprep.mubr.f32.mxu0 0.0
        %4361 = vmatmul.mubr.f32.gmra.mrb[0].mxu0 %v4241
        %v4362 = vpop.f32.mrb[0].mxu0
        %v4363 = vadd.f32 %v4294, %v4362
        %v4364 = vpop.f32.mrb[0].mxu0
        %4365 = vmatprep.mubr.f32.mxu0 0.0
        %4366 = vmatmul.mubr.f32.gmra.mrb[0].mxu0 %v4242
        %v4367 = vpop.f32.mrb[0].mxu0
        %v4368 = vadd.f32 %v4294, %v4367
        %v4369 = vpop.f32.mrb[0].mxu0
        %4370 = vmatprep.mubr.f32.mxu0 0.0
        %4371 = vmatmul.mubr.f32.gmra.mrb[0].mxu0 %v4243
        %v4372 = vpop.f32.mrb[0].mxu0
        %v4373 = vadd.f32 %v4294, %v4372
        %v4374 = vpop.f32.mrb[0].mxu0
        %4375 = vmatprep.mubr.f32.mxu0 0.0
        %4376 = vmatmul.mubr.f32.gmra.mrb[0].mxu0 %v4244
        %v4377 = vpop.f32.mrb[0].mxu0
        %v4378 = vadd.f32 %v4294, %v4377
        %v4379 = vpop.f32.mrb[0].mxu0
        %4380 = vmatprep.mubr.f32.mxu0 0.0
        %4381 = vmatmul.mubr.f32.gmra.mrb[0].mxu0 %v4245
        %v4382 = vpop.f32.mrb[0].mxu0
        %v4383 = vadd.f32 %v4294, %v4382
        %v4384 = vpop.f32.mrb[0].mxu0
        %4385 = vmatprep.mubr.f32.mxu0 0.0
        %4386 = vmatmul.mubr.f32.gmra.mrb[0].mxu0 %v4246
        %v4387 = vpop.f32.mrb[0].mxu0
        %v4388 = vadd.f32 %v4294, %v4387
        %v4389 = vpop.f32.mrb[0].mxu0
        %4390 = vmatprep.mubr.f32.mxu0 0.0
        %4391 = vmatmul.mubr.f32.gmra.mrb[0].mxu0 %v4247
        %v4392 = vpop.f32.mrb[0].mxu0
        %v4393 = vadd.f32 %v4294, %v4392
        %v4394 = vpop.f32.mrb[0].mxu0
        %4395 = vmatprep.mubr.f32.mxu0 0.0
        %4396 = vmatmul.mubr.f32.gmra.mrb[0].mxu0 %v4248
        %v4397 = vpop.f32.mrb[0].mxu0
        %v4398 = vadd.f32 %v4294, %v4397
        %v4399 = vpop.f32.mrb[0].mxu0
        %4400 = vmatprep.mubr.f32.mxu0 0.0
        %4401 = vmatmul.mubr.f32.gmra.mrb[0].mxu0 %v4249
        %v4402 = vpop.f32.mrb[0].mxu0
        %v4403 = vadd.f32 %v4294, %v4402
        %v4404 = vpop.f32.mrb[0].mxu0
        %4405 = vmatprep.mubr.f32.mxu0 0.0
        %4406 = vmatmul.mubr.f32.gmra.mrb[0].mxu0 %v4250
        %v4407 = vpop.f32.mrb[0].mxu0
        %v4408 = vadd.f32 %v4294, %v4407
        %v4409 = vpop.f32.mrb[0].mxu0
        %4410 = vmatprep.mubr.f32.mxu0 0.0
        %4411 = vmatmul.mubr.f32.gmra.mrb[0].mxu0 %v4251
        %v4412 = vpop.f32.mrb[0].mxu0
        %v4413 = vadd.f32 %v4294, %v4412
        %v4414 = vpop.f32.mrb[0].mxu0
        %4415 = vmatprep.mubr.f32.mxu0 0.0
        %4416 = vmatmul.mubr.f32.gmra.mrb[0].mxu0 %v4252
        %v4417 = vpop.f32.mrb[0].mxu0
        %v4418 = vadd.f32 %v4294, %v4417
        %v4419 = vpop.f32.mrb[0].mxu0
        %4420 = vmatprep.mubr.f32.mxu0 0.0
        %4421 = vmatmul.mubr.f32.gmra.mrb[0].mxu0 %v4253
        %v4422 = vpop.f32.mrb[0].mxu0
        %v4423 = vadd.f32 %v4294, %v4422
        %v4424 = vpop.f32.mrb[0].mxu0
        %4425 = vmatprep.mubr.f32.mxu0 0.0
        %4426 = vmatmul.mubr.f32.gmra.mrb[0].mxu0 %v4254
        %v4427 = vpop.f32.mrb[0].mxu0
        %v4428 = vadd.f32 %v4294, %v4427
        %v4429 = vpop.f32.mrb[0].mxu0
        %4430 = vmatprep.mubr.f32.mxu0 0.0
        %4431 = vmatmul.mubr.f32.gmra.mrb[0].mxu0 %v4255
        %v4432 = vpop.f32.mrb[0].mxu0
        %v4433 = vadd.f32 %v4294, %v4432
        %v4434 = vpop.f32.mrb[0].mxu0
        %4435 = vmatprep.mubr.f32.mxu0 0.0
        %4436 = vmatmul.mubr.f32.gmra.mrb[0].mxu0 %v4256
        %v4437 = vpop.f32.mrb[0].mxu0
        %v4438 = vadd.f32 %v4294, %v4437
        %v4439 = vpop.f32.mrb[0].mxu0
        %4440 = vmatprep.mubr.f32.mxu0 0.0
        %4441 = vmatmul.mubr.f32.gmra.mrb[0].mxu0 %v4257
        %v4442 = vpop.f32.mrb[0].mxu0
        %v4443 = vadd.f32 %v4294, %v4442
        %v4444 = vpop.f32.mrb[0].mxu0
        %4445 = vmatprep.mubr.f32.mxu0 0.0
        %4446 = vmatmul.mubr.f32.gmra.mrb[0].mxu0 %v4258
        %v4447 = vpop.f32.mrb[0].mxu0
        %v4448 = vadd.f32 %v4294, %v4447
        %v4449 = vpop.f32.mrb[0].mxu0
        %4450 = vmatprep.mubr.f32.mxu0 0.0
        %4451 = vmatmul.mubr.f32.gmra.mrb[0].mxu0 %v4259
        %v4452 = vpop.f32.mrb[0].mxu0
        %v4453 = vadd.f32 %v4294, %v4452
        %v4454 = vpop.f32.mrb[0].mxu0
        %4455 = vmatprep.mubr.f32.mxu0 0.0
        %4456 = vmatmul.mubr.f32.gmra.mrb[0].mxu0 %v4260
        %v4457 = vpop.f32.mrb[0].mxu0
        %v4458 = vadd.f32 %v4294, %v4457
        %v4459 = vpop.f32.mrb[0].mxu0
        %4460 = vmatprep.mubr.f32.mxu0 0.0
        %4461 = vmatmul.mubr.f32.gmra.mrb[0].mxu0 %v4261
        %v4462 = vpop.f32.mrb[0].mxu0
        %v4463 = vadd.f32 %v4294, %v4462
        %v4464 = vpop.f32.mrb[0].mxu0
        %4465 = vmatprep.mubr.f32.mxu0 0.0
        %4466 = vmatmul.mubr.f32.gmra.mrb[0].mxu0 %v4262
        %v4467 = vpop.f32.mrb[0].mxu0
        %v4468 = vadd.f32 %v4294, %v4467
        %v4469 = vpop.f32.mrb[0].mxu0
        %4470 = vmatprep.mubr.f32.mxu0 0.0
        %4471 = vmatmul.mubr.f32.gmra.mrb[0].mxu0 %v4263
        %v4472 = vpop.f32.mrb[0].mxu0
        %v4473 = vadd.f32 %v4294, %v4472
        %v4474 = vpop.f32.mrb[0].mxu0
        %4475 = vmatprep.mubr.f32.mxu0 0.0
        %4476 = vmatmul.mubr.f32.gmra.mrb[0].mxu0 %v4264
        %v4477 = vpop.f32.mrb[0].mxu0
        %v4478 = vadd.f32 %v4294, %v4477
        %v4479 = vpop.f32.mrb[0].mxu0
        %4480 = vmatprep.mubr.f32.mxu0 0.0
        %4481 = vmatmul.mubr.f32.gmra.mrb[0].mxu0 %v4265
        %v4482 = vpop.f32.mrb[0].mxu0
        %v4483 = vadd.f32 %v4294, %v4482
        %v4484 = vpop.f32.mrb[0].mxu0
        %4485 = vmatprep.mubr.f32.mxu0 0.0
        %4486 = vmatmul.mubr.f32.gmra.mrb[0].mxu0 %v4266
        %v4487 = vpop.f32.mrb[0].mxu0
        %v4488 = vadd.f32 %v4294, %v4487
        %v4489 = vpop.f32.mrb[0].mxu0
        %4490 = vmatprep.mubr.f32.mxu0 0.0
        %4491 = vmatmul.mubr.f32.gmra.mrb[0].mxu0 %v4267
        %v4492 = vpop.f32.mrb[0].mxu0
        %v4493 = vadd.f32 %v4294, %v4492
        %v4494 = vpop.f32.mrb[0].mxu0
        %4495 = vmatprep.mubr.f32.mxu0 0.0
        %4496 = vmatmul.mubr.f32.gmra.mrb[0].mxu0 %v4268
        %v4497 = vpop.f32.mrb[0].mxu0
        %v4498 = vadd.f32 %v4294, %v4497
        %v4499 = vpop.f32.mrb[0].mxu0
        %4500 = vmatprep.mubr.f32.mxu0 0.0
        %4501 = vmatmul.mubr.f32.gmra.mrb[0].mxu0 %v4269
        %v4502 = vpop.f32.mrb[0].mxu0
        %v4503 = vadd.f32 %v4294, %v4502
        %v4504 = vpop.f32.mrb[0].mxu0
        %4505 = vmatprep.mubr.f32.mxu0 0.0
        %4506 = vmatmul.mubr.f32.gmra.mrb[0].mxu0 %v4270
        %v4507 = vpop.f32.mrb[0].mxu0
        %v4508 = vadd.f32 %v4294, %v4507
        %v4509 = vpop.f32.mrb[0].mxu0
        %4510 = vmatprep.mubr.f32.mxu0 0.0
        %4511 = vmatmul.mubr.f32.gmra.mrb[0].mxu0 %v4271
        %v4512 = vpop.f32.mrb[0].mxu0
        %v4513 = vadd.f32 %v4294, %v4512
        %v4514 = vpop.f32.mrb[0].mxu0
        %4515 = vmatprep.mubr.f32.mxu0 0.0
        %4516 = vmatmul.mubr.f32.gmra.mrb[0].mxu0 %v4272
        %v4517 = vpop.f32.mrb[0].mxu0
        %v4518 = vadd.f32 %v4294, %v4517
        %v4519 = vpop.f32.mrb[0].mxu0
        %4520 = vdwg.mxu0
        %4521 = vst.msk [vmem:[%s379] sm:$0xff] %vm2152, %v4363
        %4522 = vst.msk [vmem:[%s379 + $0x8] sm:$0xff] %vm2152, %v4368
        %4523 = vst.msk [vmem:[%s379 + $0x10] sm:$0xff] %vm2152, %v4373
        %4524 = vst.msk [vmem:[%s379 + $0x18] sm:$0xff] %vm2152, %v4378
        %4525 = vst.msk [vmem:[%s379 + $0x20] sm:$0xff] %vm2152, %v4383
        %4526 = vst.msk [vmem:[%s379 + $0x28] sm:$0xff] %vm2152, %v4388
        %4527 = vst.msk [vmem:[%s379 + $0x30] sm:$0xff] %vm2152, %v4393
        %4528 = vst.msk [vmem:[%s379 + $0x38] sm:$0xff] %vm2152, %v4398
        %4529 = vst.msk [vmem:[%s379 + $0x40] sm:$0xff] %vm2152, %v4403
        %4530 = vst.msk [vmem:[%s379 + $0x48] sm:$0xff] %vm2152, %v4408
        %4531 = vst.msk [vmem:[%s379 + $0x50] sm:$0xff] %vm2152, %v4413
        %4532 = vst.msk [vmem:[%s379 + $0x58] sm:$0xff] %vm2152, %v4418
        %4533 = vst.msk [vmem:[%s379 + $0x60] sm:$0xff] %vm2152, %v4423
        %4534 = vst.msk [vmem:[%s379 + $0x68] sm:$0xff] %vm2152, %v4428
        %4535 = vst.msk [vmem:[%s379 + $0x70] sm:$0xff] %vm2152, %v4433
        %4536 = vst.msk [vmem:[%s379 + $0x78] sm:$0xff] %vm2152, %v4438
        %4537 = vst.msk [vmem:[%s379 + $0x80] sm:$0xff] %vm2152, %v4443
        %4538 = vst.msk [vmem:[%s379 + $0x88] sm:$0xff] %vm2152, %v4448
        %4539 = vst.msk [vmem:[%s379 + $0x90] sm:$0xff] %vm2152, %v4453
        %4540 = vst.msk [vmem:[%s379 + $0x98] sm:$0xff] %vm2152, %v4458
        %4541 = vst.msk [vmem:[%s379 + $0xa0] sm:$0xff] %vm2152, %v4463
        %4542 = vst.msk [vmem:[%s379 + $0xa8] sm:$0xff] %vm2152, %v4468
        %4543 = vst.msk [vmem:[%s379 + $0xb0] sm:$0xff] %vm2152, %v4473
        %4544 = vst.msk [vmem:[%s379 + $0xb8] sm:$0xff] %vm2152, %v4478
        %4545 = vst.msk [vmem:[%s379 + $0xc0] sm:$0xff] %vm2152, %v4483
        %4546 = vst.msk [vmem:[%s379 + $0xc8] sm:$0xff] %vm2152, %v4488
        %4547 = vst.msk [vmem:[%s379 + $0xd0] sm:$0xff] %vm2152, %v4493
        %4548 = vst.msk [vmem:[%s379 + $0xd8] sm:$0xff] %vm2152, %v4498
        %4549 = vst.msk [vmem:[%s379 + $0xe0] sm:$0xff] %vm2152, %v4503
        %4550 = vst.msk [vmem:[%s379 + $0xe8] sm:$0xff] %vm2152, %v4508
        %4551 = vst.msk [vmem:[%s379 + $0xf0] sm:$0xff] %vm2152, %v4513
        %4552 = vst.msk [vmem:[%s379 + $0xf8] sm:$0xff] %vm2152, %v4518
        %s4553 = sand.u32 %s269, 1
        %s4554 = scalar_lea.sflag [#allocation3], %s4553
        %s4555 = sand.u32 %s269, 1
        %s4556 = smul.addr %s4555, 256
        %s4557 = scalar_lea.vmem [#allocation2], %s4556
        // Predicated region
        $region65: #{tpu_custom_call.1} parent=63 // pred_check
          %p4558 = pneg %p279
        $region66: #{tpu_custom_call.1} parent=63 // pred_check_branch
          %4560 = sbr.rel (%p4558) target = $region68
        $region67: #{tpu_custom_call.1} parent=63 // pred_region
          %s4562 = ssub.s32 4096, 4096
          %4563 = vsyncadd %s4554, %s4562
          %s4564 = smul.addr %s25, 32
          %s4565 = smul.addr %s4564, 128
          %s4566 = scalar_lea.hbm %s11, %s4565
          %s4567 = sshll.u32 %s4557, 4
          %s4568 = int_to_ptr.vmem [resolvable:$true] %s4567
          %4573 = dma.vmem_to_hbm [thread:$0]  %s4568, 4096, %s4566, %s4554, 128, 128, 8
        $region68: #{tpu_custom_call.1} parent=63 // pred_fallthru
          _
      $region64: #{tpu_custom_call.1} parent=5 // pred_fallthru
        _
      %p4574 = scmp.le.s32.totalorder 2, %s20
      // Predicated region
      $region69: #{tpu_custom_call.1} parent=5 // pred_check
        %p4575 = pneg %p4574
      $region70: #{tpu_custom_call.1} parent=5 // pred_check_branch
        %4577 = sbr.rel (%p4575) target = $region72
      $region71: #{tpu_custom_call.1} parent=5 // pred_region
        %s4578 = ssub.s32 %s20, 2
        // Predicated region
        $region73: #{tpu_custom_call.1} parent=71 // pred_check
          %p4579 = pneg %p285
        $region74: #{tpu_custom_call.1} parent=71 // pred_check_branch
          %4581 = sbr.rel (%p4579) target = $region76
        $region75: #{tpu_custom_call.1} parent=71 // pred_region
          %s4582 = sand.u32 %s270, 1
          %s4583 = scalar_lea.sflag [#allocation3], %s4582
          %s4584 = sand.u32 %s270, 1
          %s4585 = smul.addr %s4584, 256
          %s4586 = scalar_lea.vmem [#allocation2], %s4585
          %4587 = dma.done %s4583, 4096
        $region76: #{tpu_custom_call.1} parent=71 // pred_fallthru
          _
      $region72: #{tpu_custom_call.1} parent=5 // pred_fallthru
        _
    $region6: #{tpu_custom_call.1} parent=1 // loop_footer
      %s24 = sadd.s32 1, %s20
    $region7: #{tpu_custom_call.1} parent=1 // loop_footer_branch
      %19 = sbr.rel target = $region3
    $region8: #{tpu_custom_call.1} parent=1 // loop_exit
      _
    %4588 = vsyncpa [#allocation3], 1
    %s4589 = scalar_lea.sflag [#allocation3], 1
    %4590 = vsyncpa %s4589, 1

</llo_original>
